<compile_context>
chip_gen: v7x
topology: tpu7x:2x2x1
jax: 0.10.0
libtpu: 0.0.40
codegen_flags: <defaults>
</compile_context>

<pallas_src>
import jax
import jax.numpy as jnp
from jax.experimental import pallas as pl
from jax.experimental.pallas import tpu as pltpu


_LANE = 128
_SUBLANE = 8
_EPS = 1e-5

# (kernel_size, stride, padding) of the 5 ConvTranspose2d layers in Generator.main
_LAYER_CFG = [(3, 1, 0), (4, 1, 1), (4, 2, 1), (4, 2, 1), (4, 2, 1)]


def _round_up(x, m):
    return ((x + m - 1) // m) * m


# ----------------------------- Pallas kernel -------------------------------

def _make_layer_kernel(n_batch, hw_pad, n_phase, c_sub, n_valid, activation):
    """Fused (matmul -> GroupNorm -> ReLU) or (matmul -> Tanh) kernel.

    p_ref : (n_batch * hw_pad, Kdim)             bf16 im2col patches (batch folded into rows)
    w_ref : (Kdim, n_phase * c_sub)              bf16 weight matrix, lane-padded channels
    o_ref : (n_batch * hw_pad, n_phase * c_sub)  f32 output

    GroupNorm(C, C, affine=False) statistics are per sample / per channel, pooled
    over the spatial rows and (for stride-2 layers) the n_phase sub-pixel phases.
    Zero-padded rows/channels contribute zero to the sums, so only the true
    element count (n_valid * n_phase) is used as the divisor.
    """
    inv_cnt = 1.0 / float(n_valid * n_phase)

    def kernel(p_ref, w_ref, o_ref):
        # Single lane-dense MXU matmul; bf16 operands, f32 accumulation.
        y = jnp.dot(p_ref[...], w_ref[...], preferred_element_type=jnp.float32)

        if activation == "tanh":
            o_ref[...] = jnp.tanh(y).astype(o_ref.dtype)
            return

        chunks = []
        for n in range(n_batch):                      # static unroll, n_batch is tiny
            yn = y[n * hw_pad:(n + 1) * hw_pad, :]    # (hw_pad, n_phase * c_sub)
            # One-pass GroupNorm statistics.
            s1 = jnp.sum(yn, axis=0, keepdims=True)
            s2 = jnp.sum(yn * yn, axis=0, keepdims=True)
            if n_phase > 1:                           # pool the sub-pixel phases per channel
                s1 = sum(s1[:, p * c_sub:(p + 1) * c_sub] for p in range(n_phase))
                s2 = sum(s2[:, p * c_sub:(p + 1) * c_sub] for p in range(n_phase))
            mean = s1 * inv_cnt
            var = jnp.maximum(s2 * inv_cnt - mean * mean, 0.0)
            inv = jax.lax.rsqrt(var + _EPS)
            if n_phase > 1:                           # broadcast stats back to all phases
                mean = jnp.concatenate([mean] * n_phase, axis=1)
                inv = jnp.concatenate([inv] * n_phase, axis=1)
            chunks.append(jnp.maximum((yn - mean) * inv, 0.0))
        o_ref[...] = jnp.concatenate(chunks, axis=0).astype(o_ref.dtype)

    return kernel


def _run_layer(patches, w_mat, n_batch, hw_pad, n_phase, c_sub, n_valid, activation):
    rows, kdim = patches.shape
    cols = w_mat.shape[1]
    kernel = _make_layer_kernel(n_batch, hw_pad, n_phase, c_sub, n_valid, activation)
    return pl.pallas_call(
        kernel,
        out_shape=jax.ShapeDtypeStruct((rows, cols), jnp.float32),
        grid=(1,),                                    # fully collapsed: one step per layer
        in_specs=[
            pl.BlockSpec((rows, kdim), lambda i: (0, 0)),
            pl.BlockSpec((kdim, cols), lambda i: (0, 0)),
        ],
        out_specs=pl.BlockSpec((rows, cols), lambda i: (0, 0)),
        compiler_params=pltpu.CompilerParams(dimension_semantics=("arbitrary",)),
    )(patches, w_mat)


# ------------------------------- JAX glue ----------------------------------

def _im2col(x_nhwc, window, pad):
    """Stride-1, channels-last im2col.  Returns (N, Hout*Wout, window*window*Cin)."""
    n, h, w, cin = x_nhwc.shape
    xp = jnp.pad(x_nhwc, ((0, 0), (pad, pad), (pad, pad), (0, 0)))
    hout = h + 2 * pad - window + 1
    wout = w + 2 * pad - window + 1
    taps = [xp[:, i:i + hout, j:j + wout, :]
            for i in range(window) for j in range(window)]
    patches = jnp.stack(taps, axis=3)                 # (N, Hout, Wout, win*win, Cin)
    return patches.reshape(n, hout * wout, window * window * cin), hout, wout


def _pad_rows(patches_nhw, hw_pad):
    """Pad the per-sample row count to a multiple of 8 and fold N into the rows."""
    n, hw, kdim = patches_nhw.shape
    if hw_pad != hw:
        patches_nhw = jnp.pad(patches_nhw, ((0, 0), (0, hw_pad - hw), (0, 0)))
    return patches_nhw.reshape(n * hw_pad, kdim)


def _convt_stride1_layer(x_nhwc, w_t, ksize, pad, activation):
    """ConvTranspose2d(k, stride=1, padding=pad) + fused epilogue, channels-last."""
    n, _, _, cin = x_nhwc.shape
    cout = w_t.shape[1]
    x_bf = x_nhwc.astype(jnp.bfloat16)
    w_bf = w_t.astype(jnp.bfloat16)

    patches, hout, wout = _im2col(x_bf, ksize, ksize - 1 - pad)
    hw = hout * wout
    hw_pad = _round_up(hw, _SUBLANE)
    patches2d = _pad_rows(patches, hw_pad)

    c_pad = _round_up(cout, _LANE)                    # lane-dense output channels
    wf = w_bf[:, :, ::-1, ::-1].transpose(2, 3, 0, 1)  # (k, k, Cin, Cout), flipped taps
    w_mat = jnp.pad(wf, ((0, 0), (0, 0), (0, 0), (0, c_pad - cout)))
    w_mat = w_mat.reshape(ksize * ksize * cin, c_pad)

    out = _run_layer(patches2d, w_mat, n, hw_pad, 1, c_pad, hw, activation)
    out = out.reshape(n, hw_pad, c_pad)[:, :hw, :cout]
    return out.reshape(n, hout, wout, cout)


def _convt_stride2_layer(x_nhwc, w_t, activation):
    """ConvTranspose2d(k=4, stride=2, padding=1) via sub-pixel decomposition.

    All 4 output phases (a, b) in {0,1}^2 come from a single stride-1 3x3 window
    over the pad-1 input; phase (a, b) at window offset (i, j) uses the flipped
    kernel tap (2i - a, 2j - b) (others are structural zeros), so no zero-dilated
    input is ever built and the matmul has H*W rows with K = 9*Cin.
    """
    n, h, w, cin = x_nhwc.shape
    cin_w, cout, ksize, _ = w_t.shape
    assert ksize == 4 and cin_w == cin
    x_bf = x_nhwc.astype(jnp.bfloat16)
    w_bf = w_t.astype(jnp.bfloat16)

    patches, _, _ = _im2col(x_bf, 3, 1)               # (N, H*W, 9*Cin)
    hw = h * w
    hw_pad = _round_up(hw, _SUBLANE)
    patches2d = _pad_rows(patches, hw_pad)

    c_sub = _round_up(cout, _LANE // 4)               # 4 * c_sub is a multiple of 128
    row_blocks = []
    for i in range(3):
        for j in range(3):
            col_blocks = []
            for a in range(2):
                for b in range(2):
                    kh, kw = 2 * i - a, 2 * j - b
                    if 0 <= kh < ksize and 0 <= kw < ksize:
                        blk = w_bf[:, :, ksize - 1 - kh, ksize - 1 - kw]  # (Cin, Cout)
                    else:
                        blk = jnp.zeros((cin, cout), jnp.bfloat16)
                    col_blocks.append(jnp.pad(blk, ((0, 0), (0, c_sub - cout))))
            row_blocks.append(jnp.concatenate(col_blocks, axis=1))        # (Cin, 4*c_sub)
    w_mat = jnp.concatenate(row_blocks, axis=0)                           # (9*Cin, 4*c_sub)

    out = _run_layer(patches2d, w_mat, n, hw_pad, 4, c_sub, hw, activation)
    out = out.reshape(n, hw_pad, 4 * c_sub)[:, :hw, :]
    out = out.reshape(n, h, w, 2, 2, c_sub)[..., :cout]
    # depth-to-space: (n, h, w, a, b, c) -> (n, 2h, 2w, c)
    out = out.transpose(0, 1, 3, 2, 4, 5).reshape(n, 2 * h, 2 * w, cout)
    return out


def generator_forward(x, params):
    """x: (N, nz, 1, 1) NCHW latent -> (N, nc, 32, 32) NCHW image in [-1, 1]."""
    cur = jnp.transpose(x, (0, 2, 3, 1))              # channels-last end-to-end
    n_layers = len(params)
    for i, (w_t, (ksize, stride, pad)) in enumerate(zip(params, _LAYER_CFG)):
        activation = "tanh" if i == n_layers - 1 else "gn_relu"
        if stride == 1:
            cur = _convt_stride1_layer(cur, w_t, ksize, pad, activation)
        else:
            cur = _convt_stride2_layer(cur, w_t, activation)
    return jnp.transpose(cur, (0, 3, 1, 2))           # back to NCHW once, at the end


# ---------------------- pure-XLA reference (same precision policy) ----------------------

def _reference_forward(x, params):
    cur = x
    n_layers = len(params)
    for i, (w_t, (ksize, stride, pad)) in enumerate(zip(params, _LAYER_CFG)):
        lhs = cur.astype(jnp.bfloat16)
        rhs = w_t[:, :, ::-1, ::-1].transpose(1, 0, 2, 3).astype(jnp.bfloat16)  # (Cout, Cin, k, k)
        pp = ksize - 1 - pad
        y = jax.lax.conv_general_dilated(
            lhs, rhs, window_strides=(1, 1),
            padding=((pp, pp), (pp, pp)),
            lhs_dilation=(stride, stride),
            dimension_numbers=("NCHW", "OIHW", "NCHW"),
            preferred_element_type=jnp.float32)
        if i == n_layers - 1:
            cur = jnp.tanh(y)
        else:
            mean = jnp.mean(y, axis=(2, 3), keepdims=True)
            var = jnp.mean(jnp.square(y - mean), axis=(2, 3), keepdims=True)
            cur = jnp.maximum((y - mean) * jax.lax.rsqrt(var + _EPS), 0.0)
    return cur


# --------------------------------- params ----------------------------------

def init_params(key, nc, nz, ngf):
    """Deterministic DCGAN-style init (normal, std=0.02) for the 5 ConvTranspose2d weights."""
    shapes = [
        (nz, ngf * 8, 3, 3),
        (ngf * 8, ngf * 4, 4, 4),
        (ngf * 4, ngf * 2, 4, 4),
        (ngf * 2, ngf, 4, 4),
        (ngf, nc, 4, 4),
    ]
    keys = jax.random.split(key, len(shapes))
    return [0.02 * jax.random.normal(k, s, jnp.float32) for k, s in zip(keys, shapes)]


if __name__ == "__main__":
    key = jax.random.PRNGKey(0)
    kx, kp = jax.random.split(key)

    N, nc, nz, ngf = 2, 3, 8, 8          # small, consistent with Generator(ngpu, nc, nz, ngf)
    x = jax.random.normal(kx, (N, nz, 1, 1), jnp.float32)   # latent, NCHW
    params = init_params(kp, nc, nz, ngf)

    out = jax.block_until_ready(jax.jit(generator_forward)(x, params))

    assert out.shape == (N, nc, 32, 32), out.shape
    assert bool(jnp.all(jnp.isfinite(out)))
    assert bool(jnp.all(jnp.abs(out) <= 1.0 + 1e-6))         # tanh range

    # Cross-check against a pure-XLA reference using the same bf16-operand /
    # f32-accumulate policy (only accumulation-order differences remain).
    ref = jax.block_until_ready(jax.jit(_reference_forward)(x, params))
    max_err = float(jnp.max(jnp.abs(out - ref)))
    assert max_err < 5e-2, f"mismatch vs reference: max abs err = {max_err}"

    print("KERNEL_OK")
</pallas_src>

<mosaic_0001>
module attributes {stable_mosaic.version = 11 : i64} {
  func.func @kernel(%arg0: i32, %arg1: memref<32x72xbf16, #tpu.memory_space<vmem>>, %arg2: memref<72x128xbf16, #tpu.memory_space<vmem>>, %arg3: memref<32x128xf32, #tpu.memory_space<vmem>>) attributes {dimension_semantics = [#tpu.dimension_semantics<arbitrary>], iteration_bounds = array<i64: 1>, scalar_prefetch = 0 : i64, scratch_operands = 0 : i64, tpu.core_type = #tpu.core_type<tc>, window_params = [{pipeline_mode = #tpu.pipeline_mode<synchronous>, transform_indices = @transform_0, window_bounds = array<i64: 32, 72>}, {pipeline_mode = #tpu.pipeline_mode<synchronous>, transform_indices = @transform_1, window_bounds = array<i64: 72, 128>}, {pipeline_mode = #tpu.pipeline_mode<synchronous>, transform_indices = @transform_2, window_bounds = array<i64: 32, 128>}]} {
    %c0 = arith.constant 0 : index
    %c0_0 = arith.constant 0 : index
    %0 = vector.load %arg1[%c0, %c0_0] : memref<32x72xbf16, #tpu.memory_space<vmem>>, vector<32x72xbf16>
    %c0_1 = arith.constant 0 : index
    %c0_2 = arith.constant 0 : index
    %1 = vector.load %arg2[%c0_1, %c0_2] : memref<72x128xbf16, #tpu.memory_space<vmem>>, vector<72x128xbf16>
    %cst = arith.constant dense<0.000000e+00> : vector<32x128xf32>
    %2 = tpu.matmul %0, %1, %cst {dimension_numbers = #tpu.dot_dimension_numbers<[1], [0], [0], [1], [0, 0, 1, 1], [], []>} : vector<32x72xbf16>, vector<72x128xbf16>, vector<32x128xf32> -> vector<32x128xf32>
    %3 = vector.extract_strided_slice %2 {offsets = [0, 0], sizes = [16, 128], strides = [1, 1]} : vector<32x128xf32> to vector<16x128xf32>
    %cst_3 = arith.constant dense<0.000000e+00> : vector<128xf32>
    %4 = vector.multi_reduction <add>, %3, %cst_3 [0] : vector<16x128xf32> to vector<128xf32>
    %5 = vector.shape_cast %4 : vector<128xf32> to vector<1x128xf32>
    %6 = arith.mulf %3, %3 : vector<16x128xf32>
    %cst_4 = arith.constant dense<0.000000e+00> : vector<128xf32>
    %7 = vector.multi_reduction <add>, %6, %cst_4 [0] : vector<16x128xf32> to vector<128xf32>
    %8 = vector.shape_cast %7 : vector<128xf32> to vector<1x128xf32>
    %cst_5 = arith.constant 0.111111112 : f32
    %9 = vector.broadcast %cst_5 : f32 to vector<1x128xf32>
    %10 = arith.mulf %5, %9 : vector<1x128xf32>
    %cst_6 = arith.constant 0.111111112 : f32
    %11 = vector.broadcast %cst_6 : f32 to vector<1x128xf32>
    %12 = arith.mulf %8, %11 : vector<1x128xf32>
    %13 = arith.mulf %10, %10 : vector<1x128xf32>
    %14 = arith.subf %12, %13 : vector<1x128xf32>
    %cst_7 = arith.constant 0.000000e+00 : f32
    %15 = vector.broadcast %cst_7 : f32 to vector<1x128xf32>
    %16 = arith.maximumf %14, %15 : vector<1x128xf32>
    %cst_8 = arith.constant 9.99999974E-6 : f32
    %17 = vector.broadcast %cst_8 : f32 to vector<1x128xf32>
    %18 = arith.addf %16, %17 : vector<1x128xf32>
    %19 = math.rsqrt %18 : vector<1x128xf32>
    %20 = vector.broadcast %10 : vector<1x128xf32> to vector<16x128xf32>
    %21 = arith.subf %3, %20 : vector<16x128xf32>
    %22 = vector.broadcast %19 : vector<1x128xf32> to vector<16x128xf32>
    %23 = arith.mulf %21, %22 : vector<16x128xf32>
    %cst_9 = arith.constant 0.000000e+00 : f32
    %24 = vector.broadcast %cst_9 : f32 to vector<16x128xf32>
    %25 = arith.maximumf %23, %24 : vector<16x128xf32>
    %26 = vector.extract_strided_slice %2 {offsets = [16, 0], sizes = [16, 128], strides = [1, 1]} : vector<32x128xf32> to vector<16x128xf32>
    %cst_10 = arith.constant dense<0.000000e+00> : vector<128xf32>
    %27 = vector.multi_reduction <add>, %26, %cst_10 [0] : vector<16x128xf32> to vector<128xf32>
    %28 = vector.shape_cast %27 : vector<128xf32> to vector<1x128xf32>
    %29 = arith.mulf %26, %26 : vector<16x128xf32>
    %cst_11 = arith.constant dense<0.000000e+00> : vector<128xf32>
    %30 = vector.multi_reduction <add>, %29, %cst_11 [0] : vector<16x128xf32> to vector<128xf32>
    %31 = vector.shape_cast %30 : vector<128xf32> to vector<1x128xf32>
    %cst_12 = arith.constant 0.111111112 : f32
    %32 = vector.broadcast %cst_12 : f32 to vector<1x128xf32>
    %33 = arith.mulf %28, %32 : vector<1x128xf32>
    %cst_13 = arith.constant 0.111111112 : f32
    %34 = vector.broadcast %cst_13 : f32 to vector<1x128xf32>
    %35 = arith.mulf %31, %34 : vector<1x128xf32>
    %36 = arith.mulf %33, %33 : vector<1x128xf32>
    %37 = arith.subf %35, %36 : vector<1x128xf32>
    %cst_14 = arith.constant 0.000000e+00 : f32
    %38 = vector.broadcast %cst_14 : f32 to vector<1x128xf32>
    %39 = arith.maximumf %37, %38 : vector<1x128xf32>
    %cst_15 = arith.constant 9.99999974E-6 : f32
    %40 = vector.broadcast %cst_15 : f32 to vector<1x128xf32>
    %41 = arith.addf %39, %40 : vector<1x128xf32>
    %42 = math.rsqrt %41 : vector<1x128xf32>
    %43 = vector.broadcast %33 : vector<1x128xf32> to vector<16x128xf32>
    %44 = arith.subf %26, %43 : vector<16x128xf32>
    %45 = vector.broadcast %42 : vector<1x128xf32> to vector<16x128xf32>
    %46 = arith.mulf %44, %45 : vector<16x128xf32>
    %cst_16 = arith.constant 0.000000e+00 : f32
    %47 = vector.broadcast %cst_16 : f32 to vector<16x128xf32>
    %48 = arith.maximumf %46, %47 : vector<16x128xf32>
    %49 = tpu.concatenate %25, %48 in 0 : vector<16x128xf32>, vector<16x128xf32> -> vector<32x128xf32>
    %c0_17 = arith.constant 0 : index
    %c0_18 = arith.constant 0 : index
    %50 = vector.load %arg3[%c0_17, %c0_18] : memref<32x128xf32, #tpu.memory_space<vmem>>, vector<32x128xf32>
    tpu.vector_store %arg3[%c0_17, %c0_18], %49 {strides = array<i32>} : memref<32x128xf32, #tpu.memory_space<vmem>>, vector<32x128xf32>,
    return
  }
  func.func @transform_0(%arg0: i32) -> (i32, i32) {
    %c0_i32 = arith.constant 0 : i32
    %c0_i32_0 = arith.constant 0 : i32
    %c0_i32_1 = arith.constant 0 : i32
    return %c0_i32, %c0_i32_0 : i32, i32
  }
  func.func @transform_1(%arg0: i32) -> (i32, i32) {
    %c0_i32 = arith.constant 0 : i32
    %c0_i32_0 = arith.constant 0 : i32
    %c0_i32_1 = arith.constant 0 : i32
    return %c0_i32, %c0_i32_0 : i32, i32
  }
  func.func @transform_2(%arg0: i32) -> (i32, i32) {
    %c0_i32 = arith.constant 0 : i32
    %c0_i32_0 = arith.constant 0 : i32
    %c0_i32_1 = arith.constant 0 : i32
    return %c0_i32, %c0_i32_0 : i32, i32
  }
}

module attributes {stable_mosaic.version = 11 : i64} {
  func.func @kernel(%arg0: i32, %arg1: memref<32x1024xbf16, #tpu.memory_space<vmem>>, %arg2: memref<1024x128xbf16, #tpu.memory_space<vmem>>, %arg3: memref<32x128xf32, #tpu.memory_space<vmem>>) attributes {dimension_semantics = [#tpu.dimension_semantics<arbitrary>], iteration_bounds = array<i64: 1>, scalar_prefetch = 0 : i64, scratch_operands = 0 : i64, tpu.core_type = #tpu.core_type<tc>, window_params = [{pipeline_mode = #tpu.pipeline_mode<synchronous>, transform_indices = @transform_0, window_bounds = array<i64: 32, 1024>}, {pipeline_mode = #tpu.pipeline_mode<synchronous>, transform_indices = @transform_1, window_bounds = array<i64: 1024, 128>}, {pipeline_mode = #tpu.pipeline_mode<synchronous>, transform_indices = @transform_2, window_bounds = array<i64: 32, 128>}]} {
    %c0 = arith.constant 0 : index
    %c0_0 = arith.constant 0 : index
    %0 = vector.load %arg1[%c0, %c0_0] : memref<32x1024xbf16, #tpu.memory_space<vmem>>, vector<32x1024xbf16>
    %c0_1 = arith.constant 0 : index
    %c0_2 = arith.constant 0 : index
    %1 = vector.load %arg2[%c0_1, %c0_2] : memref<1024x128xbf16, #tpu.memory_space<vmem>>, vector<1024x128xbf16>
    %cst = arith.constant dense<0.000000e+00> : vector<32x128xf32>
    %2 = tpu.matmul %0, %1, %cst {dimension_numbers = #tpu.dot_dimension_numbers<[1], [0], [0], [1], [0, 0, 1, 1], [], []>} : vector<32x1024xbf16>, vector<1024x128xbf16>, vector<32x128xf32> -> vector<32x128xf32>
    %3 = vector.extract_strided_slice %2 {offsets = [0, 0], sizes = [16, 128], strides = [1, 1]} : vector<32x128xf32> to vector<16x128xf32>
    %cst_3 = arith.constant dense<0.000000e+00> : vector<128xf32>
    %4 = vector.multi_reduction <add>, %3, %cst_3 [0] : vector<16x128xf32> to vector<128xf32>
    %5 = vector.shape_cast %4 : vector<128xf32> to vector<1x128xf32>
    %6 = arith.mulf %3, %3 : vector<16x128xf32>
    %cst_4 = arith.constant dense<0.000000e+00> : vector<128xf32>
    %7 = vector.multi_reduction <add>, %6, %cst_4 [0] : vector<16x128xf32> to vector<128xf32>
    %8 = vector.shape_cast %7 : vector<128xf32> to vector<1x128xf32>
    %cst_5 = arith.constant 6.250000e-02 : f32
    %9 = vector.broadcast %cst_5 : f32 to vector<1x128xf32>
    %10 = arith.mulf %5, %9 : vector<1x128xf32>
    %cst_6 = arith.constant 6.250000e-02 : f32
    %11 = vector.broadcast %cst_6 : f32 to vector<1x128xf32>
    %12 = arith.mulf %8, %11 : vector<1x128xf32>
    %13 = arith.mulf %10, %10 : vector<1x128xf32>
    %14 = arith.subf %12, %13 : vector<1x128xf32>
    %cst_7 = arith.constant 0.000000e+00 : f32
    %15 = vector.broadcast %cst_7 : f32 to vector<1x128xf32>
    %16 = arith.maximumf %14, %15 : vector<1x128xf32>
    %cst_8 = arith.constant 9.99999974E-6 : f32
    %17 = vector.broadcast %cst_8 : f32 to vector<1x128xf32>
    %18 = arith.addf %16, %17 : vector<1x128xf32>
    %19 = math.rsqrt %18 : vector<1x128xf32>
    %20 = vector.broadcast %10 : vector<1x128xf32> to vector<16x128xf32>
    %21 = arith.subf %3, %20 : vector<16x128xf32>
    %22 = vector.broadcast %19 : vector<1x128xf32> to vector<16x128xf32>
    %23 = arith.mulf %21, %22 : vector<16x128xf32>
    %cst_9 = arith.constant 0.000000e+00 : f32
    %24 = vector.broadcast %cst_9 : f32 to vector<16x128xf32>
    %25 = arith.maximumf %23, %24 : vector<16x128xf32>
    %26 = vector.extract_strided_slice %2 {offsets = [16, 0], sizes = [16, 128], strides = [1, 1]} : vector<32x128xf32> to vector<16x128xf32>
    %cst_10 = arith.constant dense<0.000000e+00> : vector<128xf32>
    %27 = vector.multi_reduction <add>, %26, %cst_10 [0] : vector<16x128xf32> to vector<128xf32>
    %28 = vector.shape_cast %27 : vector<128xf32> to vector<1x128xf32>
    %29 = arith.mulf %26, %26 : vector<16x128xf32>
    %cst_11 = arith.constant dense<0.000000e+00> : vector<128xf32>
    %30 = vector.multi_reduction <add>, %29, %cst_11 [0] : vector<16x128xf32> to vector<128xf32>
    %31 = vector.shape_cast %30 : vector<128xf32> to vector<1x128xf32>
    %cst_12 = arith.constant 6.250000e-02 : f32
    %32 = vector.broadcast %cst_12 : f32 to vector<1x128xf32>
    %33 = arith.mulf %28, %32 : vector<1x128xf32>
    %cst_13 = arith.constant 6.250000e-02 : f32
    %34 = vector.broadcast %cst_13 : f32 to vector<1x128xf32>
    %35 = arith.mulf %31, %34 : vector<1x128xf32>
    %36 = arith.mulf %33, %33 : vector<1x128xf32>
    %37 = arith.subf %35, %36 : vector<1x128xf32>
    %cst_14 = arith.constant 0.000000e+00 : f32
    %38 = vector.broadcast %cst_14 : f32 to vector<1x128xf32>
    %39 = arith.maximumf %37, %38 : vector<1x128xf32>
    %cst_15 = arith.constant 9.99999974E-6 : f32
    %40 = vector.broadcast %cst_15 : f32 to vector<1x128xf32>
    %41 = arith.addf %39, %40 : vector<1x128xf32>
    %42 = math.rsqrt %41 : vector<1x128xf32>
    %43 = vector.broadcast %33 : vector<1x128xf32> to vector<16x128xf32>
    %44 = arith.subf %26, %43 : vector<16x128xf32>
    %45 = vector.broadcast %42 : vector<1x128xf32> to vector<16x128xf32>
    %46 = arith.mulf %44, %45 : vector<16x128xf32>
    %cst_16 = arith.constant 0.000000e+00 : f32
    %47 = vector.broadcast %cst_16 : f32 to vector<16x128xf32>
    %48 = arith.maximumf %46, %47 : vector<16x128xf32>
    %49 = tpu.concatenate %25, %48 in 0 : vector<16x128xf32>, vector<16x128xf32> -> vector<32x128xf32>
    %c0_17 = arith.constant 0 : index
    %c0_18 = arith.constant 0 : index
    %50 = vector.load %arg3[%c0_17, %c0_18] : memref<32x128xf32, #tpu.memory_space<vmem>>, vector<32x128xf32>
    tpu.vector_store %arg3[%c0_17, %c0_18], %49 {strides = array<i32>} : memref<32x128xf32, #tpu.memory_space<vmem>>, vector<32x128xf32>,
    return
  }
  func.func @transform_0(%arg0: i32) -> (i32, i32) {
    %c0_i32 = arith.constant 0 : i32
    %c0_i32_0 = arith.constant 0 : i32
    %c0_i32_1 = arith.constant 0 : i32
    return %c0_i32, %c0_i32_0 : i32, i32
  }
  func.func @transform_1(%arg0: i32) -> (i32, i32) {
    %c0_i32 = arith.constant 0 : i32
    %c0_i32_0 = arith.constant 0 : i32
    %c0_i32_1 = arith.constant 0 : i32
    return %c0_i32, %c0_i32_0 : i32, i32
  }
  func.func @transform_2(%arg0: i32) -> (i32, i32) {
    %c0_i32 = arith.constant 0 : i32
    %c0_i32_0 = arith.constant 0 : i32
    %c0_i32_1 = arith.constant 0 : i32
    return %c0_i32, %c0_i32_0 : i32, i32
  }
}

module attributes {stable_mosaic.version = 11 : i64} {
  func.func @kernel(%arg0: i32, %arg1: memref<32x288xbf16, #tpu.memory_space<vmem>>, %arg2: memref<288x128xbf16, #tpu.memory_space<vmem>>, %arg3: memref<32x128xf32, #tpu.memory_space<vmem>>) attributes {dimension_semantics = [#tpu.dimension_semantics<arbitrary>], iteration_bounds = array<i64: 1>, scalar_prefetch = 0 : i64, scratch_operands = 0 : i64, tpu.core_type = #tpu.core_type<tc>, window_params = [{pipeline_mode = #tpu.pipeline_mode<synchronous>, transform_indices = @transform_0, window_bounds = array<i64: 32, 288>}, {pipeline_mode = #tpu.pipeline_mode<synchronous>, transform_indices = @transform_1, window_bounds = array<i64: 288, 128>}, {pipeline_mode = #tpu.pipeline_mode<synchronous>, transform_indices = @transform_2, window_bounds = array<i64: 32, 128>}]} {
    %c0 = arith.constant 0 : index
    %c0_0 = arith.constant 0 : index
    %0 = vector.load %arg1[%c0, %c0_0] : memref<32x288xbf16, #tpu.memory_space<vmem>>, vector<32x288xbf16>
    %c0_1 = arith.constant 0 : index
    %c0_2 = arith.constant 0 : index
    %1 = vector.load %arg2[%c0_1, %c0_2] : memref<288x128xbf16, #tpu.memory_space<vmem>>, vector<288x128xbf16>
    %cst = arith.constant dense<0.000000e+00> : vector<32x128xf32>
    %2 = tpu.matmul %0, %1, %cst {dimension_numbers = #tpu.dot_dimension_numbers<[1], [0], [0], [1], [0, 0, 1, 1], [], []>} : vector<32x288xbf16>, vector<288x128xbf16>, vector<32x128xf32> -> vector<32x128xf32>
    %3 = vector.extract_strided_slice %2 {offsets = [0, 0], sizes = [16, 128], strides = [1, 1]} : vector<32x128xf32> to vector<16x128xf32>
    %cst_3 = arith.constant dense<0.000000e+00> : vector<128xf32>
    %4 = vector.multi_reduction <add>, %3, %cst_3 [0] : vector<16x128xf32> to vector<128xf32>
    %5 = vector.shape_cast %4 : vector<128xf32> to vector<1x128xf32>
    %6 = arith.mulf %3, %3 : vector<16x128xf32>
    %cst_4 = arith.constant dense<0.000000e+00> : vector<128xf32>
    %7 = vector.multi_reduction <add>, %6, %cst_4 [0] : vector<16x128xf32> to vector<128xf32>
    %8 = vector.shape_cast %7 : vector<128xf32> to vector<1x128xf32>
    %9 = vector.extract_strided_slice %5 {offsets = [0, 0], sizes = [1, 32], strides = [1, 1]} : vector<1x128xf32> to vector<1x32xf32>
    %cst_5 = arith.constant 0.000000e+00 : f32
    %10 = vector.broadcast %cst_5 : f32 to vector<1x32xf32>
    %11 = arith.addf %10, %9 : vector<1x32xf32>
    %12 = vector.extract_strided_slice %5 {offsets = [0, 32], sizes = [1, 32], strides = [1, 1]} : vector<1x128xf32> to vector<1x32xf32>
    %13 = arith.addf %11, %12 : vector<1x32xf32>
    %14 = vector.extract_strided_slice %5 {offsets = [0, 64], sizes = [1, 32], strides = [1, 1]} : vector<1x128xf32> to vector<1x32xf32>
    %15 = arith.addf %13, %14 : vector<1x32xf32>
    %16 = vector.extract_strided_slice %5 {offsets = [0, 96], sizes = [1, 32], strides = [1, 1]} : vector<1x128xf32> to vector<1x32xf32>
    %17 = arith.addf %15, %16 : vector<1x32xf32>
    %18 = vector.extract_strided_slice %8 {offsets = [0, 0], sizes = [1, 32], strides = [1, 1]} : vector<1x128xf32> to vector<1x32xf32>
    %cst_6 = arith.constant 0.000000e+00 : f32
    %19 = vector.broadcast %cst_6 : f32 to vector<1x32xf32>
    %20 = arith.addf %19, %18 : vector<1x32xf32>
    %21 = vector.extract_strided_slice %8 {offsets = [0, 32], sizes = [1, 32], strides = [1, 1]} : vector<1x128xf32> to vector<1x32xf32>
    %22 = arith.addf %20, %21 : vector<1x32xf32>
    %23 = vector.extract_strided_slice %8 {offsets = [0, 64], sizes = [1, 32], strides = [1, 1]} : vector<1x128xf32> to vector<1x32xf32>
    %24 = arith.addf %22, %23 : vector<1x32xf32>
    %25 = vector.extract_strided_slice %8 {offsets = [0, 96], sizes = [1, 32], strides = [1, 1]} : vector<1x128xf32> to vector<1x32xf32>
    %26 = arith.addf %24, %25 : vector<1x32xf32>
    %cst_7 = arith.constant 1.562500e-02 : f32
    %27 = vector.broadcast %cst_7 : f32 to vector<1x32xf32>
    %28 = arith.mulf %17, %27 : vector<1x32xf32>
    %cst_8 = arith.constant 1.562500e-02 : f32
    %29 = vector.broadcast %cst_8 : f32 to vector<1x32xf32>
    %30 = arith.mulf %26, %29 : vector<1x32xf32>
    %31 = arith.mulf %28, %28 : vector<1x32xf32>
    %32 = arith.subf %30, %31 : vector<1x32xf32>
    %cst_9 = arith.constant 0.000000e+00 : f32
    %33 = vector.broadcast %cst_9 : f32 to vector<1x32xf32>
    %34 = arith.maximumf %32, %33 : vector<1x32xf32>
    %cst_10 = arith.constant 9.99999974E-6 : f32
    %35 = vector.broadcast %cst_10 : f32 to vector<1x32xf32>
    %36 = arith.addf %34, %35 : vector<1x32xf32>
    %37 = math.rsqrt %36 : vector<1x32xf32>
    %38 = tpu.concatenate %28, %28, %28, %28 in 1 : vector<1x32xf32>, vector<1x32xf32>, vector<1x32xf32>, vector<1x32xf32> -> vector<1x128xf32>
    %39 = tpu.concatenate %37, %37, %37, %37 in 1 : vector<1x32xf32>, vector<1x32xf32>, vector<1x32xf32>, vector<1x32xf32> -> vector<1x128xf32>
    %40 = vector.broadcast %38 : vector<1x128xf32> to vector<16x128xf32>
    %41 = arith.subf %3, %40 : vector<16x128xf32>
    %42 = vector.broadcast %39 : vector<1x128xf32> to vector<16x128xf32>
    %43 = arith.mulf %41, %42 : vector<16x128xf32>
    %cst_11 = arith.constant 0.000000e+00 : f32
    %44 = vector.broadcast %cst_11 : f32 to vector<16x128xf32>
    %45 = arith.maximumf %43, %44 : vector<16x128xf32>
    %46 = vector.extract_strided_slice %2 {offsets = [16, 0], sizes = [16, 128], strides = [1, 1]} : vector<32x128xf32> to vector<16x128xf32>
    %cst_12 = arith.constant dense<0.000000e+00> : vector<128xf32>
    %47 = vector.multi_reduction <add>, %46, %cst_12 [0] : vector<16x128xf32> to vector<128xf32>
    %48 = vector.shape_cast %47 : vector<128xf32> to vector<1x128xf32>
    %49 = arith.mulf %46, %46 : vector<16x128xf32>
    %cst_13 = arith.constant dense<0.000000e+00> : vector<128xf32>
    %50 = vector.multi_reduction <add>, %49, %cst_13 [0] : vector<16x128xf32> to vector<128xf32>
    %51 = vector.shape_cast %50 : vector<128xf32> to vector<1x128xf32>
    %52 = vector.extract_strided_slice %48 {offsets = [0, 0], sizes = [1, 32], strides = [1, 1]} : vector<1x128xf32> to vector<1x32xf32>
    %cst_14 = arith.constant 0.000000e+00 : f32
    %53 = vector.broadcast %cst_14 : f32 to vector<1x32xf32>
    %54 = arith.addf %53, %52 : vector<1x32xf32>
    %55 = vector.extract_strided_slice %48 {offsets = [0, 32], sizes = [1, 32], strides = [1, 1]} : vector<1x128xf32> to vector<1x32xf32>
    %56 = arith.addf %54, %55 : vector<1x32xf32>
    %57 = vector.extract_strided_slice %48 {offsets = [0, 64], sizes = [1, 32], strides = [1, 1]} : vector<1x128xf32> to vector<1x32xf32>
    %58 = arith.addf %56, %57 : vector<1x32xf32>
    %59 = vector.extract_strided_slice %48 {offsets = [0, 96], sizes = [1, 32], strides = [1, 1]} : vector<1x128xf32> to vector<1x32xf32>
    %60 = arith.addf %58, %59 : vector<1x32xf32>
    %61 = vector.extract_strided_slice %51 {offsets = [0, 0], sizes = [1, 32], strides = [1, 1]} : vector<1x128xf32> to vector<1x32xf32>
    %cst_15 = arith.constant 0.000000e+00 : f32
    %62 = vector.broadcast %cst_15 : f32 to vector<1x32xf32>
    %63 = arith.addf %62, %61 : vector<1x32xf32>
    %64 = vector.extract_strided_slice %51 {offsets = [0, 32], sizes = [1, 32], strides = [1, 1]} : vector<1x128xf32> to vector<1x32xf32>
    %65 = arith.addf %63, %64 : vector<1x32xf32>
    %66 = vector.extract_strided_slice %51 {offsets = [0, 64], sizes = [1, 32], strides = [1, 1]} : vector<1x128xf32> to vector<1x32xf32>
    %67 = arith.addf %65, %66 : vector<1x32xf32>
    %68 = vector.extract_strided_slice %51 {offsets = [0, 96], sizes = [1, 32], strides = [1, 1]} : vector<1x128xf32> to vector<1x32xf32>
    %69 = arith.addf %67, %68 : vector<1x32xf32>
    %cst_16 = arith.constant 1.562500e-02 : f32
    %70 = vector.broadcast %cst_16 : f32 to vector<1x32xf32>
    %71 = arith.mulf %60, %70 : vector<1x32xf32>
    %cst_17 = arith.constant 1.562500e-02 : f32
    %72 = vector.broadcast %cst_17 : f32 to vector<1x32xf32>
    %73 = arith.mulf %69, %72 : vector<1x32xf32>
    %74 = arith.mulf %71, %71 : vector<1x32xf32>
    %75 = arith.subf %73, %74 : vector<1x32xf32>
    %cst_18 = arith.constant 0.000000e+00 : f32
    %76 = vector.broadcast %cst_18 : f32 to vector<1x32xf32>
    %77 = arith.maximumf %75, %76 : vector<1x32xf32>
    %cst_19 = arith.constant 9.99999974E-6 : f32
    %78 = vector.broadcast %cst_19 : f32 to vector<1x32xf32>
    %79 = arith.addf %77, %78 : vector<1x32xf32>
    %80 = math.rsqrt %79 : vector<1x32xf32>
    %81 = tpu.concatenate %71, %71, %71, %71 in 1 : vector<1x32xf32>, vector<1x32xf32>, vector<1x32xf32>, vector<1x32xf32> -> vector<1x128xf32>
    %82 = tpu.concatenate %80, %80, %80, %80 in 1 : vector<1x32xf32>, vector<1x32xf32>, vector<1x32xf32>, vector<1x32xf32> -> vector<1x128xf32>
    %83 = vector.broadcast %81 : vector<1x128xf32> to vector<16x128xf32>
    %84 = arith.subf %46, %83 : vector<16x128xf32>
    %85 = vector.broadcast %82 : vector<1x128xf32> to vector<16x128xf32>
    %86 = arith.mulf %84, %85 : vector<16x128xf32>
    %cst_20 = arith.constant 0.000000e+00 : f32
    %87 = vector.broadcast %cst_20 : f32 to vector<16x128xf32>
    %88 = arith.maximumf %86, %87 : vector<16x128xf32>
    %89 = tpu.concatenate %45, %88 in 0 : vector<16x128xf32>, vector<16x128xf32> -> vector<32x128xf32>
    %c0_21 = arith.constant 0 : index
    %c0_22 = arith.constant 0 : index
    %90 = vector.load %arg3[%c0_21, %c0_22] : memref<32x128xf32, #tpu.memory_space<vmem>>, vector<32x128xf32>
    tpu.vector_store %arg3[%c0_21, %c0_22], %89 {strides = array<i32>} : memref<32x128xf32, #tpu.memory_space<vmem>>, vector<32x128xf32>,
    return
  }
  func.func @transform_0(%arg0: i32) -> (i32, i32) {
    %c0_i32 = arith.constant 0 : i32
    %c0_i32_0 = arith.constant 0 : i32
    %c0_i32_1 = arith.constant 0 : i32
    return %c0_i32, %c0_i32_0 : i32, i32
  }
  func.func @transform_1(%arg0: i32) -> (i32, i32) {
    %c0_i32 = arith.constant 0 : i32
    %c0_i32_0 = arith.constant 0 : i32
    %c0_i32_1 = arith.constant 0 : i32
    return %c0_i32, %c0_i32_0 : i32, i32
  }
  func.func @transform_2(%arg0: i32) -> (i32, i32) {
    %c0_i32 = arith.constant 0 : i32
    %c0_i32_0 = arith.constant 0 : i32
    %c0_i32_1 = arith.constant 0 : i32
    return %c0_i32, %c0_i32_0 : i32, i32
  }
}

module attributes {stable_mosaic.version = 11 : i64} {
  func.func @kernel(%arg0: i32, %arg1: memref<128x144xbf16, #tpu.memory_space<vmem>>, %arg2: memref<144x128xbf16, #tpu.memory_space<vmem>>, %arg3: memref<128x128xf32, #tpu.memory_space<vmem>>) attributes {dimension_semantics = [#tpu.dimension_semantics<arbitrary>], iteration_bounds = array<i64: 1>, scalar_prefetch = 0 : i64, scratch_operands = 0 : i64, tpu.core_type = #tpu.core_type<tc>, window_params = [{pipeline_mode = #tpu.pipeline_mode<synchronous>, transform_indices = @transform_0, window_bounds = array<i64: 128, 144>}, {pipeline_mode = #tpu.pipeline_mode<synchronous>, transform_indices = @transform_1, window_bounds = array<i64: 144, 128>}, {pipeline_mode = #tpu.pipeline_mode<synchronous>, transform_indices = @transform_2, window_bounds = array<i64: 128, 128>}]} {
    %c0 = arith.constant 0 : index
    %c0_0 = arith.constant 0 : index
    %0 = vector.load %arg1[%c0, %c0_0] : memref<128x144xbf16, #tpu.memory_space<vmem>>, vector<128x144xbf16>
    %c0_1 = arith.constant 0 : index
    %c0_2 = arith.constant 0 : index
    %1 = vector.load %arg2[%c0_1, %c0_2] : memref<144x128xbf16, #tpu.memory_space<vmem>>, vector<144x128xbf16>
    %cst = arith.constant dense<0.000000e+00> : vector<128x128xf32>
    %2 = tpu.matmul %0, %1, %cst {dimension_numbers = #tpu.dot_dimension_numbers<[1], [0], [0], [1], [0, 0, 1, 1], [], []>} : vector<128x144xbf16>, vector<144x128xbf16>, vector<128x128xf32> -> vector<128x128xf32>
    %3 = vector.extract_strided_slice %2 {offsets = [0, 0], sizes = [64, 128], strides = [1, 1]} : vector<128x128xf32> to vector<64x128xf32>
    %cst_3 = arith.constant dense<0.000000e+00> : vector<128xf32>
    %4 = vector.multi_reduction <add>, %3, %cst_3 [0] : vector<64x128xf32> to vector<128xf32>
    %5 = vector.shape_cast %4 : vector<128xf32> to vector<1x128xf32>
    %6 = arith.mulf %3, %3 : vector<64x128xf32>
    %cst_4 = arith.constant dense<0.000000e+00> : vector<128xf32>
    %7 = vector.multi_reduction <add>, %6, %cst_4 [0] : vector<64x128xf32> to vector<128xf32>
    %8 = vector.shape_cast %7 : vector<128xf32> to vector<1x128xf32>
    %9 = vector.extract_strided_slice %5 {offsets = [0, 0], sizes = [1, 32], strides = [1, 1]} : vector<1x128xf32> to vector<1x32xf32>
    %cst_5 = arith.constant 0.000000e+00 : f32
    %10 = vector.broadcast %cst_5 : f32 to vector<1x32xf32>
    %11 = arith.addf %10, %9 : vector<1x32xf32>
    %12 = vector.extract_strided_slice %5 {offsets = [0, 32], sizes = [1, 32], strides = [1, 1]} : vector<1x128xf32> to vector<1x32xf32>
    %13 = arith.addf %11, %12 : vector<1x32xf32>
    %14 = vector.extract_strided_slice %5 {offsets = [0, 64], sizes = [1, 32], strides = [1, 1]} : vector<1x128xf32> to vector<1x32xf32>
    %15 = arith.addf %13, %14 : vector<1x32xf32>
    %16 = vector.extract_strided_slice %5 {offsets = [0, 96], sizes = [1, 32], strides = [1, 1]} : vector<1x128xf32> to vector<1x32xf32>
    %17 = arith.addf %15, %16 : vector<1x32xf32>
    %18 = vector.extract_strided_slice %8 {offsets = [0, 0], sizes = [1, 32], strides = [1, 1]} : vector<1x128xf32> to vector<1x32xf32>
    %cst_6 = arith.constant 0.000000e+00 : f32
    %19 = vector.broadcast %cst_6 : f32 to vector<1x32xf32>
    %20 = arith.addf %19, %18 : vector<1x32xf32>
    %21 = vector.extract_strided_slice %8 {offsets = [0, 32], sizes = [1, 32], strides = [1, 1]} : vector<1x128xf32> to vector<1x32xf32>
    %22 = arith.addf %20, %21 : vector<1x32xf32>
    %23 = vector.extract_strided_slice %8 {offsets = [0, 64], sizes = [1, 32], strides = [1, 1]} : vector<1x128xf32> to vector<1x32xf32>
    %24 = arith.addf %22, %23 : vector<1x32xf32>
    %25 = vector.extract_strided_slice %8 {offsets = [0, 96], sizes = [1, 32], strides = [1, 1]} : vector<1x128xf32> to vector<1x32xf32>
    %26 = arith.addf %24, %25 : vector<1x32xf32>
    %cst_7 = arith.constant 3.906250e-03 : f32
    %27 = vector.broadcast %cst_7 : f32 to vector<1x32xf32>
    %28 = arith.mulf %17, %27 : vector<1x32xf32>
    %cst_8 = arith.constant 3.906250e-03 : f32
    %29 = vector.broadcast %cst_8 : f32 to vector<1x32xf32>
    %30 = arith.mulf %26, %29 : vector<1x32xf32>
    %31 = arith.mulf %28, %28 : vector<1x32xf32>
    %32 = arith.subf %30, %31 : vector<1x32xf32>
    %cst_9 = arith.constant 0.000000e+00 : f32
    %33 = vector.broadcast %cst_9 : f32 to vector<1x32xf32>
    %34 = arith.maximumf %32, %33 : vector<1x32xf32>
    %cst_10 = arith.constant 9.99999974E-6 : f32
    %35 = vector.broadcast %cst_10 : f32 to vector<1x32xf32>
    %36 = arith.addf %34, %35 : vector<1x32xf32>
    %37 = math.rsqrt %36 : vector<1x32xf32>
    %38 = tpu.concatenate %28, %28, %28, %28 in 1 : vector<1x32xf32>, vector<1x32xf32>, vector<1x32xf32>, vector<1x32xf32> -> vector<1x128xf32>
    %39 = tpu.concatenate %37, %37, %37, %37 in 1 : vector<1x32xf32>, vector<1x32xf32>, vector<1x32xf32>, vector<1x32xf32> -> vector<1x128xf32>
    %40 = vector.broadcast %38 : vector<1x128xf32> to vector<64x128xf32>
    %41 = arith.subf %3, %40 : vector<64x128xf32>
    %42 = vector.broadcast %39 : vector<1x128xf32> to vector<64x128xf32>
    %43 = arith.mulf %41, %42 : vector<64x128xf32>
    %cst_11 = arith.constant 0.000000e+00 : f32
    %44 = vector.broadcast %cst_11 : f32 to vector<64x128xf32>
    %45 = arith.maximumf %43, %44 : vector<64x128xf32>
    %46 = vector.extract_strided_slice %2 {offsets = [64, 0], sizes = [64, 128], strides = [1, 1]} : vector<128x128xf32> to vector<64x128xf32>
    %cst_12 = arith.constant dense<0.000000e+00> : vector<128xf32>
    %47 = vector.multi_reduction <add>, %46, %cst_12 [0] : vector<64x128xf32> to vector<128xf32>
    %48 = vector.shape_cast %47 : vector<128xf32> to vector<1x128xf32>
    %49 = arith.mulf %46, %46 : vector<64x128xf32>
    %cst_13 = arith.constant dense<0.000000e+00> : vector<128xf32>
    %50 = vector.multi_reduction <add>, %49, %cst_13 [0] : vector<64x128xf32> to vector<128xf32>
    %51 = vector.shape_cast %50 : vector<128xf32> to vector<1x128xf32>
    %52 = vector.extract_strided_slice %48 {offsets = [0, 0], sizes = [1, 32], strides = [1, 1]} : vector<1x128xf32> to vector<1x32xf32>
    %cst_14 = arith.constant 0.000000e+00 : f32
    %53 = vector.broadcast %cst_14 : f32 to vector<1x32xf32>
    %54 = arith.addf %53, %52 : vector<1x32xf32>
    %55 = vector.extract_strided_slice %48 {offsets = [0, 32], sizes = [1, 32], strides = [1, 1]} : vector<1x128xf32> to vector<1x32xf32>
    %56 = arith.addf %54, %55 : vector<1x32xf32>
    %57 = vector.extract_strided_slice %48 {offsets = [0, 64], sizes = [1, 32], strides = [1, 1]} : vector<1x128xf32> to vector<1x32xf32>
    %58 = arith.addf %56, %57 : vector<1x32xf32>
    %59 = vector.extract_strided_slice %48 {offsets = [0, 96], sizes = [1, 32], strides = [1, 1]} : vector<1x128xf32> to vector<1x32xf32>
    %60 = arith.addf %58, %59 : vector<1x32xf32>
    %61 = vector.extract_strided_slice %51 {offsets = [0, 0], sizes = [1, 32], strides = [1, 1]} : vector<1x128xf32> to vector<1x32xf32>
    %cst_15 = arith.constant 0.000000e+00 : f32
    %62 = vector.broadcast %cst_15 : f32 to vector<1x32xf32>
    %63 = arith.addf %62, %61 : vector<1x32xf32>
    %64 = vector.extract_strided_slice %51 {offsets = [0, 32], sizes = [1, 32], strides = [1, 1]} : vector<1x128xf32> to vector<1x32xf32>
    %65 = arith.addf %63, %64 : vector<1x32xf32>
    %66 = vector.extract_strided_slice %51 {offsets = [0, 64], sizes = [1, 32], strides = [1, 1]} : vector<1x128xf32> to vector<1x32xf32>
    %67 = arith.addf %65, %66 : vector<1x32xf32>
    %68 = vector.extract_strided_slice %51 {offsets = [0, 96], sizes = [1, 32], strides = [1, 1]} : vector<1x128xf32> to vector<1x32xf32>
    %69 = arith.addf %67, %68 : vector<1x32xf32>
    %cst_16 = arith.constant 3.906250e-03 : f32
    %70 = vector.broadcast %cst_16 : f32 to vector<1x32xf32>
    %71 = arith.mulf %60, %70 : vector<1x32xf32>
    %cst_17 = arith.constant 3.906250e-03 : f32
    %72 = vector.broadcast %cst_17 : f32 to vector<1x32xf32>
    %73 = arith.mulf %69, %72 : vector<1x32xf32>
    %74 = arith.mulf %71, %71 : vector<1x32xf32>
    %75 = arith.subf %73, %74 : vector<1x32xf32>
    %cst_18 = arith.constant 0.000000e+00 : f32
    %76 = vector.broadcast %cst_18 : f32 to vector<1x32xf32>
    %77 = arith.maximumf %75, %76 : vector<1x32xf32>
    %cst_19 = arith.constant 9.99999974E-6 : f32
    %78 = vector.broadcast %cst_19 : f32 to vector<1x32xf32>
    %79 = arith.addf %77, %78 : vector<1x32xf32>
    %80 = math.rsqrt %79 : vector<1x32xf32>
    %81 = tpu.concatenate %71, %71, %71, %71 in 1 : vector<1x32xf32>, vector<1x32xf32>, vector<1x32xf32>, vector<1x32xf32> -> vector<1x128xf32>
    %82 = tpu.concatenate %80, %80, %80, %80 in 1 : vector<1x32xf32>, vector<1x32xf32>, vector<1x32xf32>, vector<1x32xf32> -> vector<1x128xf32>
    %83 = vector.broadcast %81 : vector<1x128xf32> to vector<64x128xf32>
    %84 = arith.subf %46, %83 : vector<64x128xf32>
    %85 = vector.broadcast %82 : vector<1x128xf32> to vector<64x128xf32>
    %86 = arith.mulf %84, %85 : vector<64x128xf32>
    %cst_20 = arith.constant 0.000000e+00 : f32
    %87 = vector.broadcast %cst_20 : f32 to vector<64x128xf32>
    %88 = arith.maximumf %86, %87 : vector<64x128xf32>
    %89 = tpu.concatenate %45, %88 in 0 : vector<64x128xf32>, vector<64x128xf32> -> vector<128x128xf32>
    %c0_21 = arith.constant 0 : index
    %c0_22 = arith.constant 0 : index
    %90 = vector.load %arg3[%c0_21, %c0_22] : memref<128x128xf32, #tpu.memory_space<vmem>>, vector<128x128xf32>
    tpu.vector_store %arg3[%c0_21, %c0_22], %89 {strides = array<i32>} : memref<128x128xf32, #tpu.memory_space<vmem>>, vector<128x128xf32>,
    return
  }
  func.func @transform_0(%arg0: i32) -> (i32, i32) {
    %c0_i32 = arith.constant 0 : i32
    %c0_i32_0 = arith.constant 0 : i32
    %c0_i32_1 = arith.constant 0 : i32
    return %c0_i32, %c0_i32_0 : i32, i32
  }
  func.func @transform_1(%arg0: i32) -> (i32, i32) {
    %c0_i32 = arith.constant 0 : i32
    %c0_i32_0 = arith.constant 0 : i32
    %c0_i32_1 = arith.constant 0 : i32
    return %c0_i32, %c0_i32_0 : i32, i32
  }
  func.func @transform_2(%arg0: i32) -> (i32, i32) {
    %c0_i32 = arith.constant 0 : i32
    %c0_i32_0 = arith.constant 0 : i32
    %c0_i32_1 = arith.constant 0 : i32
    return %c0_i32, %c0_i32_0 : i32, i32
  }
}

module attributes {stable_mosaic.version = 11 : i64} {
  func.func @kernel(%arg0: i32, %arg1: memref<512x72xbf16, #tpu.memory_space<vmem>>, %arg2: memref<72x128xbf16, #tpu.memory_space<vmem>>, %arg3: memref<512x128xf32, #tpu.memory_space<vmem>>) attributes {dimension_semantics = [#tpu.dimension_semantics<arbitrary>], iteration_bounds = array<i64: 1>, scalar_prefetch = 0 : i64, scratch_operands = 0 : i64, tpu.core_type = #tpu.core_type<tc>, window_params = [{pipeline_mode = #tpu.pipeline_mode<synchronous>, transform_indices = @transform_0, window_bounds = array<i64: 512, 72>}, {pipeline_mode = #tpu.pipeline_mode<synchronous>, transform_indices = @transform_1, window_bounds = array<i64: 72, 128>}, {pipeline_mode = #tpu.pipeline_mode<synchronous>, transform_indices = @transform_2, window_bounds = array<i64: 512, 128>}]} {
    %c0 = arith.constant 0 : index
    %c0_0 = arith.constant 0 : index
    %0 = vector.load %arg1[%c0, %c0_0] : memref<512x72xbf16, #tpu.memory_space<vmem>>, vector<512x72xbf16>
    %c0_1 = arith.constant 0 : index
    %c0_2 = arith.constant 0 : index
    %1 = vector.load %arg2[%c0_1, %c0_2] : memref<72x128xbf16, #tpu.memory_space<vmem>>, vector<72x128xbf16>
    %cst = arith.constant dense<0.000000e+00> : vector<512x128xf32>
    %2 = tpu.matmul %0, %1, %cst {dimension_numbers = #tpu.dot_dimension_numbers<[1], [0], [0], [1], [0, 0, 1, 1], [], []>} : vector<512x72xbf16>, vector<72x128xbf16>, vector<512x128xf32> -> vector<512x128xf32>
    %3 = math.tanh %2 : vector<512x128xf32>
    %c0_3 = arith.constant 0 : index
    %c0_4 = arith.constant 0 : index
    %4 = vector.load %arg3[%c0_3, %c0_4] : memref<512x128xf32, #tpu.memory_space<vmem>>, vector<512x128xf32>
    tpu.vector_store %arg3[%c0_3, %c0_4], %3 {strides = array<i32>} : memref<512x128xf32, #tpu.memory_space<vmem>>, vector<512x128xf32>,
    return
  }
  func.func @transform_0(%arg0: i32) -> (i32, i32) {
    %c0_i32 = arith.constant 0 : i32
    %c0_i32_0 = arith.constant 0 : i32
    %c0_i32_1 = arith.constant 0 : i32
    return %c0_i32, %c0_i32_0 : i32, i32
  }
  func.func @transform_1(%arg0: i32) -> (i32, i32) {
    %c0_i32 = arith.constant 0 : i32
    %c0_i32_0 = arith.constant 0 : i32
    %c0_i32_1 = arith.constant 0 : i32
    return %c0_i32, %c0_i32_0 : i32, i32
  }
  func.func @transform_2(%arg0: i32) -> (i32, i32) {
    %c0_i32 = arith.constant 0 : i32
    %c0_i32_0 = arith.constant 0 : i32
    %c0_i32_1 = arith.constant 0 : i32
    return %c0_i32, %c0_i32_0 : i32, i32
  }
}

</mosaic_0001>

<llo_original>
// kernel: generator_forward.5
$region0: #{generator_forward.5}
  #allocation0 [shape = 'u32[]', space=smem, size = 0x4, offset = 0x4, fixed_abs, tag = 'smem constant byte address 0x4 - core index']
  #allocation1 [shape = 'u32[144,128]{1,0:T(1,128)}', space=vmem, size = 0x12000, scoped, tag = 'internal scratch']
  %s0 = inlined_call_operand.vmem [shape: bf16[32,72], index: 0, kind: input, shape index: {}]
  %s1 = inlined_call_operand.vmem [shape: bf16[72,128], index: 1, kind: input, shape index: {}]
  %s2 = inlined_call_operand.vmem [shape: f32[32,128], index: 2, kind: output, shape index: {}]
  %s3 = sld [smem:[#allocation0]]
  $region18: #{generator_forward.5} parent=0
    _
  %s5 = ssub.s32 1, %s3
  %s6 = scalar_select 0, %s5, %s3
  // Predicated region
  $region2: #{generator_forward.5} parent=0 // pred_check
    _
  $region3: #{generator_forward.5} parent=0 // pred_check_branch
    %8 = sbr.rel (0) target = $region5
  $region4: #{generator_forward.5} parent=0 // pred_region
    _
  $region5: #{generator_forward.5} parent=0 // pred_fallthru
    _
  // Predicated region
  $region6: #{generator_forward.5} parent=0 // pred_check
    _
  $region7: #{generator_forward.5} parent=0 // pred_check_branch
    %10 = sbr.rel (0) target = $region9
  $region8: #{generator_forward.5} parent=0 // pred_region
    _
  $region9: #{generator_forward.5} parent=0 // pred_fallthru
    _
  %v12 = vld [vmem:[%s0] sm:$0xf]
  %v13 = vld [vmem:[%s0 + $0x4] sm:$0xf]
  %v14 = vld [vmem:[%s0 + $0x8] sm:$0xf]
  %v15 = vld [vmem:[%s0 + $0xc] sm:$0xf]
  %v16 = vld [vmem:[%s1] sm:$0xf]
  %v17 = vld [vmem:[%s1 + $0x4] sm:$0xf]
  %v18 = vld [vmem:[%s1 + $0x8] sm:$0xf]
  %v19 = vld [vmem:[%s1 + $0xc] sm:$0xf]
  %v20 = vld [vmem:[%s1 + $0x10] sm:$0xf]
  %v21 = vld [vmem:[%s1 + $0x14] sm:$0xf]
  %v22 = vld [vmem:[%s1 + $0x18] sm:$0xf]
  %v23 = vld [vmem:[%s1 + $0x1c] sm:$0xf]
  %v24 = vld [vmem:[%s1 + $0x20] sm:$0xf]
  %v29 = vunpack.c.l.b16 %v12
  %v30 = vunpack.c.l.b16 %v13
  %v31 = vunpack.c.l.b16 %v14
  %v32 = vunpack.c.l.b16 %v15
  %v33 = vpack.c.b16 %v30, %v29
  %v34 = vpack.c.b16 %v32, %v31
  %v44 = vunpack.c.l.b16 %v16
  %v45 = vunpack.c.l.b16 %v17
  %v46 = vunpack.c.l.b16 %v18
  %v47 = vunpack.c.l.b16 %v19
  %v48 = vunpack.c.l.b16 %v20
  %v49 = vunpack.c.l.b16 %v21
  %v50 = vunpack.c.l.b16 %v22
  %v51 = vunpack.c.l.b16 %v23
  %v52 = vunpack.c.l.b16 %v24
  %v53 = vpack.c.b16 %v45, %v44
  %v54 = vpack.c.b16 %v47, %v46
  %v55 = vpack.c.b16 %v49, %v48
  %v56 = vpack.c.b16 %v51, %v50
  %v57 = vpack.c.b16 %v52, %v52
  %vm62 = vcmask 588800
  %v64 = vsel %vm62, %v33, 0
  %v67 = vsel %vm62, %v34, 0
  %vm69 = vcmask 1043456
  %v71 = vsel %vm69, %v57, 0
  %73 = vmatprep.subr.bf16.mxu0 0
  %74 = vmatpush1.bf16.msra.mxu0 %v53
  %75 = vmatprep.subr.bf16.mxu0 0
  %76 = vmatpush1.bf16.msra.mxu0 %v54
  %77 = vmatprep.subr.bf16.mxu0 0
  %78 = vmatpush1.bf16.msra.mxu0 %v55
  %79 = vmatprep.subr.bf16.mxu0 0
  %80 = vmatpush1.bf16.msra.mxu0 %v56
  %81 = vmatprep.subr.bf16.mxu0 0
  %82 = vmatpush1.bf16.msra.mxu0 %v71
  %83 = vmatprep.subr.bf16.mxu0 0
  %84 = vmatpush1.bf16.msra.mxu0 0
  %85 = vmatprep.subr.bf16.mxu0 0
  %86 = vmatpush1.bf16.msra.mxu0 0
  %87 = vmatprep.subr.bf16.mxu0 0
  %88 = vmatpush1.bf16.msra.mxu0 0
  %89 = vmatprep.subr.bf16.mxu0 0
  %90 = vmatpush1.bf16.msra.mxu0 0
  %91 = vmatprep.subr.bf16.mxu0 0
  %92 = vmatpush1.bf16.msra.mxu0 0
  %93 = vmatprep.subr.bf16.mxu0 0
  %94 = vmatpush1.bf16.msra.mxu0 0
  %95 = vmatprep.subr.bf16.mxu0 0
  %96 = vmatpush1.bf16.msra.mxu0 0
  %97 = vmatprep.subr.bf16.mxu0 0
  %98 = vmatpush1.bf16.msra.mxu0 0
  %99 = vmatprep.subr.bf16.mxu0 0
  %100 = vmatpush1.bf16.msra.mxu0 0
  %101 = vmatprep.subr.bf16.mxu0 0
  %102 = vmatpush1.bf16.msra.mxu0 0
  %103 = vmatprep.subr.bf16.mxu0 0
  %104 = vmatpush1.bf16.msra.mxu0 0
  %105 = vmatprep.mubr.bf16.mxu0 0
  %106 = vmatmul.mubr.bf16.gmra.mrb[0].mxu0 %v64
  %v107 = vpop.f32.mrb[0].mxu0
  %v108 = vadd.f32 0.0, %v107
  %v109 = vpop.f32.mrb[0].mxu0
  %v110 = vpop.f32.mrb[0].mxu0
  %v111 = vadd.f32 0.0, %v110
  %v112 = vpop.f32.mrb[0].mxu0
  %113 = vmatprep.mubr.bf16.mxu0 0
  %114 = vmatmul.mubr.bf16.gmra.mrb[0].mxu0 %v67
  %v115 = vpop.f32.mrb[0].mxu0
  %v116 = vadd.f32 0.0, %v115
  %v117 = vpop.f32.mrb[0].mxu0
  %v118 = vpop.f32.mrb[0].mxu0
  %v119 = vadd.f32 0.0, %v118
  %v120 = vpop.f32.mrb[0].mxu0
  %121 = vdwg.mxu0
  %v122 = vadd.f32 %v108, %v111
  %v123 = vrot.slane %v122, 4
  %v124 = vadd.f32 %v122, %v123
  %v125 = vrot.slane %v124, 2
  %v126 = vadd.f32 %v124, %v125
  %v127 = vrot.slane %v126, 1
  %v128 = vadd.f32 %v126, %v127
  %v129 = vmul.f32 %v108, %v108
  %v130 = vmul.f32 %v111, %v111
  %v131 = vadd.f32 %v129, %v130
  %v132 = vrot.slane %v131, 4
  %v133 = vadd.f32 %v131, %v132
  %v134 = vrot.slane %v133, 2
  %v135 = vadd.f32 %v133, %v134
  %v136 = vrot.slane %v135, 1
  %v137 = vadd.f32 %v135, %v136
  %v138 = vmul.f32 %v128, 0.11111111
  %v139 = vmul.f32 %v137, 0.11111111
  %v140 = vmul.f32 %v138, %v138
  %v141 = vsub.f32 %v139, %v140
  %v142 = vmax.f32 %v141, 0.0
  %v143 = vadd.f32 %v142, 1e-05
  %v144 = vrsqrt.pop %v143
  %v145 = vsub.f32 %v108, %v138
  %v146 = vsub.f32 %v111, %v138
  %v147 = vmul.f32 %v145, %v144
  %v148 = vmul.f32 %v146, %v144
  %v149 = vmax.f32 %v147, 0.0
  %v150 = vmax.f32 %v148, 0.0
  %v151 = vadd.f32 %v116, %v119
  %v152 = vrot.slane %v151, 4
  %v153 = vadd.f32 %v151, %v152
  %v154 = vrot.slane %v153, 2
  %v155 = vadd.f32 %v153, %v154
  %v156 = vrot.slane %v155, 1
  %v157 = vadd.f32 %v155, %v156
  %v158 = vmul.f32 %v116, %v116
  %v159 = vmul.f32 %v119, %v119
  %v160 = vadd.f32 %v158, %v159
  %v161 = vrot.slane %v160, 4
  %v162 = vadd.f32 %v160, %v161
  %v163 = vrot.slane %v162, 2
  %v164 = vadd.f32 %v162, %v163
  %v165 = vrot.slane %v164, 1
  %v166 = vadd.f32 %v164, %v165
  %v167 = vmul.f32 %v157, 0.11111111
  %v168 = vmul.f32 %v166, 0.11111111
  %v169 = vmul.f32 %v167, %v167
  %v170 = vsub.f32 %v168, %v169
  %v171 = vmax.f32 %v170, 0.0
  %v172 = vadd.f32 %v171, 1e-05
  %v173 = vrsqrt.pop %v172
  %v174 = vsub.f32 %v116, %v167
  %v175 = vsub.f32 %v119, %v167
  %v176 = vmul.f32 %v174, %v173
  %v177 = vmul.f32 %v175, %v173
  %v178 = vmax.f32 %v176, 0.0
  %v179 = vmax.f32 %v177, 0.0
  %180 = vst [vmem:[%s2] sm:$0xff] %v149
  %181 = vst [vmem:[%s2 + $0x8] sm:$0xff] %v150
  %182 = vst [vmem:[%s2 + $0x10] sm:$0xff] %v178
  %183 = vst [vmem:[%s2 + $0x18] sm:$0xff] %v179
  // Predicated region
  $region10: #{generator_forward.5} parent=0 // pred_check
    _
  $region11: #{generator_forward.5} parent=0 // pred_check_branch
    %185 = sbr.rel (0) target = $region13
  $region12: #{generator_forward.5} parent=0 // pred_region
    _
  $region13: #{generator_forward.5} parent=0 // pred_fallthru
    _
  // Predicated region
  $region14: #{generator_forward.5} parent=0 // pred_check
    _
  $region15: #{generator_forward.5} parent=0 // pred_check_branch
    %187 = sbr.rel (0) target = $region17
  $region16: #{generator_forward.5} parent=0 // pred_region
    _
  $region17: #{generator_forward.5} parent=0 // pred_fallthru
    _

// kernel: generator_forward.6
$region0: #{generator_forward.6}
  #allocation0 [shape = 'u32[]', space=smem, size = 0x4, offset = 0x4, fixed_abs, tag = 'smem constant byte address 0x4 - core index']
  #allocation1 [shape = 'u32[144,128]{1,0:T(1,128)}', space=vmem, size = 0x12000, scoped, tag = 'internal scratch']
  %s0 = inlined_call_operand.vmem [shape: bf16[32,1024], index: 0, kind: input, shape index: {}]
  %s1 = inlined_call_operand.vmem [shape: bf16[1024,128], index: 1, kind: input, shape index: {}]
  %s2 = inlined_call_operand.vmem [shape: f32[32,128], index: 2, kind: output, shape index: {}]
  %s3 = sld [smem:[#allocation0]]
  $region18: #{generator_forward.6} parent=0
    _
  %s5 = ssub.s32 1, %s3
  %s6 = scalar_select 0, %s5, %s3
  // Predicated region
  $region2: #{generator_forward.6} parent=0 // pred_check
    _
  $region3: #{generator_forward.6} parent=0 // pred_check_branch
    %8 = sbr.rel (0) target = $region5
  $region4: #{generator_forward.6} parent=0 // pred_region
    _
  $region5: #{generator_forward.6} parent=0 // pred_fallthru
    _
  // Predicated region
  $region6: #{generator_forward.6} parent=0 // pred_check
    _
  $region7: #{generator_forward.6} parent=0 // pred_check_branch
    %10 = sbr.rel (0) target = $region9
  $region8: #{generator_forward.6} parent=0 // pred_region
    _
  $region9: #{generator_forward.6} parent=0 // pred_fallthru
    _
  %v12 = vld [vmem:[%s0] sm:$0xff]
  %v13 = vld [vmem:[%s0 + $0x8] sm:$0xff]
  %v14 = vld [vmem:[%s0 + $0x10] sm:$0xff]
  %v15 = vld [vmem:[%s0 + $0x18] sm:$0xff]
  %v16 = vld [vmem:[%s0 + $0x20] sm:$0xff]
  %v17 = vld [vmem:[%s0 + $0x28] sm:$0xff]
  %v18 = vld [vmem:[%s0 + $0x30] sm:$0xff]
  %v19 = vld [vmem:[%s0 + $0x38] sm:$0xff]
  %v20 = vld [vmem:[%s0 + $0x40] sm:$0xff]
  %v21 = vld [vmem:[%s0 + $0x48] sm:$0xff]
  %v22 = vld [vmem:[%s0 + $0x50] sm:$0xff]
  %v23 = vld [vmem:[%s0 + $0x58] sm:$0xff]
  %v24 = vld [vmem:[%s0 + $0x60] sm:$0xff]
  %v25 = vld [vmem:[%s0 + $0x68] sm:$0xff]
  %v26 = vld [vmem:[%s0 + $0x70] sm:$0xff]
  %v27 = vld [vmem:[%s0 + $0x78] sm:$0xff]
  %v28 = vld [vmem:[%s1] sm:$0xf]
  %v29 = vld [vmem:[%s1 + $0x4] sm:$0xf]
  %v30 = vld [vmem:[%s1 + $0x8] sm:$0xf]
  %v31 = vld [vmem:[%s1 + $0xc] sm:$0xf]
  %v32 = vld [vmem:[%s1 + $0x10] sm:$0xf]
  %v33 = vld [vmem:[%s1 + $0x14] sm:$0xf]
  %v34 = vld [vmem:[%s1 + $0x18] sm:$0xf]
  %v35 = vld [vmem:[%s1 + $0x1c] sm:$0xf]
  %v36 = vld [vmem:[%s1 + $0x20] sm:$0xf]
  %v37 = vld [vmem:[%s1 + $0x24] sm:$0xf]
  %v38 = vld [vmem:[%s1 + $0x28] sm:$0xf]
  %v39 = vld [vmem:[%s1 + $0x2c] sm:$0xf]
  %v40 = vld [vmem:[%s1 + $0x30] sm:$0xf]
  %v41 = vld [vmem:[%s1 + $0x34] sm:$0xf]
  %v42 = vld [vmem:[%s1 + $0x38] sm:$0xf]
  %v43 = vld [vmem:[%s1 + $0x3c] sm:$0xf]
  %v44 = vld [vmem:[%s1 + $0x40] sm:$0xf]
  %v45 = vld [vmem:[%s1 + $0x44] sm:$0xf]
  %v46 = vld [vmem:[%s1 + $0x48] sm:$0xf]
  %v47 = vld [vmem:[%s1 + $0x4c] sm:$0xf]
  %v48 = vld [vmem:[%s1 + $0x50] sm:$0xf]
  %v49 = vld [vmem:[%s1 + $0x54] sm:$0xf]
  %v50 = vld [vmem:[%s1 + $0x58] sm:$0xf]
  %v51 = vld [vmem:[%s1 + $0x5c] sm:$0xf]
  %v52 = vld [vmem:[%s1 + $0x60] sm:$0xf]
  %v53 = vld [vmem:[%s1 + $0x64] sm:$0xf]
  %v54 = vld [vmem:[%s1 + $0x68] sm:$0xf]
  %v55 = vld [vmem:[%s1 + $0x6c] sm:$0xf]
  %v56 = vld [vmem:[%s1 + $0x70] sm:$0xf]
  %v57 = vld [vmem:[%s1 + $0x74] sm:$0xf]
  %v58 = vld [vmem:[%s1 + $0x78] sm:$0xf]
  %v59 = vld [vmem:[%s1 + $0x7c] sm:$0xf]
  %v60 = vld [vmem:[%s1 + $0x80] sm:$0xf]
  %v61 = vld [vmem:[%s1 + $0x84] sm:$0xf]
  %v62 = vld [vmem:[%s1 + $0x88] sm:$0xf]
  %v63 = vld [vmem:[%s1 + $0x8c] sm:$0xf]
  %v64 = vld [vmem:[%s1 + $0x90] sm:$0xf]
  %v65 = vld [vmem:[%s1 + $0x94] sm:$0xf]
  %v66 = vld [vmem:[%s1 + $0x98] sm:$0xf]
  %v67 = vld [vmem:[%s1 + $0x9c] sm:$0xf]
  %v68 = vld [vmem:[%s1 + $0xa0] sm:$0xf]
  %v69 = vld [vmem:[%s1 + $0xa4] sm:$0xf]
  %v70 = vld [vmem:[%s1 + $0xa8] sm:$0xf]
  %v71 = vld [vmem:[%s1 + $0xac] sm:$0xf]
  %v72 = vld [vmem:[%s1 + $0xb0] sm:$0xf]
  %v73 = vld [vmem:[%s1 + $0xb4] sm:$0xf]
  %v74 = vld [vmem:[%s1 + $0xb8] sm:$0xf]
  %v75 = vld [vmem:[%s1 + $0xbc] sm:$0xf]
  %v76 = vld [vmem:[%s1 + $0xc0] sm:$0xf]
  %v77 = vld [vmem:[%s1 + $0xc4] sm:$0xf]
  %v78 = vld [vmem:[%s1 + $0xc8] sm:$0xf]
  %v79 = vld [vmem:[%s1 + $0xcc] sm:$0xf]
  %v80 = vld [vmem:[%s1 + $0xd0] sm:$0xf]
  %v81 = vld [vmem:[%s1 + $0xd4] sm:$0xf]
  %v82 = vld [vmem:[%s1 + $0xd8] sm:$0xf]
  %v83 = vld [vmem:[%s1 + $0xdc] sm:$0xf]
  %v84 = vld [vmem:[%s1 + $0xe0] sm:$0xf]
  %v85 = vld [vmem:[%s1 + $0xe4] sm:$0xf]
  %v86 = vld [vmem:[%s1 + $0xe8] sm:$0xf]
  %v87 = vld [vmem:[%s1 + $0xec] sm:$0xf]
  %v88 = vld [vmem:[%s1 + $0xf0] sm:$0xf]
  %v89 = vld [vmem:[%s1 + $0xf4] sm:$0xf]
  %v90 = vld [vmem:[%s1 + $0xf8] sm:$0xf]
  %v91 = vld [vmem:[%s1 + $0xfc] sm:$0xf]
  %v92 = vld [vmem:[%s1 + $0x100] sm:$0xf]
  %v93 = vld [vmem:[%s1 + $0x104] sm:$0xf]
  %v94 = vld [vmem:[%s1 + $0x108] sm:$0xf]
  %v95 = vld [vmem:[%s1 + $0x10c] sm:$0xf]
  %v96 = vld [vmem:[%s1 + $0x110] sm:$0xf]
  %v97 = vld [vmem:[%s1 + $0x114] sm:$0xf]
  %v98 = vld [vmem:[%s1 + $0x118] sm:$0xf]
  %v99 = vld [vmem:[%s1 + $0x11c] sm:$0xf]
  %v100 = vld [vmem:[%s1 + $0x120] sm:$0xf]
  %v101 = vld [vmem:[%s1 + $0x124] sm:$0xf]
  %v102 = vld [vmem:[%s1 + $0x128] sm:$0xf]
  %v103 = vld [vmem:[%s1 + $0x12c] sm:$0xf]
  %v104 = vld [vmem:[%s1 + $0x130] sm:$0xf]
  %v105 = vld [vmem:[%s1 + $0x134] sm:$0xf]
  %v106 = vld [vmem:[%s1 + $0x138] sm:$0xf]
  %v107 = vld [vmem:[%s1 + $0x13c] sm:$0xf]
  %v108 = vld [vmem:[%s1 + $0x140] sm:$0xf]
  %v109 = vld [vmem:[%s1 + $0x144] sm:$0xf]
  %v110 = vld [vmem:[%s1 + $0x148] sm:$0xf]
  %v111 = vld [vmem:[%s1 + $0x14c] sm:$0xf]
  %v112 = vld [vmem:[%s1 + $0x150] sm:$0xf]
  %v113 = vld [vmem:[%s1 + $0x154] sm:$0xf]
  %v114 = vld [vmem:[%s1 + $0x158] sm:$0xf]
  %v115 = vld [vmem:[%s1 + $0x15c] sm:$0xf]
  %v116 = vld [vmem:[%s1 + $0x160] sm:$0xf]
  %v117 = vld [vmem:[%s1 + $0x164] sm:$0xf]
  %v118 = vld [vmem:[%s1 + $0x168] sm:$0xf]
  %v119 = vld [vmem:[%s1 + $0x16c] sm:$0xf]
  %v120 = vld [vmem:[%s1 + $0x170] sm:$0xf]
  %v121 = vld [vmem:[%s1 + $0x174] sm:$0xf]
  %v122 = vld [vmem:[%s1 + $0x178] sm:$0xf]
  %v123 = vld [vmem:[%s1 + $0x17c] sm:$0xf]
  %v124 = vld [vmem:[%s1 + $0x180] sm:$0xf]
  %v125 = vld [vmem:[%s1 + $0x184] sm:$0xf]
  %v126 = vld [vmem:[%s1 + $0x188] sm:$0xf]
  %v127 = vld [vmem:[%s1 + $0x18c] sm:$0xf]
  %v128 = vld [vmem:[%s1 + $0x190] sm:$0xf]
  %v129 = vld [vmem:[%s1 + $0x194] sm:$0xf]
  %v130 = vld [vmem:[%s1 + $0x198] sm:$0xf]
  %v131 = vld [vmem:[%s1 + $0x19c] sm:$0xf]
  %v132 = vld [vmem:[%s1 + $0x1a0] sm:$0xf]
  %v133 = vld [vmem:[%s1 + $0x1a4] sm:$0xf]
  %v134 = vld [vmem:[%s1 + $0x1a8] sm:$0xf]
  %v135 = vld [vmem:[%s1 + $0x1ac] sm:$0xf]
  %v136 = vld [vmem:[%s1 + $0x1b0] sm:$0xf]
  %v137 = vld [vmem:[%s1 + $0x1b4] sm:$0xf]
  %v138 = vld [vmem:[%s1 + $0x1b8] sm:$0xf]
  %v139 = vld [vmem:[%s1 + $0x1bc] sm:$0xf]
  %v140 = vld [vmem:[%s1 + $0x1c0] sm:$0xf]
  %v141 = vld [vmem:[%s1 + $0x1c4] sm:$0xf]
  %v142 = vld [vmem:[%s1 + $0x1c8] sm:$0xf]
  %v143 = vld [vmem:[%s1 + $0x1cc] sm:$0xf]
  %v144 = vld [vmem:[%s1 + $0x1d0] sm:$0xf]
  %v145 = vld [vmem:[%s1 + $0x1d4] sm:$0xf]
  %v146 = vld [vmem:[%s1 + $0x1d8] sm:$0xf]
  %v147 = vld [vmem:[%s1 + $0x1dc] sm:$0xf]
  %v148 = vld [vmem:[%s1 + $0x1e0] sm:$0xf]
  %v149 = vld [vmem:[%s1 + $0x1e4] sm:$0xf]
  %v150 = vld [vmem:[%s1 + $0x1e8] sm:$0xf]
  %v151 = vld [vmem:[%s1 + $0x1ec] sm:$0xf]
  %v152 = vld [vmem:[%s1 + $0x1f0] sm:$0xf]
  %v153 = vld [vmem:[%s1 + $0x1f4] sm:$0xf]
  %v154 = vld [vmem:[%s1 + $0x1f8] sm:$0xf]
  %v155 = vld [vmem:[%s1 + $0x1fc] sm:$0xf]
  %v172 = vunpack.c.l.b16 %v12
  %v173 = vunpack.c.h.b16 %v12
  %v174 = vunpack.c.l.b16 %v13
  %v175 = vunpack.c.h.b16 %v13
  %v176 = vunpack.c.l.b16 %v14
  %v177 = vunpack.c.h.b16 %v14
  %v178 = vunpack.c.l.b16 %v15
  %v179 = vunpack.c.h.b16 %v15
  %v180 = vunpack.c.l.b16 %v16
  %v181 = vunpack.c.h.b16 %v16
  %v182 = vunpack.c.l.b16 %v17
  %v183 = vunpack.c.h.b16 %v17
  %v184 = vunpack.c.l.b16 %v18
  %v185 = vunpack.c.h.b16 %v18
  %v186 = vunpack.c.l.b16 %v19
  %v187 = vunpack.c.h.b16 %v19
  %v188 = vunpack.c.l.b16 %v20
  %v189 = vunpack.c.h.b16 %v20
  %v190 = vunpack.c.l.b16 %v21
  %v191 = vunpack.c.h.b16 %v21
  %v192 = vunpack.c.l.b16 %v22
  %v193 = vunpack.c.h.b16 %v22
  %v194 = vunpack.c.l.b16 %v23
  %v195 = vunpack.c.h.b16 %v23
  %v196 = vunpack.c.l.b16 %v24
  %v197 = vunpack.c.h.b16 %v24
  %v198 = vunpack.c.l.b16 %v25
  %v199 = vunpack.c.h.b16 %v25
  %v200 = vunpack.c.l.b16 %v26
  %v201 = vunpack.c.h.b16 %v26
  %v202 = vunpack.c.l.b16 %v27
  %v203 = vunpack.c.h.b16 %v27
  %v204 = vpack.c.b16 %v180, %v172
  %v205 = vpack.c.b16 %v181, %v173
  %v206 = vpack.c.b16 %v182, %v174
  %v207 = vpack.c.b16 %v183, %v175
  %v208 = vpack.c.b16 %v184, %v176
  %v209 = vpack.c.b16 %v185, %v177
  %v210 = vpack.c.b16 %v186, %v178
  %v211 = vpack.c.b16 %v187, %v179
  %v212 = vpack.c.b16 %v196, %v188
  %v213 = vpack.c.b16 %v197, %v189
  %v214 = vpack.c.b16 %v198, %v190
  %v215 = vpack.c.b16 %v199, %v191
  %v216 = vpack.c.b16 %v200, %v192
  %v217 = vpack.c.b16 %v201, %v193
  %v218 = vpack.c.b16 %v202, %v194
  %v219 = vpack.c.b16 %v203, %v195
  %v364 = vunpack.c.l.b16 %v28
  %v365 = vunpack.c.l.b16 %v29
  %v366 = vunpack.c.l.b16 %v30
  %v367 = vunpack.c.l.b16 %v31
  %v368 = vunpack.c.l.b16 %v32
  %v369 = vunpack.c.l.b16 %v33
  %v370 = vunpack.c.l.b16 %v34
  %v371 = vunpack.c.l.b16 %v35
  %v372 = vunpack.c.l.b16 %v36
  %v373 = vunpack.c.l.b16 %v37
  %v374 = vunpack.c.l.b16 %v38
  %v375 = vunpack.c.l.b16 %v39
  %v376 = vunpack.c.l.b16 %v40
  %v377 = vunpack.c.l.b16 %v41
  %v378 = vunpack.c.l.b16 %v42
  %v379 = vunpack.c.l.b16 %v43
  %v380 = vunpack.c.l.b16 %v44
  %v381 = vunpack.c.l.b16 %v45
  %v382 = vunpack.c.l.b16 %v46
  %v383 = vunpack.c.l.b16 %v47
  %v384 = vunpack.c.l.b16 %v48
  %v385 = vunpack.c.l.b16 %v49
  %v386 = vunpack.c.l.b16 %v50
  %v387 = vunpack.c.l.b16 %v51
  %v388 = vunpack.c.l.b16 %v52
  %v389 = vunpack.c.l.b16 %v53
  %v390 = vunpack.c.l.b16 %v54
  %v391 = vunpack.c.l.b16 %v55
  %v392 = vunpack.c.l.b16 %v56
  %v393 = vunpack.c.l.b16 %v57
  %v394 = vunpack.c.l.b16 %v58
  %v395 = vunpack.c.l.b16 %v59
  %v396 = vunpack.c.l.b16 %v60
  %v397 = vunpack.c.l.b16 %v61
  %v398 = vunpack.c.l.b16 %v62
  %v399 = vunpack.c.l.b16 %v63
  %v400 = vunpack.c.l.b16 %v64
  %v401 = vunpack.c.l.b16 %v65
  %v402 = vunpack.c.l.b16 %v66
  %v403 = vunpack.c.l.b16 %v67
  %v404 = vunpack.c.l.b16 %v68
  %v405 = vunpack.c.l.b16 %v69
  %v406 = vunpack.c.l.b16 %v70
  %v407 = vunpack.c.l.b16 %v71
  %v408 = vunpack.c.l.b16 %v72
  %v409 = vunpack.c.l.b16 %v73
  %v410 = vunpack.c.l.b16 %v74
  %v411 = vunpack.c.l.b16 %v75
  %v412 = vunpack.c.l.b16 %v76
  %v413 = vunpack.c.l.b16 %v77
  %v414 = vunpack.c.l.b16 %v78
  %v415 = vunpack.c.l.b16 %v79
  %v416 = vunpack.c.l.b16 %v80
  %v417 = vunpack.c.l.b16 %v81
  %v418 = vunpack.c.l.b16 %v82
  %v419 = vunpack.c.l.b16 %v83
  %v420 = vunpack.c.l.b16 %v84
  %v421 = vunpack.c.l.b16 %v85
  %v422 = vunpack.c.l.b16 %v86
  %v423 = vunpack.c.l.b16 %v87
  %v424 = vunpack.c.l.b16 %v88
  %v425 = vunpack.c.l.b16 %v89
  %v426 = vunpack.c.l.b16 %v90
  %v427 = vunpack.c.l.b16 %v91
  %v428 = vunpack.c.l.b16 %v92
  %v429 = vunpack.c.l.b16 %v93
  %v430 = vunpack.c.l.b16 %v94
  %v431 = vunpack.c.l.b16 %v95
  %v432 = vunpack.c.l.b16 %v96
  %v433 = vunpack.c.l.b16 %v97
  %v434 = vunpack.c.l.b16 %v98
  %v435 = vunpack.c.l.b16 %v99
  %v436 = vunpack.c.l.b16 %v100
  %v437 = vunpack.c.l.b16 %v101
  %v438 = vunpack.c.l.b16 %v102
  %v439 = vunpack.c.l.b16 %v103
  %v440 = vunpack.c.l.b16 %v104
  %v441 = vunpack.c.l.b16 %v105
  %v442 = vunpack.c.l.b16 %v106
  %v443 = vunpack.c.l.b16 %v107
  %v444 = vunpack.c.l.b16 %v108
  %v445 = vunpack.c.l.b16 %v109
  %v446 = vunpack.c.l.b16 %v110
  %v447 = vunpack.c.l.b16 %v111
  %v448 = vunpack.c.l.b16 %v112
  %v449 = vunpack.c.l.b16 %v113
  %v450 = vunpack.c.l.b16 %v114
  %v451 = vunpack.c.l.b16 %v115
  %v452 = vunpack.c.l.b16 %v116
  %v453 = vunpack.c.l.b16 %v117
  %v454 = vunpack.c.l.b16 %v118
  %v455 = vunpack.c.l.b16 %v119
  %v456 = vunpack.c.l.b16 %v120
  %v457 = vunpack.c.l.b16 %v121
  %v458 = vunpack.c.l.b16 %v122
  %v459 = vunpack.c.l.b16 %v123
  %v460 = vunpack.c.l.b16 %v124
  %v461 = vunpack.c.l.b16 %v125
  %v462 = vunpack.c.l.b16 %v126
  %v463 = vunpack.c.l.b16 %v127
  %v464 = vunpack.c.l.b16 %v128
  %v465 = vunpack.c.l.b16 %v129
  %v466 = vunpack.c.l.b16 %v130
  %v467 = vunpack.c.l.b16 %v131
  %v468 = vunpack.c.l.b16 %v132
  %v469 = vunpack.c.l.b16 %v133
  %v470 = vunpack.c.l.b16 %v134
  %v471 = vunpack.c.l.b16 %v135
  %v472 = vunpack.c.l.b16 %v136
  %v473 = vunpack.c.l.b16 %v137
  %v474 = vunpack.c.l.b16 %v138
  %v475 = vunpack.c.l.b16 %v139
  %v476 = vunpack.c.l.b16 %v140
  %v477 = vunpack.c.l.b16 %v141
  %v478 = vunpack.c.l.b16 %v142
  %v479 = vunpack.c.l.b16 %v143
  %v480 = vunpack.c.l.b16 %v144
  %v481 = vunpack.c.l.b16 %v145
  %v482 = vunpack.c.l.b16 %v146
  %v483 = vunpack.c.l.b16 %v147
  %v484 = vunpack.c.l.b16 %v148
  %v485 = vunpack.c.l.b16 %v149
  %v486 = vunpack.c.l.b16 %v150
  %v487 = vunpack.c.l.b16 %v151
  %v488 = vunpack.c.l.b16 %v152
  %v489 = vunpack.c.l.b16 %v153
  %v490 = vunpack.c.l.b16 %v154
  %v491 = vunpack.c.l.b16 %v155
  %v492 = vpack.c.b16 %v365, %v364
  %v493 = vpack.c.b16 %v367, %v366
  %v494 = vpack.c.b16 %v369, %v368
  %v495 = vpack.c.b16 %v371, %v370
  %v496 = vpack.c.b16 %v373, %v372
  %v497 = vpack.c.b16 %v375, %v374
  %v498 = vpack.c.b16 %v377, %v376
  %v499 = vpack.c.b16 %v379, %v378
  %v500 = vpack.c.b16 %v381, %v380
  %v501 = vpack.c.b16 %v383, %v382
  %v502 = vpack.c.b16 %v385, %v384
  %v503 = vpack.c.b16 %v387, %v386
  %v504 = vpack.c.b16 %v389, %v388
  %v505 = vpack.c.b16 %v391, %v390
  %v506 = vpack.c.b16 %v393, %v392
  %v507 = vpack.c.b16 %v395, %v394
  %v508 = vpack.c.b16 %v397, %v396
  %v509 = vpack.c.b16 %v399, %v398
  %v510 = vpack.c.b16 %v401, %v400
  %v511 = vpack.c.b16 %v403, %v402
  %v512 = vpack.c.b16 %v405, %v404
  %v513 = vpack.c.b16 %v407, %v406
  %v514 = vpack.c.b16 %v409, %v408
  %v515 = vpack.c.b16 %v411, %v410
  %v516 = vpack.c.b16 %v413, %v412
  %v517 = vpack.c.b16 %v415, %v414
  %v518 = vpack.c.b16 %v417, %v416
  %v519 = vpack.c.b16 %v419, %v418
  %v520 = vpack.c.b16 %v421, %v420
  %v521 = vpack.c.b16 %v423, %v422
  %v522 = vpack.c.b16 %v425, %v424
  %v523 = vpack.c.b16 %v427, %v426
  %v524 = vpack.c.b16 %v429, %v428
  %v525 = vpack.c.b16 %v431, %v430
  %v526 = vpack.c.b16 %v433, %v432
  %v527 = vpack.c.b16 %v435, %v434
  %v528 = vpack.c.b16 %v437, %v436
  %v529 = vpack.c.b16 %v439, %v438
  %v530 = vpack.c.b16 %v441, %v440
  %v531 = vpack.c.b16 %v443, %v442
  %v532 = vpack.c.b16 %v445, %v444
  %v533 = vpack.c.b16 %v447, %v446
  %v534 = vpack.c.b16 %v449, %v448
  %v535 = vpack.c.b16 %v451, %v450
  %v536 = vpack.c.b16 %v453, %v452
  %v537 = vpack.c.b16 %v455, %v454
  %v538 = vpack.c.b16 %v457, %v456
  %v539 = vpack.c.b16 %v459, %v458
  %v540 = vpack.c.b16 %v461, %v460
  %v541 = vpack.c.b16 %v463, %v462
  %v542 = vpack.c.b16 %v465, %v464
  %v543 = vpack.c.b16 %v467, %v466
  %v544 = vpack.c.b16 %v469, %v468
  %v545 = vpack.c.b16 %v471, %v470
  %v546 = vpack.c.b16 %v473, %v472
  %v547 = vpack.c.b16 %v475, %v474
  %v548 = vpack.c.b16 %v477, %v476
  %v549 = vpack.c.b16 %v479, %v478
  %v550 = vpack.c.b16 %v481, %v480
  %v551 = vpack.c.b16 %v483, %v482
  %v552 = vpack.c.b16 %v485, %v484
  %v553 = vpack.c.b16 %v487, %v486
  %v554 = vpack.c.b16 %v489, %v488
  %v555 = vpack.c.b16 %v491, %v490
  %620 = vmatprep.subr.bf16.mxu0 0
  %621 = vmatpush1.bf16.msra.mxu0 %v492
  %622 = vmatprep.subr.bf16.mxu0 0
  %623 = vmatpush1.bf16.msra.mxu0 %v493
  %624 = vmatprep.subr.bf16.mxu0 0
  %625 = vmatpush1.bf16.msra.mxu0 %v494
  %626 = vmatprep.subr.bf16.mxu0 0
  %627 = vmatpush1.bf16.msra.mxu0 %v495
  %628 = vmatprep.subr.bf16.mxu0 0
  %629 = vmatpush1.bf16.msra.mxu0 %v496
  %630 = vmatprep.subr.bf16.mxu0 0
  %631 = vmatpush1.bf16.msra.mxu0 %v497
  %632 = vmatprep.subr.bf16.mxu0 0
  %633 = vmatpush1.bf16.msra.mxu0 %v498
  %634 = vmatprep.subr.bf16.mxu0 0
  %635 = vmatpush1.bf16.msra.mxu0 %v499
  %636 = vmatprep.subr.bf16.mxu0 0
  %637 = vmatpush1.bf16.msra.mxu0 %v500
  %638 = vmatprep.subr.bf16.mxu0 0
  %639 = vmatpush1.bf16.msra.mxu0 %v501
  %640 = vmatprep.subr.bf16.mxu0 0
  %641 = vmatpush1.bf16.msra.mxu0 %v502
  %642 = vmatprep.subr.bf16.mxu0 0
  %643 = vmatpush1.bf16.msra.mxu0 %v503
  %644 = vmatprep.subr.bf16.mxu0 0
  %645 = vmatpush1.bf16.msra.mxu0 %v504
  %646 = vmatprep.subr.bf16.mxu0 0
  %647 = vmatpush1.bf16.msra.mxu0 %v505
  %648 = vmatprep.subr.bf16.mxu0 0
  %649 = vmatpush1.bf16.msra.mxu0 %v506
  %650 = vmatprep.subr.bf16.mxu0 0
  %651 = vmatpush1.bf16.msra.mxu0 %v507
  %652 = vmatprep.mubr.bf16.mxu0 %v205
  %653 = vmatmul.mubr.bf16.gmra.mrb[0].mxu0 %v204
  %v654 = vpop.f32.mrb[0].mxu0
  %v655 = vadd.f32 0.0, %v654
  %v656 = vpop.f32.mrb[0].mxu0
  %v657 = vpop.f32.mrb[0].mxu0
  %v658 = vadd.f32 0.0, %v657
  %v659 = vpop.f32.mrb[0].mxu0
  %660 = vmatprep.mubr.bf16.mxu0 %v213
  %661 = vmatmul.mubr.bf16.gmra.mrb[0].mxu0 %v212
  %v662 = vpop.f32.mrb[0].mxu0
  %v663 = vadd.f32 0.0, %v662
  %v664 = vpop.f32.mrb[0].mxu0
  %v665 = vpop.f32.mrb[0].mxu0
  %v666 = vadd.f32 0.0, %v665
  %v667 = vpop.f32.mrb[0].mxu0
  %668 = vdwg.mxu0
  %669 = vmatprep.subr.bf16.mxu0 0
  %670 = vmatpush1.bf16.msra.mxu0 %v508
  %671 = vmatprep.subr.bf16.mxu0 0
  %672 = vmatpush1.bf16.msra.mxu0 %v509
  %673 = vmatprep.subr.bf16.mxu0 0
  %674 = vmatpush1.bf16.msra.mxu0 %v510
  %675 = vmatprep.subr.bf16.mxu0 0
  %676 = vmatpush1.bf16.msra.mxu0 %v511
  %677 = vmatprep.subr.bf16.mxu0 0
  %678 = vmatpush1.bf16.msra.mxu0 %v512
  %679 = vmatprep.subr.bf16.mxu0 0
  %680 = vmatpush1.bf16.msra.mxu0 %v513
  %681 = vmatprep.subr.bf16.mxu0 0
  %682 = vmatpush1.bf16.msra.mxu0 %v514
  %683 = vmatprep.subr.bf16.mxu0 0
  %684 = vmatpush1.bf16.msra.mxu0 %v515
  %685 = vmatprep.subr.bf16.mxu0 0
  %686 = vmatpush1.bf16.msra.mxu0 %v516
  %687 = vmatprep.subr.bf16.mxu0 0
  %688 = vmatpush1.bf16.msra.mxu0 %v517
  %689 = vmatprep.subr.bf16.mxu0 0
  %690 = vmatpush1.bf16.msra.mxu0 %v518
  %691 = vmatprep.subr.bf16.mxu0 0
  %692 = vmatpush1.bf16.msra.mxu0 %v519
  %693 = vmatprep.subr.bf16.mxu0 0
  %694 = vmatpush1.bf16.msra.mxu0 %v520
  %695 = vmatprep.subr.bf16.mxu0 0
  %696 = vmatpush1.bf16.msra.mxu0 %v521
  %697 = vmatprep.subr.bf16.mxu0 0
  %698 = vmatpush1.bf16.msra.mxu0 %v522
  %699 = vmatprep.subr.bf16.mxu0 0
  %700 = vmatpush1.bf16.msra.mxu0 %v523
  %701 = vmatprep.mubr.bf16.mxu0 %v207
  %702 = vmatmul.mubr.bf16.gmra.mrb[0].mxu0 %v206
  %v703 = vpop.f32.mrb[0].mxu0
  %v704 = vadd.f32 %v655, %v703
  %v705 = vpop.f32.mrb[0].mxu0
  %v706 = vpop.f32.mrb[0].mxu0
  %v707 = vadd.f32 %v658, %v706
  %v708 = vpop.f32.mrb[0].mxu0
  %709 = vmatprep.mubr.bf16.mxu0 %v215
  %710 = vmatmul.mubr.bf16.gmra.mrb[0].mxu0 %v214
  %v711 = vpop.f32.mrb[0].mxu0
  %v712 = vadd.f32 %v663, %v711
  %v713 = vpop.f32.mrb[0].mxu0
  %v714 = vpop.f32.mrb[0].mxu0
  %v715 = vadd.f32 %v666, %v714
  %v716 = vpop.f32.mrb[0].mxu0
  %717 = vdwg.mxu0
  %718 = vmatprep.subr.bf16.mxu0 0
  %719 = vmatpush1.bf16.msra.mxu0 %v524
  %720 = vmatprep.subr.bf16.mxu0 0
  %721 = vmatpush1.bf16.msra.mxu0 %v525
  %722 = vmatprep.subr.bf16.mxu0 0
  %723 = vmatpush1.bf16.msra.mxu0 %v526
  %724 = vmatprep.subr.bf16.mxu0 0
  %725 = vmatpush1.bf16.msra.mxu0 %v527
  %726 = vmatprep.subr.bf16.mxu0 0
  %727 = vmatpush1.bf16.msra.mxu0 %v528
  %728 = vmatprep.subr.bf16.mxu0 0
  %729 = vmatpush1.bf16.msra.mxu0 %v529
  %730 = vmatprep.subr.bf16.mxu0 0
  %731 = vmatpush1.bf16.msra.mxu0 %v530
  %732 = vmatprep.subr.bf16.mxu0 0
  %733 = vmatpush1.bf16.msra.mxu0 %v531
  %734 = vmatprep.subr.bf16.mxu0 0
  %735 = vmatpush1.bf16.msra.mxu0 %v532
  %736 = vmatprep.subr.bf16.mxu0 0
  %737 = vmatpush1.bf16.msra.mxu0 %v533
  %738 = vmatprep.subr.bf16.mxu0 0
  %739 = vmatpush1.bf16.msra.mxu0 %v534
  %740 = vmatprep.subr.bf16.mxu0 0
  %741 = vmatpush1.bf16.msra.mxu0 %v535
  %742 = vmatprep.subr.bf16.mxu0 0
  %743 = vmatpush1.bf16.msra.mxu0 %v536
  %744 = vmatprep.subr.bf16.mxu0 0
  %745 = vmatpush1.bf16.msra.mxu0 %v537
  %746 = vmatprep.subr.bf16.mxu0 0
  %747 = vmatpush1.bf16.msra.mxu0 %v538
  %748 = vmatprep.subr.bf16.mxu0 0
  %749 = vmatpush1.bf16.msra.mxu0 %v539
  %750 = vmatprep.mubr.bf16.mxu0 %v209
  %751 = vmatmul.mubr.bf16.gmra.mrb[0].mxu0 %v208
  %v752 = vpop.f32.mrb[0].mxu0
  %v753 = vadd.f32 %v704, %v752
  %v754 = vpop.f32.mrb[0].mxu0
  %v755 = vpop.f32.mrb[0].mxu0
  %v756 = vadd.f32 %v707, %v755
  %v757 = vpop.f32.mrb[0].mxu0
  %758 = vmatprep.mubr.bf16.mxu0 %v217
  %759 = vmatmul.mubr.bf16.gmra.mrb[0].mxu0 %v216
  %v760 = vpop.f32.mrb[0].mxu0
  %v761 = vadd.f32 %v712, %v760
  %v762 = vpop.f32.mrb[0].mxu0
  %v763 = vpop.f32.mrb[0].mxu0
  %v764 = vadd.f32 %v715, %v763
  %v765 = vpop.f32.mrb[0].mxu0
  %766 = vdwg.mxu0
  %767 = vmatprep.subr.bf16.mxu0 0
  %768 = vmatpush1.bf16.msra.mxu0 %v540
  %769 = vmatprep.subr.bf16.mxu0 0
  %770 = vmatpush1.bf16.msra.mxu0 %v541
  %771 = vmatprep.subr.bf16.mxu0 0
  %772 = vmatpush1.bf16.msra.mxu0 %v542
  %773 = vmatprep.subr.bf16.mxu0 0
  %774 = vmatpush1.bf16.msra.mxu0 %v543
  %775 = vmatprep.subr.bf16.mxu0 0
  %776 = vmatpush1.bf16.msra.mxu0 %v544
  %777 = vmatprep.subr.bf16.mxu0 0
  %778 = vmatpush1.bf16.msra.mxu0 %v545
  %779 = vmatprep.subr.bf16.mxu0 0
  %780 = vmatpush1.bf16.msra.mxu0 %v546
  %781 = vmatprep.subr.bf16.mxu0 0
  %782 = vmatpush1.bf16.msra.mxu0 %v547
  %783 = vmatprep.subr.bf16.mxu0 0
  %784 = vmatpush1.bf16.msra.mxu0 %v548
  %785 = vmatprep.subr.bf16.mxu0 0
  %786 = vmatpush1.bf16.msra.mxu0 %v549
  %787 = vmatprep.subr.bf16.mxu0 0
  %788 = vmatpush1.bf16.msra.mxu0 %v550
  %789 = vmatprep.subr.bf16.mxu0 0
  %790 = vmatpush1.bf16.msra.mxu0 %v551
  %791 = vmatprep.subr.bf16.mxu0 0
  %792 = vmatpush1.bf16.msra.mxu0 %v552
  %793 = vmatprep.subr.bf16.mxu0 0
  %794 = vmatpush1.bf16.msra.mxu0 %v553
  %795 = vmatprep.subr.bf16.mxu0 0
  %796 = vmatpush1.bf16.msra.mxu0 %v554
  %797 = vmatprep.subr.bf16.mxu0 0
  %798 = vmatpush1.bf16.msra.mxu0 %v555
  %799 = vmatprep.mubr.bf16.mxu0 %v211
  %800 = vmatmul.mubr.bf16.gmra.mrb[0].mxu0 %v210
  %v801 = vpop.f32.mrb[0].mxu0
  %v802 = vadd.f32 %v753, %v801
  %v803 = vpop.f32.mrb[0].mxu0
  %v804 = vpop.f32.mrb[0].mxu0
  %v805 = vadd.f32 %v756, %v804
  %v806 = vpop.f32.mrb[0].mxu0
  %807 = vmatprep.mubr.bf16.mxu0 %v219
  %808 = vmatmul.mubr.bf16.gmra.mrb[0].mxu0 %v218
  %v809 = vpop.f32.mrb[0].mxu0
  %v810 = vadd.f32 %v761, %v809
  %v811 = vpop.f32.mrb[0].mxu0
  %v812 = vpop.f32.mrb[0].mxu0
  %v813 = vadd.f32 %v764, %v812
  %v814 = vpop.f32.mrb[0].mxu0
  %815 = vdwg.mxu0
  %v816 = vadd.f32 %v802, %v805
  %v817 = vrot.slane %v816, 4
  %v818 = vadd.f32 %v816, %v817
  %v819 = vrot.slane %v818, 2
  %v820 = vadd.f32 %v818, %v819
  %v821 = vrot.slane %v820, 1
  %v822 = vadd.f32 %v820, %v821
  %v823 = vmul.f32 %v802, %v802
  %v824 = vmul.f32 %v805, %v805
  %v825 = vadd.f32 %v823, %v824
  %v826 = vrot.slane %v825, 4
  %v827 = vadd.f32 %v825, %v826
  %v828 = vrot.slane %v827, 2
  %v829 = vadd.f32 %v827, %v828
  %v830 = vrot.slane %v829, 1
  %v831 = vadd.f32 %v829, %v830
  %v832 = vmul.f32 %v822, 0.0625
  %v833 = vmul.f32 %v831, 0.0625
  %v834 = vmul.f32 %v832, %v832
  %v835 = vsub.f32 %v833, %v834
  %v836 = vmax.f32 %v835, 0.0
  %v837 = vadd.f32 %v836, 1e-05
  %v838 = vrsqrt.pop %v837
  %v839 = vsub.f32 %v802, %v832
  %v840 = vsub.f32 %v805, %v832
  %v841 = vmul.f32 %v839, %v838
  %v842 = vmul.f32 %v840, %v838
  %v843 = vmax.f32 %v841, 0.0
  %v844 = vmax.f32 %v842, 0.0
  %v845 = vadd.f32 %v810, %v813
  %v846 = vrot.slane %v845, 4
  %v847 = vadd.f32 %v845, %v846
  %v848 = vrot.slane %v847, 2
  %v849 = vadd.f32 %v847, %v848
  %v850 = vrot.slane %v849, 1
  %v851 = vadd.f32 %v849, %v850
  %v852 = vmul.f32 %v810, %v810
  %v853 = vmul.f32 %v813, %v813
  %v854 = vadd.f32 %v852, %v853
  %v855 = vrot.slane %v854, 4
  %v856 = vadd.f32 %v854, %v855
  %v857 = vrot.slane %v856, 2
  %v858 = vadd.f32 %v856, %v857
  %v859 = vrot.slane %v858, 1
  %v860 = vadd.f32 %v858, %v859
  %v861 = vmul.f32 %v851, 0.0625
  %v862 = vmul.f32 %v860, 0.0625
  %v863 = vmul.f32 %v861, %v861
  %v864 = vsub.f32 %v862, %v863
  %v865 = vmax.f32 %v864, 0.0
  %v866 = vadd.f32 %v865, 1e-05
  %v867 = vrsqrt.pop %v866
  %v868 = vsub.f32 %v810, %v861
  %v869 = vsub.f32 %v813, %v861
  %v870 = vmul.f32 %v868, %v867
  %v871 = vmul.f32 %v869, %v867
  %v872 = vmax.f32 %v870, 0.0
  %v873 = vmax.f32 %v871, 0.0
  %874 = vst [vmem:[%s2] sm:$0xff] %v843
  %875 = vst [vmem:[%s2 + $0x8] sm:$0xff] %v844
  %876 = vst [vmem:[%s2 + $0x10] sm:$0xff] %v872
  %877 = vst [vmem:[%s2 + $0x18] sm:$0xff] %v873
  // Predicated region
  $region10: #{generator_forward.6} parent=0 // pred_check
    _
  $region11: #{generator_forward.6} parent=0 // pred_check_branch
    %879 = sbr.rel (0) target = $region13
  $region12: #{generator_forward.6} parent=0 // pred_region
    _
  $region13: #{generator_forward.6} parent=0 // pred_fallthru
    _
  // Predicated region
  $region14: #{generator_forward.6} parent=0 // pred_check
    _
  $region15: #{generator_forward.6} parent=0 // pred_check_branch
    %881 = sbr.rel (0) target = $region17
  $region16: #{generator_forward.6} parent=0 // pred_region
    _
  $region17: #{generator_forward.6} parent=0 // pred_fallthru
    _

// kernel: generator_forward.7
$region0: #{generator_forward.7}
  #allocation0 [shape = 'u32[]', space=smem, size = 0x4, offset = 0x4, fixed_abs, tag = 'smem constant byte address 0x4 - core index']
  #allocation1 [shape = 'u32[144,128]{1,0:T(1,128)}', space=vmem, size = 0x12000, scoped, tag = 'internal scratch']
  %s0 = inlined_call_operand.vmem [shape: bf16[32,288], index: 0, kind: input, shape index: {}]
  %s1 = inlined_call_operand.vmem [shape: bf16[288,128], index: 1, kind: input, shape index: {}]
  %s2 = inlined_call_operand.vmem [shape: f32[32,128], index: 2, kind: output, shape index: {}]
  %s3 = sld [smem:[#allocation0]]
  $region18: #{generator_forward.7} parent=0
    _
  %s5 = ssub.s32 1, %s3
  %s6 = scalar_select 0, %s5, %s3
  // Predicated region
  $region2: #{generator_forward.7} parent=0 // pred_check
    _
  $region3: #{generator_forward.7} parent=0 // pred_check_branch
    %8 = sbr.rel (0) target = $region5
  $region4: #{generator_forward.7} parent=0 // pred_region
    _
  $region5: #{generator_forward.7} parent=0 // pred_fallthru
    _
  // Predicated region
  $region6: #{generator_forward.7} parent=0 // pred_check
    _
  $region7: #{generator_forward.7} parent=0 // pred_check_branch
    %10 = sbr.rel (0) target = $region9
  $region8: #{generator_forward.7} parent=0 // pred_region
    _
  $region9: #{generator_forward.7} parent=0 // pred_fallthru
    _
  %v12 = vld [vmem:[%s0] sm:$0xff]
  %v13 = vld [vmem:[%s0 + $0x8] sm:$0xf]
  %v14 = vld [vmem:[%s0 + $0xc] sm:$0xff]
  %v15 = vld [vmem:[%s0 + $0x14] sm:$0xf]
  %v16 = vld [vmem:[%s0 + $0x18] sm:$0xff]
  %v17 = vld [vmem:[%s0 + $0x20] sm:$0xf]
  %v18 = vld [vmem:[%s0 + $0x24] sm:$0xff]
  %v19 = vld [vmem:[%s0 + $0x2c] sm:$0xf]
  %v20 = vld [vmem:[%s1] sm:$0xf]
  %v21 = vld [vmem:[%s1 + $0x4] sm:$0xf]
  %v22 = vld [vmem:[%s1 + $0x8] sm:$0xf]
  %v23 = vld [vmem:[%s1 + $0xc] sm:$0xf]
  %v24 = vld [vmem:[%s1 + $0x10] sm:$0xf]
  %v25 = vld [vmem:[%s1 + $0x14] sm:$0xf]
  %v26 = vld [vmem:[%s1 + $0x18] sm:$0xf]
  %v27 = vld [vmem:[%s1 + $0x1c] sm:$0xf]
  %v28 = vld [vmem:[%s1 + $0x20] sm:$0xf]
  %v29 = vld [vmem:[%s1 + $0x24] sm:$0xf]
  %v30 = vld [vmem:[%s1 + $0x28] sm:$0xf]
  %v31 = vld [vmem:[%s1 + $0x2c] sm:$0xf]
  %v32 = vld [vmem:[%s1 + $0x30] sm:$0xf]
  %v33 = vld [vmem:[%s1 + $0x34] sm:$0xf]
  %v34 = vld [vmem:[%s1 + $0x38] sm:$0xf]
  %v35 = vld [vmem:[%s1 + $0x3c] sm:$0xf]
  %v36 = vld [vmem:[%s1 + $0x40] sm:$0xf]
  %v37 = vld [vmem:[%s1 + $0x44] sm:$0xf]
  %v38 = vld [vmem:[%s1 + $0x48] sm:$0xf]
  %v39 = vld [vmem:[%s1 + $0x4c] sm:$0xf]
  %v40 = vld [vmem:[%s1 + $0x50] sm:$0xf]
  %v41 = vld [vmem:[%s1 + $0x54] sm:$0xf]
  %v42 = vld [vmem:[%s1 + $0x58] sm:$0xf]
  %v43 = vld [vmem:[%s1 + $0x5c] sm:$0xf]
  %v44 = vld [vmem:[%s1 + $0x60] sm:$0xf]
  %v45 = vld [vmem:[%s1 + $0x64] sm:$0xf]
  %v46 = vld [vmem:[%s1 + $0x68] sm:$0xf]
  %v47 = vld [vmem:[%s1 + $0x6c] sm:$0xf]
  %v48 = vld [vmem:[%s1 + $0x70] sm:$0xf]
  %v49 = vld [vmem:[%s1 + $0x74] sm:$0xf]
  %v50 = vld [vmem:[%s1 + $0x78] sm:$0xf]
  %v51 = vld [vmem:[%s1 + $0x7c] sm:$0xf]
  %v52 = vld [vmem:[%s1 + $0x80] sm:$0xf]
  %v53 = vld [vmem:[%s1 + $0x84] sm:$0xf]
  %v54 = vld [vmem:[%s1 + $0x88] sm:$0xf]
  %v55 = vld [vmem:[%s1 + $0x8c] sm:$0xf]
  %v64 = vunpack.c.l.b16 %v12
  %v65 = vunpack.c.h.b16 %v12
  %v66 = vunpack.c.l.b16 %v13
  %v67 = vunpack.c.l.b16 %v14
  %v68 = vunpack.c.h.b16 %v14
  %v69 = vunpack.c.l.b16 %v15
  %v70 = vunpack.c.l.b16 %v16
  %v71 = vunpack.c.h.b16 %v16
  %v72 = vunpack.c.l.b16 %v17
  %v73 = vunpack.c.l.b16 %v18
  %v74 = vunpack.c.h.b16 %v18
  %v75 = vunpack.c.l.b16 %v19
  %v76 = vpack.c.b16 %v67, %v64
  %v77 = vpack.c.b16 %v68, %v65
  %v78 = vpack.c.b16 %v69, %v66
  %v79 = vpack.c.b16 %v73, %v70
  %v80 = vpack.c.b16 %v74, %v71
  %v81 = vpack.c.b16 %v75, %v72
  %v122 = vunpack.c.l.b16 %v20
  %v123 = vunpack.c.l.b16 %v21
  %v124 = vunpack.c.l.b16 %v22
  %v125 = vunpack.c.l.b16 %v23
  %v126 = vunpack.c.l.b16 %v24
  %v127 = vunpack.c.l.b16 %v25
  %v128 = vunpack.c.l.b16 %v26
  %v129 = vunpack.c.l.b16 %v27
  %v130 = vunpack.c.l.b16 %v28
  %v131 = vunpack.c.l.b16 %v29
  %v132 = vunpack.c.l.b16 %v30
  %v133 = vunpack.c.l.b16 %v31
  %v134 = vunpack.c.l.b16 %v32
  %v135 = vunpack.c.l.b16 %v33
  %v136 = vunpack.c.l.b16 %v34
  %v137 = vunpack.c.l.b16 %v35
  %v138 = vunpack.c.l.b16 %v36
  %v139 = vunpack.c.l.b16 %v37
  %v140 = vunpack.c.l.b16 %v38
  %v141 = vunpack.c.l.b16 %v39
  %v142 = vunpack.c.l.b16 %v40
  %v143 = vunpack.c.l.b16 %v41
  %v144 = vunpack.c.l.b16 %v42
  %v145 = vunpack.c.l.b16 %v43
  %v146 = vunpack.c.l.b16 %v44
  %v147 = vunpack.c.l.b16 %v45
  %v148 = vunpack.c.l.b16 %v46
  %v149 = vunpack.c.l.b16 %v47
  %v150 = vunpack.c.l.b16 %v48
  %v151 = vunpack.c.l.b16 %v49
  %v152 = vunpack.c.l.b16 %v50
  %v153 = vunpack.c.l.b16 %v51
  %v154 = vunpack.c.l.b16 %v52
  %v155 = vunpack.c.l.b16 %v53
  %v156 = vunpack.c.l.b16 %v54
  %v157 = vunpack.c.l.b16 %v55
  %v158 = vpack.c.b16 %v123, %v122
  %v159 = vpack.c.b16 %v125, %v124
  %v160 = vpack.c.b16 %v127, %v126
  %v161 = vpack.c.b16 %v129, %v128
  %v162 = vpack.c.b16 %v131, %v130
  %v163 = vpack.c.b16 %v133, %v132
  %v164 = vpack.c.b16 %v135, %v134
  %v165 = vpack.c.b16 %v137, %v136
  %v166 = vpack.c.b16 %v139, %v138
  %v167 = vpack.c.b16 %v141, %v140
  %v168 = vpack.c.b16 %v143, %v142
  %v169 = vpack.c.b16 %v145, %v144
  %v170 = vpack.c.b16 %v147, %v146
  %v171 = vpack.c.b16 %v149, %v148
  %v172 = vpack.c.b16 %v151, %v150
  %v173 = vpack.c.b16 %v153, %v152
  %v174 = vpack.c.b16 %v155, %v154
  %v175 = vpack.c.b16 %v157, %v156
  %vm194 = vcmask 261120
  %v196 = vsel %vm194, %v78, 0
  %v199 = vsel %vm194, %v81, 0
  %201 = vmatprep.subr.bf16.mxu0 0
  %202 = vmatpush1.bf16.msra.mxu0 %v158
  %203 = vmatprep.subr.bf16.mxu0 0
  %204 = vmatpush1.bf16.msra.mxu0 %v159
  %205 = vmatprep.subr.bf16.mxu0 0
  %206 = vmatpush1.bf16.msra.mxu0 %v160
  %207 = vmatprep.subr.bf16.mxu0 0
  %208 = vmatpush1.bf16.msra.mxu0 %v161
  %209 = vmatprep.subr.bf16.mxu0 0
  %210 = vmatpush1.bf16.msra.mxu0 %v162
  %211 = vmatprep.subr.bf16.mxu0 0
  %212 = vmatpush1.bf16.msra.mxu0 %v163
  %213 = vmatprep.subr.bf16.mxu0 0
  %214 = vmatpush1.bf16.msra.mxu0 %v164
  %215 = vmatprep.subr.bf16.mxu0 0
  %216 = vmatpush1.bf16.msra.mxu0 %v165
  %217 = vmatprep.subr.bf16.mxu0 0
  %218 = vmatpush1.bf16.msra.mxu0 %v166
  %219 = vmatprep.subr.bf16.mxu0 0
  %220 = vmatpush1.bf16.msra.mxu0 %v167
  %221 = vmatprep.subr.bf16.mxu0 0
  %222 = vmatpush1.bf16.msra.mxu0 %v168
  %223 = vmatprep.subr.bf16.mxu0 0
  %224 = vmatpush1.bf16.msra.mxu0 %v169
  %225 = vmatprep.subr.bf16.mxu0 0
  %226 = vmatpush1.bf16.msra.mxu0 %v170
  %227 = vmatprep.subr.bf16.mxu0 0
  %228 = vmatpush1.bf16.msra.mxu0 %v171
  %229 = vmatprep.subr.bf16.mxu0 0
  %230 = vmatpush1.bf16.msra.mxu0 %v172
  %231 = vmatprep.subr.bf16.mxu0 0
  %232 = vmatpush1.bf16.msra.mxu0 %v173
  %233 = vmatprep.mubr.bf16.mxu0 %v77
  %234 = vmatmul.mubr.bf16.gmra.mrb[0].mxu0 %v76
  %v235 = vpop.f32.mrb[0].mxu0
  %v236 = vadd.f32 0.0, %v235
  %v237 = vpop.f32.mrb[0].mxu0
  %v238 = vpop.f32.mrb[0].mxu0
  %v239 = vadd.f32 0.0, %v238
  %v240 = vpop.f32.mrb[0].mxu0
  %241 = vmatprep.mubr.bf16.mxu0 %v80
  %242 = vmatmul.mubr.bf16.gmra.mrb[0].mxu0 %v79
  %v243 = vpop.f32.mrb[0].mxu0
  %v244 = vadd.f32 0.0, %v243
  %v245 = vpop.f32.mrb[0].mxu0
  %v246 = vpop.f32.mrb[0].mxu0
  %v247 = vadd.f32 0.0, %v246
  %v248 = vpop.f32.mrb[0].mxu0
  %249 = vdwg.mxu0
  %250 = vmatprep.subr.bf16.mxu0 0
  %251 = vmatpush1.bf16.msra.mxu0 %v174
  %252 = vmatprep.subr.bf16.mxu0 0
  %253 = vmatpush1.bf16.msra.mxu0 %v175
  %254 = vmatprep.subr.bf16.mxu0 0
  %255 = vmatpush1.bf16.msra.mxu0 0
  %256 = vmatprep.subr.bf16.mxu0 0
  %257 = vmatpush1.bf16.msra.mxu0 0
  %258 = vmatprep.subr.bf16.mxu0 0
  %259 = vmatpush1.bf16.msra.mxu0 0
  %260 = vmatprep.subr.bf16.mxu0 0
  %261 = vmatpush1.bf16.msra.mxu0 0
  %262 = vmatprep.subr.bf16.mxu0 0
  %263 = vmatpush1.bf16.msra.mxu0 0
  %264 = vmatprep.subr.bf16.mxu0 0
  %265 = vmatpush1.bf16.msra.mxu0 0
  %266 = vmatprep.subr.bf16.mxu0 0
  %267 = vmatpush1.bf16.msra.mxu0 0
  %268 = vmatprep.subr.bf16.mxu0 0
  %269 = vmatpush1.bf16.msra.mxu0 0
  %270 = vmatprep.subr.bf16.mxu0 0
  %271 = vmatpush1.bf16.msra.mxu0 0
  %272 = vmatprep.subr.bf16.mxu0 0
  %273 = vmatpush1.bf16.msra.mxu0 0
  %274 = vmatprep.subr.bf16.mxu0 0
  %275 = vmatpush1.bf16.msra.mxu0 0
  %276 = vmatprep.subr.bf16.mxu0 0
  %277 = vmatpush1.bf16.msra.mxu0 0
  %278 = vmatprep.subr.bf16.mxu0 0
  %279 = vmatpush1.bf16.msra.mxu0 0
  %280 = vmatprep.subr.bf16.mxu0 0
  %281 = vmatpush1.bf16.msra.mxu0 0
  %282 = vmatprep.mubr.bf16.mxu0 0
  %283 = vmatmul.mubr.bf16.gmra.mrb[0].mxu0 %v196
  %v284 = vpop.f32.mrb[0].mxu0
  %v285 = vadd.f32 %v236, %v284
  %v286 = vpop.f32.mrb[0].mxu0
  %v287 = vpop.f32.mrb[0].mxu0
  %v288 = vadd.f32 %v239, %v287
  %v289 = vpop.f32.mrb[0].mxu0
  %290 = vmatprep.mubr.bf16.mxu0 0
  %291 = vmatmul.mubr.bf16.gmra.mrb[0].mxu0 %v199
  %v292 = vpop.f32.mrb[0].mxu0
  %v293 = vadd.f32 %v244, %v292
  %v294 = vpop.f32.mrb[0].mxu0
  %v295 = vpop.f32.mrb[0].mxu0
  %v296 = vadd.f32 %v247, %v295
  %v297 = vpop.f32.mrb[0].mxu0
  %298 = vdwg.mxu0
  %v299 = vadd.f32 %v285, %v288
  %v300 = vrot.slane %v299, 4
  %v301 = vadd.f32 %v299, %v300
  %v302 = vrot.slane %v301, 2
  %v303 = vadd.f32 %v301, %v302
  %v304 = vrot.slane %v303, 1
  %v305 = vadd.f32 %v303, %v304
  %v306 = vmul.f32 %v285, %v285
  %v307 = vmul.f32 %v288, %v288
  %v308 = vadd.f32 %v306, %v307
  %v309 = vrot.slane %v308, 4
  %v310 = vadd.f32 %v308, %v309
  %v311 = vrot.slane %v310, 2
  %v312 = vadd.f32 %v310, %v311
  %v313 = vrot.slane %v312, 1
  %v314 = vadd.f32 %v312, %v313
  %v315 = vadd.f32 %v305, 0.0
  %317 = vrot.lane.b32.xlu0 %v305, 96
  %v318 = vpop.permute.xlu0 %317
  %v320 = vadd.f32 %v315, %v318
  %321 = vrot.lane.b32.xlu0 %v305, 64
  %v322 = vpop.permute.xlu0 %321
  %v324 = vadd.f32 %v320, %v322
  %325 = vrot.lane.b32.xlu0 %v305, 32
  %v326 = vpop.permute.xlu0 %325
  %v328 = vadd.f32 %v324, %v326
  %v329 = vadd.f32 %v314, 0.0
  %331 = vrot.lane.b32.xlu0 %v314, 96
  %v332 = vpop.permute.xlu0 %331
  %v334 = vadd.f32 %v329, %v332
  %335 = vrot.lane.b32.xlu0 %v314, 64
  %v336 = vpop.permute.xlu0 %335
  %v338 = vadd.f32 %v334, %v336
  %339 = vrot.lane.b32.xlu0 %v314, 32
  %v340 = vpop.permute.xlu0 %339
  %v342 = vadd.f32 %v338, %v340
  %v343 = vmul.f32 %v328, 0.015625
  %v344 = vmul.f32 %v342, 0.015625
  %v345 = vmul.f32 %v343, %v343
  %v346 = vsub.f32 %v344, %v345
  %v347 = vmax.f32 %v346, 0.0
  %v348 = vadd.f32 %v347, 1e-05
  %v349 = vrsqrt.pop %v348
  %351 = vrot.lane.b32.xlu0 %v343, 32
  %v352 = vpop.permute.xlu0 %351
  %354 = vrot.lane.b32.xlu0 %v343, 64
  %v355 = vpop.permute.xlu0 %354
  %357 = vrot.lane.b32.xlu0 %v343, 96
  %v358 = vpop.permute.xlu0 %357
  %v360 = vsel %vm194, %v343, %v352
  %vm361 = vcmask 523264
  %v362 = vsel %vm361, %v360, %v355
  %vm363 = vcmask 785408
  %v364 = vsel %vm363, %v362, %v358
  %366 = vrot.lane.b32.xlu0 %v349, 32
  %v367 = vpop.permute.xlu0 %366
  %369 = vrot.lane.b32.xlu0 %v349, 64
  %v370 = vpop.permute.xlu0 %369
  %372 = vrot.lane.b32.xlu0 %v349, 96
  %v373 = vpop.permute.xlu0 %372
  %v375 = vsel %vm194, %v349, %v367
  %v376 = vsel %vm361, %v375, %v370
  %v377 = vsel %vm363, %v376, %v373
  %v378 = vlaneseq
  %v379 = vshrl.u32 %v378, 7
  %v380 = vsub.s32 0, %v379
  %v381 = vrot.slane %v364, %v380
  %v382 = vsub.f32 %v285, %v381
  %v383 = vsub.f32 %v288, %v381
  %v384 = vlaneseq
  %v385 = vshrl.u32 %v384, 7
  %v386 = vsub.s32 0, %v385
  %v387 = vrot.slane %v377, %v386
  %v388 = vmul.f32 %v382, %v387
  %v389 = vmul.f32 %v383, %v387
  %v390 = vmax.f32 %v388, 0.0
  %v391 = vmax.f32 %v389, 0.0
  %v392 = vadd.f32 %v293, %v296
  %v393 = vrot.slane %v392, 4
  %v394 = vadd.f32 %v392, %v393
  %v395 = vrot.slane %v394, 2
  %v396 = vadd.f32 %v394, %v395
  %v397 = vrot.slane %v396, 1
  %v398 = vadd.f32 %v396, %v397
  %v399 = vmul.f32 %v293, %v293
  %v400 = vmul.f32 %v296, %v296
  %v401 = vadd.f32 %v399, %v400
  %v402 = vrot.slane %v401, 4
  %v403 = vadd.f32 %v401, %v402
  %v404 = vrot.slane %v403, 2
  %v405 = vadd.f32 %v403, %v404
  %v406 = vrot.slane %v405, 1
  %v407 = vadd.f32 %v405, %v406
  %v408 = vadd.f32 %v398, 0.0
  %410 = vrot.lane.b32.xlu0 %v398, 96
  %v411 = vpop.permute.xlu0 %410
  %v413 = vadd.f32 %v408, %v411
  %414 = vrot.lane.b32.xlu0 %v398, 64
  %v415 = vpop.permute.xlu0 %414
  %v417 = vadd.f32 %v413, %v415
  %418 = vrot.lane.b32.xlu0 %v398, 32
  %v419 = vpop.permute.xlu0 %418
  %v421 = vadd.f32 %v417, %v419
  %v422 = vadd.f32 %v407, 0.0
  %424 = vrot.lane.b32.xlu0 %v407, 96
  %v425 = vpop.permute.xlu0 %424
  %v427 = vadd.f32 %v422, %v425
  %428 = vrot.lane.b32.xlu0 %v407, 64
  %v429 = vpop.permute.xlu0 %428
  %v431 = vadd.f32 %v427, %v429
  %432 = vrot.lane.b32.xlu0 %v407, 32
  %v433 = vpop.permute.xlu0 %432
  %v435 = vadd.f32 %v431, %v433
  %v436 = vmul.f32 %v421, 0.015625
  %v437 = vmul.f32 %v435, 0.015625
  %v438 = vmul.f32 %v436, %v436
  %v439 = vsub.f32 %v437, %v438
  %v440 = vmax.f32 %v439, 0.0
  %v441 = vadd.f32 %v440, 1e-05
  %v442 = vrsqrt.pop %v441
  %444 = vrot.lane.b32.xlu0 %v436, 32
  %v445 = vpop.permute.xlu0 %444
  %447 = vrot.lane.b32.xlu0 %v436, 64
  %v448 = vpop.permute.xlu0 %447
  %450 = vrot.lane.b32.xlu0 %v436, 96
  %v451 = vpop.permute.xlu0 %450
  %v453 = vsel %vm194, %v436, %v445
  %v454 = vsel %vm361, %v453, %v448
  %v455 = vsel %vm363, %v454, %v451
  %457 = vrot.lane.b32.xlu0 %v442, 32
  %v458 = vpop.permute.xlu0 %457
  %460 = vrot.lane.b32.xlu0 %v442, 64
  %v461 = vpop.permute.xlu0 %460
  %463 = vrot.lane.b32.xlu0 %v442, 96
  %v464 = vpop.permute.xlu0 %463
  %v466 = vsel %vm194, %v442, %v458
  %v467 = vsel %vm361, %v466, %v461
  %v468 = vsel %vm363, %v467, %v464
  %v469 = vlaneseq
  %v470 = vshrl.u32 %v469, 7
  %v471 = vsub.s32 0, %v470
  %v472 = vrot.slane %v455, %v471
  %v473 = vsub.f32 %v293, %v472
  %v474 = vsub.f32 %v296, %v472
  %v475 = vlaneseq
  %v476 = vshrl.u32 %v475, 7
  %v477 = vsub.s32 0, %v476
  %v478 = vrot.slane %v468, %v477
  %v479 = vmul.f32 %v473, %v478
  %v480 = vmul.f32 %v474, %v478
  %v481 = vmax.f32 %v479, 0.0
  %v482 = vmax.f32 %v480, 0.0
  %483 = vst [vmem:[%s2] sm:$0xff] %v390
  %484 = vst [vmem:[%s2 + $0x8] sm:$0xff] %v391
  %485 = vst [vmem:[%s2 + $0x10] sm:$0xff] %v481
  %486 = vst [vmem:[%s2 + $0x18] sm:$0xff] %v482
  // Predicated region
  $region10: #{generator_forward.7} parent=0 // pred_check
    _
  $region11: #{generator_forward.7} parent=0 // pred_check_branch
    %488 = sbr.rel (0) target = $region13
  $region12: #{generator_forward.7} parent=0 // pred_region
    _
  $region13: #{generator_forward.7} parent=0 // pred_fallthru
    _
  // Predicated region
  $region14: #{generator_forward.7} parent=0 // pred_check
    _
  $region15: #{generator_forward.7} parent=0 // pred_check_branch
    %490 = sbr.rel (0) target = $region17
  $region16: #{generator_forward.7} parent=0 // pred_region
    _
  $region17: #{generator_forward.7} parent=0 // pred_fallthru
    _

// kernel: generator_forward.8
$region0: #{generator_forward.8}
  #allocation0 [shape = 'u32[]', space=smem, size = 0x4, offset = 0x4, fixed_abs, tag = 'smem constant byte address 0x4 - core index']
  #allocation1 [shape = 'u32[144,128]{1,0:T(1,128)}', space=vmem, size = 0x12000, scoped, tag = 'internal scratch']
  %s0 = inlined_call_operand.vmem [shape: bf16[128,144], index: 0, kind: input, shape index: {}]
  %s1 = inlined_call_operand.vmem [shape: bf16[144,128], index: 1, kind: input, shape index: {}]
  %s2 = inlined_call_operand.vmem [shape: f32[128,128], index: 2, kind: output, shape index: {}]
  %s3 = sld [smem:[#allocation0]]
  $region18: #{generator_forward.8} parent=0
    _
  %s5 = ssub.s32 1, %s3
  %s6 = scalar_select 0, %s5, %s3
  // Predicated region
  $region2: #{generator_forward.8} parent=0 // pred_check
    _
  $region3: #{generator_forward.8} parent=0 // pred_check_branch
    %8 = sbr.rel (0) target = $region5
  $region4: #{generator_forward.8} parent=0 // pred_region
    _
  $region5: #{generator_forward.8} parent=0 // pred_fallthru
    _
  // Predicated region
  $region6: #{generator_forward.8} parent=0 // pred_check
    _
  $region7: #{generator_forward.8} parent=0 // pred_check_branch
    %10 = sbr.rel (0) target = $region9
  $region8: #{generator_forward.8} parent=0 // pred_region
    _
  $region9: #{generator_forward.8} parent=0 // pred_fallthru
    _
  %v12 = vld [vmem:[%s0] sm:$0xff]
  %v13 = vld [vmem:[%s0 + $0x8] sm:$0xff]
  %v14 = vld [vmem:[%s0 + $0x10] sm:$0xff]
  %v15 = vld [vmem:[%s0 + $0x18] sm:$0xff]
  %v16 = vld [vmem:[%s0 + $0x20] sm:$0xff]
  %v17 = vld [vmem:[%s0 + $0x28] sm:$0xff]
  %v18 = vld [vmem:[%s0 + $0x30] sm:$0xff]
  %v19 = vld [vmem:[%s0 + $0x38] sm:$0xff]
  %v20 = vld [vmem:[%s0 + $0x40] sm:$0xff]
  %v21 = vld [vmem:[%s0 + $0x48] sm:$0xff]
  %v22 = vld [vmem:[%s0 + $0x50] sm:$0xff]
  %v23 = vld [vmem:[%s0 + $0x58] sm:$0xff]
  %v24 = vld [vmem:[%s0 + $0x60] sm:$0xff]
  %v25 = vld [vmem:[%s0 + $0x68] sm:$0xff]
  %v26 = vld [vmem:[%s0 + $0x70] sm:$0xff]
  %v27 = vld [vmem:[%s0 + $0x78] sm:$0xff]
  %v28 = vld [vmem:[%s1] sm:$0xf]
  %v29 = vld [vmem:[%s1 + $0x4] sm:$0xf]
  %v30 = vld [vmem:[%s1 + $0x8] sm:$0xf]
  %v31 = vld [vmem:[%s1 + $0xc] sm:$0xf]
  %v32 = vld [vmem:[%s1 + $0x10] sm:$0xf]
  %v33 = vld [vmem:[%s1 + $0x14] sm:$0xf]
  %v34 = vld [vmem:[%s1 + $0x18] sm:$0xf]
  %v35 = vld [vmem:[%s1 + $0x1c] sm:$0xf]
  %v36 = vld [vmem:[%s1 + $0x20] sm:$0xf]
  %v37 = vld [vmem:[%s1 + $0x24] sm:$0xf]
  %v38 = vld [vmem:[%s1 + $0x28] sm:$0xf]
  %v39 = vld [vmem:[%s1 + $0x2c] sm:$0xf]
  %v40 = vld [vmem:[%s1 + $0x30] sm:$0xf]
  %v41 = vld [vmem:[%s1 + $0x34] sm:$0xf]
  %v42 = vld [vmem:[%s1 + $0x38] sm:$0xf]
  %v43 = vld [vmem:[%s1 + $0x3c] sm:$0xf]
  %v44 = vld [vmem:[%s1 + $0x40] sm:$0xf]
  %v45 = vld [vmem:[%s1 + $0x44] sm:$0xf]
  %v62 = vunpack.c.l.b16 %v12
  %v63 = vunpack.c.h.b16 %v12
  %v64 = vunpack.c.l.b16 %v13
  %v65 = vunpack.c.h.b16 %v13
  %v66 = vunpack.c.l.b16 %v14
  %v67 = vunpack.c.h.b16 %v14
  %v68 = vunpack.c.l.b16 %v15
  %v69 = vunpack.c.h.b16 %v15
  %v70 = vunpack.c.l.b16 %v16
  %v71 = vunpack.c.h.b16 %v16
  %v72 = vunpack.c.l.b16 %v17
  %v73 = vunpack.c.h.b16 %v17
  %v74 = vunpack.c.l.b16 %v18
  %v75 = vunpack.c.h.b16 %v18
  %v76 = vunpack.c.l.b16 %v19
  %v77 = vunpack.c.h.b16 %v19
  %v78 = vunpack.c.l.b16 %v20
  %v79 = vunpack.c.h.b16 %v20
  %v80 = vunpack.c.l.b16 %v21
  %v81 = vunpack.c.h.b16 %v21
  %v82 = vunpack.c.l.b16 %v22
  %v83 = vunpack.c.h.b16 %v22
  %v84 = vunpack.c.l.b16 %v23
  %v85 = vunpack.c.h.b16 %v23
  %v86 = vunpack.c.l.b16 %v24
  %v87 = vunpack.c.h.b16 %v24
  %v88 = vunpack.c.l.b16 %v25
  %v89 = vunpack.c.h.b16 %v25
  %v90 = vunpack.c.l.b16 %v26
  %v91 = vunpack.c.h.b16 %v26
  %v92 = vunpack.c.l.b16 %v27
  %v93 = vunpack.c.h.b16 %v27
  %v94 = vpack.c.b16 %v64, %v62
  %v95 = vpack.c.b16 %v65, %v63
  %v96 = vpack.c.b16 %v68, %v66
  %v97 = vpack.c.b16 %v69, %v67
  %v98 = vpack.c.b16 %v72, %v70
  %v99 = vpack.c.b16 %v73, %v71
  %v100 = vpack.c.b16 %v76, %v74
  %v101 = vpack.c.b16 %v77, %v75
  %v102 = vpack.c.b16 %v80, %v78
  %v103 = vpack.c.b16 %v81, %v79
  %v104 = vpack.c.b16 %v84, %v82
  %v105 = vpack.c.b16 %v85, %v83
  %v106 = vpack.c.b16 %v88, %v86
  %v107 = vpack.c.b16 %v89, %v87
  %v108 = vpack.c.b16 %v92, %v90
  %v109 = vpack.c.b16 %v93, %v91
  %v136 = vunpack.c.l.b16 %v28
  %v137 = vunpack.c.l.b16 %v29
  %v138 = vunpack.c.l.b16 %v30
  %v139 = vunpack.c.l.b16 %v31
  %v140 = vunpack.c.l.b16 %v32
  %v141 = vunpack.c.l.b16 %v33
  %v142 = vunpack.c.l.b16 %v34
  %v143 = vunpack.c.l.b16 %v35
  %v144 = vunpack.c.l.b16 %v36
  %v145 = vunpack.c.l.b16 %v37
  %v146 = vunpack.c.l.b16 %v38
  %v147 = vunpack.c.l.b16 %v39
  %v148 = vunpack.c.l.b16 %v40
  %v149 = vunpack.c.l.b16 %v41
  %v150 = vunpack.c.l.b16 %v42
  %v151 = vunpack.c.l.b16 %v43
  %v152 = vunpack.c.l.b16 %v44
  %v153 = vunpack.c.l.b16 %v45
  %v154 = vpack.c.b16 %v137, %v136
  %v155 = vpack.c.b16 %v139, %v138
  %v156 = vpack.c.b16 %v141, %v140
  %v157 = vpack.c.b16 %v143, %v142
  %v158 = vpack.c.b16 %v145, %v144
  %v159 = vpack.c.b16 %v147, %v146
  %v160 = vpack.c.b16 %v149, %v148
  %v161 = vpack.c.b16 %v151, %v150
  %v162 = vpack.c.b16 %v153, %v152
  %vm172 = vcmask 130048
  %v174 = vsel %vm172, %v95, 0
  %v177 = vsel %vm172, %v97, 0
  %v180 = vsel %vm172, %v99, 0
  %v183 = vsel %vm172, %v101, 0
  %v186 = vsel %vm172, %v103, 0
  %v189 = vsel %vm172, %v105, 0
  %v192 = vsel %vm172, %v107, 0
  %v195 = vsel %vm172, %v109, 0
  %197 = vmatprep.subr.bf16.mxu0 0
  %198 = vmatpush1.bf16.msra.mxu0 %v154
  %199 = vmatprep.subr.bf16.mxu0 0
  %200 = vmatpush1.bf16.msra.mxu0 %v155
  %201 = vmatprep.subr.bf16.mxu0 0
  %202 = vmatpush1.bf16.msra.mxu0 %v156
  %203 = vmatprep.subr.bf16.mxu0 0
  %204 = vmatpush1.bf16.msra.mxu0 %v157
  %205 = vmatprep.subr.bf16.mxu0 0
  %206 = vmatpush1.bf16.msra.mxu0 %v158
  %207 = vmatprep.subr.bf16.mxu0 0
  %208 = vmatpush1.bf16.msra.mxu0 %v159
  %209 = vmatprep.subr.bf16.mxu0 0
  %210 = vmatpush1.bf16.msra.mxu0 %v160
  %211 = vmatprep.subr.bf16.mxu0 0
  %212 = vmatpush1.bf16.msra.mxu0 %v161
  %213 = vmatprep.subr.bf16.mxu0 0
  %214 = vmatpush1.bf16.msra.mxu0 %v162
  %215 = vmatprep.subr.bf16.mxu0 0
  %216 = vmatpush1.bf16.msra.mxu0 0
  %217 = vmatprep.subr.bf16.mxu0 0
  %218 = vmatpush1.bf16.msra.mxu0 0
  %219 = vmatprep.subr.bf16.mxu0 0
  %220 = vmatpush1.bf16.msra.mxu0 0
  %221 = vmatprep.subr.bf16.mxu0 0
  %222 = vmatpush1.bf16.msra.mxu0 0
  %223 = vmatprep.subr.bf16.mxu0 0
  %224 = vmatpush1.bf16.msra.mxu0 0
  %225 = vmatprep.subr.bf16.mxu0 0
  %226 = vmatpush1.bf16.msra.mxu0 0
  %227 = vmatprep.subr.bf16.mxu0 0
  %228 = vmatpush1.bf16.msra.mxu0 0
  %229 = vmatprep.mubr.bf16.mxu0 %v174
  %230 = vmatmul.mubr.bf16.gmra.mrb[0].mxu0 %v94
  %v231 = vpop.f32.mrb[0].mxu0
  %v232 = vadd.f32 0.0, %v231
  %v233 = vpop.f32.mrb[0].mxu0
  %v234 = vpop.f32.mrb[0].mxu0
  %v235 = vadd.f32 0.0, %v234
  %v236 = vpop.f32.mrb[0].mxu0
  %237 = vmatprep.mubr.bf16.mxu0 %v177
  %238 = vmatmul.mubr.bf16.gmra.mrb[0].mxu0 %v96
  %v239 = vpop.f32.mrb[0].mxu0
  %v240 = vadd.f32 0.0, %v239
  %v241 = vpop.f32.mrb[0].mxu0
  %v242 = vpop.f32.mrb[0].mxu0
  %v243 = vadd.f32 0.0, %v242
  %v244 = vpop.f32.mrb[0].mxu0
  %245 = vmatprep.mubr.bf16.mxu0 %v180
  %246 = vmatmul.mubr.bf16.gmra.mrb[0].mxu0 %v98
  %v247 = vpop.f32.mrb[0].mxu0
  %v248 = vadd.f32 0.0, %v247
  %v249 = vpop.f32.mrb[0].mxu0
  %v250 = vpop.f32.mrb[0].mxu0
  %v251 = vadd.f32 0.0, %v250
  %v252 = vpop.f32.mrb[0].mxu0
  %253 = vmatprep.mubr.bf16.mxu0 %v183
  %254 = vmatmul.mubr.bf16.gmra.mrb[0].mxu0 %v100
  %v255 = vpop.f32.mrb[0].mxu0
  %v256 = vadd.f32 0.0, %v255
  %v257 = vpop.f32.mrb[0].mxu0
  %v258 = vpop.f32.mrb[0].mxu0
  %v259 = vadd.f32 0.0, %v258
  %v260 = vpop.f32.mrb[0].mxu0
  %261 = vmatprep.mubr.bf16.mxu0 %v186
  %262 = vmatmul.mubr.bf16.gmra.mrb[0].mxu0 %v102
  %v263 = vpop.f32.mrb[0].mxu0
  %v264 = vadd.f32 0.0, %v263
  %v265 = vpop.f32.mrb[0].mxu0
  %v266 = vpop.f32.mrb[0].mxu0
  %v267 = vadd.f32 0.0, %v266
  %v268 = vpop.f32.mrb[0].mxu0
  %269 = vmatprep.mubr.bf16.mxu0 %v189
  %270 = vmatmul.mubr.bf16.gmra.mrb[0].mxu0 %v104
  %v271 = vpop.f32.mrb[0].mxu0
  %v272 = vadd.f32 0.0, %v271
  %v273 = vpop.f32.mrb[0].mxu0
  %v274 = vpop.f32.mrb[0].mxu0
  %v275 = vadd.f32 0.0, %v274
  %v276 = vpop.f32.mrb[0].mxu0
  %277 = vmatprep.mubr.bf16.mxu0 %v192
  %278 = vmatmul.mubr.bf16.gmra.mrb[0].mxu0 %v106
  %v279 = vpop.f32.mrb[0].mxu0
  %v280 = vadd.f32 0.0, %v279
  %v281 = vpop.f32.mrb[0].mxu0
  %v282 = vpop.f32.mrb[0].mxu0
  %v283 = vadd.f32 0.0, %v282
  %v284 = vpop.f32.mrb[0].mxu0
  %285 = vmatprep.mubr.bf16.mxu0 %v195
  %286 = vmatmul.mubr.bf16.gmra.mrb[0].mxu0 %v108
  %v287 = vpop.f32.mrb[0].mxu0
  %v288 = vadd.f32 0.0, %v287
  %v289 = vpop.f32.mrb[0].mxu0
  %v290 = vpop.f32.mrb[0].mxu0
  %v291 = vadd.f32 0.0, %v290
  %v292 = vpop.f32.mrb[0].mxu0
  %293 = vdwg.mxu0
  %v294 = vadd.f32 %v232, %v235
  %v295 = vadd.f32 %v294, %v240
  %v296 = vadd.f32 %v295, %v243
  %v297 = vadd.f32 %v296, %v248
  %v298 = vadd.f32 %v297, %v251
  %v299 = vadd.f32 %v298, %v256
  %v300 = vadd.f32 %v299, %v259
  %v301 = vrot.slane %v300, 4
  %v302 = vadd.f32 %v300, %v301
  %v303 = vrot.slane %v302, 2
  %v304 = vadd.f32 %v302, %v303
  %v305 = vrot.slane %v304, 1
  %v306 = vadd.f32 %v304, %v305
  %v307 = vmul.f32 %v232, %v232
  %v308 = vmul.f32 %v235, %v235
  %v309 = vmul.f32 %v240, %v240
  %v310 = vmul.f32 %v243, %v243
  %v311 = vmul.f32 %v248, %v248
  %v312 = vmul.f32 %v251, %v251
  %v313 = vmul.f32 %v256, %v256
  %v314 = vmul.f32 %v259, %v259
  %v315 = vadd.f32 %v307, %v308
  %v316 = vadd.f32 %v315, %v309
  %v317 = vadd.f32 %v316, %v310
  %v318 = vadd.f32 %v317, %v311
  %v319 = vadd.f32 %v318, %v312
  %v320 = vadd.f32 %v319, %v313
  %v321 = vadd.f32 %v320, %v314
  %v322 = vrot.slane %v321, 4
  %v323 = vadd.f32 %v321, %v322
  %v324 = vrot.slane %v323, 2
  %v325 = vadd.f32 %v323, %v324
  %v326 = vrot.slane %v325, 1
  %v327 = vadd.f32 %v325, %v326
  %v328 = vadd.f32 %v306, 0.0
  %330 = vrot.lane.b32.xlu0 %v306, 96
  %v331 = vpop.permute.xlu0 %330
  %v333 = vadd.f32 %v328, %v331
  %334 = vrot.lane.b32.xlu0 %v306, 64
  %v335 = vpop.permute.xlu0 %334
  %v337 = vadd.f32 %v333, %v335
  %338 = vrot.lane.b32.xlu0 %v306, 32
  %v339 = vpop.permute.xlu0 %338
  %v341 = vadd.f32 %v337, %v339
  %v342 = vadd.f32 %v327, 0.0
  %344 = vrot.lane.b32.xlu0 %v327, 96
  %v345 = vpop.permute.xlu0 %344
  %v347 = vadd.f32 %v342, %v345
  %348 = vrot.lane.b32.xlu0 %v327, 64
  %v349 = vpop.permute.xlu0 %348
  %v351 = vadd.f32 %v347, %v349
  %352 = vrot.lane.b32.xlu0 %v327, 32
  %v353 = vpop.permute.xlu0 %352
  %v355 = vadd.f32 %v351, %v353
  %v356 = vmul.f32 %v341, 0.00390625
  %v357 = vmul.f32 %v355, 0.00390625
  %v358 = vmul.f32 %v356, %v356
  %v359 = vsub.f32 %v357, %v358
  %v360 = vmax.f32 %v359, 0.0
  %v361 = vadd.f32 %v360, 1e-05
  %v362 = vrsqrt.pop %v361
  %364 = vrot.lane.b32.xlu0 %v356, 32
  %v365 = vpop.permute.xlu0 %364
  %367 = vrot.lane.b32.xlu0 %v356, 64
  %v368 = vpop.permute.xlu0 %367
  %370 = vrot.lane.b32.xlu0 %v356, 96
  %v371 = vpop.permute.xlu0 %370
  %vm373 = vcmask 261120
  %v374 = vsel %vm373, %v356, %v365
  %vm375 = vcmask 523264
  %v376 = vsel %vm375, %v374, %v368
  %vm377 = vcmask 785408
  %v378 = vsel %vm377, %v376, %v371
  %380 = vrot.lane.b32.xlu0 %v362, 32
  %v381 = vpop.permute.xlu0 %380
  %383 = vrot.lane.b32.xlu0 %v362, 64
  %v384 = vpop.permute.xlu0 %383
  %386 = vrot.lane.b32.xlu0 %v362, 96
  %v387 = vpop.permute.xlu0 %386
  %v389 = vsel %vm373, %v362, %v381
  %v390 = vsel %vm375, %v389, %v384
  %v391 = vsel %vm377, %v390, %v387
  %v392 = vlaneseq
  %v393 = vshrl.u32 %v392, 7
  %v394 = vsub.s32 0, %v393
  %v395 = vrot.slane %v378, %v394
  %v396 = vsub.f32 %v232, %v395
  %v397 = vsub.f32 %v235, %v395
  %v398 = vsub.f32 %v240, %v395
  %v399 = vsub.f32 %v243, %v395
  %v400 = vsub.f32 %v248, %v395
  %v401 = vsub.f32 %v251, %v395
  %v402 = vsub.f32 %v256, %v395
  %v403 = vsub.f32 %v259, %v395
  %v404 = vlaneseq
  %v405 = vshrl.u32 %v404, 7
  %v406 = vsub.s32 0, %v405
  %v407 = vrot.slane %v391, %v406
  %v408 = vmul.f32 %v396, %v407
  %v409 = vmul.f32 %v397, %v407
  %v410 = vmul.f32 %v398, %v407
  %v411 = vmul.f32 %v399, %v407
  %v412 = vmul.f32 %v400, %v407
  %v413 = vmul.f32 %v401, %v407
  %v414 = vmul.f32 %v402, %v407
  %v415 = vmul.f32 %v403, %v407
  %v416 = vmax.f32 %v408, 0.0
  %v417 = vmax.f32 %v409, 0.0
  %v418 = vmax.f32 %v410, 0.0
  %v419 = vmax.f32 %v411, 0.0
  %v420 = vmax.f32 %v412, 0.0
  %v421 = vmax.f32 %v413, 0.0
  %v422 = vmax.f32 %v414, 0.0
  %v423 = vmax.f32 %v415, 0.0
  %v424 = vadd.f32 %v264, %v267
  %v425 = vadd.f32 %v424, %v272
  %v426 = vadd.f32 %v425, %v275
  %v427 = vadd.f32 %v426, %v280
  %v428 = vadd.f32 %v427, %v283
  %v429 = vadd.f32 %v428, %v288
  %v430 = vadd.f32 %v429, %v291
  %v431 = vrot.slane %v430, 4
  %v432 = vadd.f32 %v430, %v431
  %v433 = vrot.slane %v432, 2
  %v434 = vadd.f32 %v432, %v433
  %v435 = vrot.slane %v434, 1
  %v436 = vadd.f32 %v434, %v435
  %v437 = vmul.f32 %v264, %v264
  %v438 = vmul.f32 %v267, %v267
  %v439 = vmul.f32 %v272, %v272
  %v440 = vmul.f32 %v275, %v275
  %v441 = vmul.f32 %v280, %v280
  %v442 = vmul.f32 %v283, %v283
  %v443 = vmul.f32 %v288, %v288
  %v444 = vmul.f32 %v291, %v291
  %v445 = vadd.f32 %v437, %v438
  %v446 = vadd.f32 %v445, %v439
  %v447 = vadd.f32 %v446, %v440
  %v448 = vadd.f32 %v447, %v441
  %v449 = vadd.f32 %v448, %v442
  %v450 = vadd.f32 %v449, %v443
  %v451 = vadd.f32 %v450, %v444
  %v452 = vrot.slane %v451, 4
  %v453 = vadd.f32 %v451, %v452
  %v454 = vrot.slane %v453, 2
  %v455 = vadd.f32 %v453, %v454
  %v456 = vrot.slane %v455, 1
  %v457 = vadd.f32 %v455, %v456
  %v458 = vadd.f32 %v436, 0.0
  %460 = vrot.lane.b32.xlu0 %v436, 96
  %v461 = vpop.permute.xlu0 %460
  %v463 = vadd.f32 %v458, %v461
  %464 = vrot.lane.b32.xlu0 %v436, 64
  %v465 = vpop.permute.xlu0 %464
  %v467 = vadd.f32 %v463, %v465
  %468 = vrot.lane.b32.xlu0 %v436, 32
  %v469 = vpop.permute.xlu0 %468
  %v471 = vadd.f32 %v467, %v469
  %v472 = vadd.f32 %v457, 0.0
  %474 = vrot.lane.b32.xlu0 %v457, 96
  %v475 = vpop.permute.xlu0 %474
  %v477 = vadd.f32 %v472, %v475
  %478 = vrot.lane.b32.xlu0 %v457, 64
  %v479 = vpop.permute.xlu0 %478
  %v481 = vadd.f32 %v477, %v479
  %482 = vrot.lane.b32.xlu0 %v457, 32
  %v483 = vpop.permute.xlu0 %482
  %v485 = vadd.f32 %v481, %v483
  %v486 = vmul.f32 %v471, 0.00390625
  %v487 = vmul.f32 %v485, 0.00390625
  %v488 = vmul.f32 %v486, %v486
  %v489 = vsub.f32 %v487, %v488
  %v490 = vmax.f32 %v489, 0.0
  %v491 = vadd.f32 %v490, 1e-05
  %v492 = vrsqrt.pop %v491
  %494 = vrot.lane.b32.xlu0 %v486, 32
  %v495 = vpop.permute.xlu0 %494
  %497 = vrot.lane.b32.xlu0 %v486, 64
  %v498 = vpop.permute.xlu0 %497
  %500 = vrot.lane.b32.xlu0 %v486, 96
  %v501 = vpop.permute.xlu0 %500
  %v503 = vsel %vm373, %v486, %v495
  %v504 = vsel %vm375, %v503, %v498
  %v505 = vsel %vm377, %v504, %v501
  %507 = vrot.lane.b32.xlu0 %v492, 32
  %v508 = vpop.permute.xlu0 %507
  %510 = vrot.lane.b32.xlu0 %v492, 64
  %v511 = vpop.permute.xlu0 %510
  %513 = vrot.lane.b32.xlu0 %v492, 96
  %v514 = vpop.permute.xlu0 %513
  %v516 = vsel %vm373, %v492, %v508
  %v517 = vsel %vm375, %v516, %v511
  %v518 = vsel %vm377, %v517, %v514
  %v519 = vlaneseq
  %v520 = vshrl.u32 %v519, 7
  %v521 = vsub.s32 0, %v520
  %v522 = vrot.slane %v505, %v521
  %v523 = vsub.f32 %v264, %v522
  %v524 = vsub.f32 %v267, %v522
  %v525 = vsub.f32 %v272, %v522
  %v526 = vsub.f32 %v275, %v522
  %v527 = vsub.f32 %v280, %v522
  %v528 = vsub.f32 %v283, %v522
  %v529 = vsub.f32 %v288, %v522
  %v530 = vsub.f32 %v291, %v522
  %v531 = vlaneseq
  %v532 = vshrl.u32 %v531, 7
  %v533 = vsub.s32 0, %v532
  %v534 = vrot.slane %v518, %v533
  %v535 = vmul.f32 %v523, %v534
  %v536 = vmul.f32 %v524, %v534
  %v537 = vmul.f32 %v525, %v534
  %v538 = vmul.f32 %v526, %v534
  %v539 = vmul.f32 %v527, %v534
  %v540 = vmul.f32 %v528, %v534
  %v541 = vmul.f32 %v529, %v534
  %v542 = vmul.f32 %v530, %v534
  %v543 = vmax.f32 %v535, 0.0
  %v544 = vmax.f32 %v536, 0.0
  %v545 = vmax.f32 %v537, 0.0
  %v546 = vmax.f32 %v538, 0.0
  %v547 = vmax.f32 %v539, 0.0
  %v548 = vmax.f32 %v540, 0.0
  %v549 = vmax.f32 %v541, 0.0
  %v550 = vmax.f32 %v542, 0.0
  %551 = vst [vmem:[%s2] sm:$0xff] %v416
  %552 = vst [vmem:[%s2 + $0x8] sm:$0xff] %v417
  %553 = vst [vmem:[%s2 + $0x10] sm:$0xff] %v418
  %554 = vst [vmem:[%s2 + $0x18] sm:$0xff] %v419
  %555 = vst [vmem:[%s2 + $0x20] sm:$0xff] %v420
  %556 = vst [vmem:[%s2 + $0x28] sm:$0xff] %v421
  %557 = vst [vmem:[%s2 + $0x30] sm:$0xff] %v422
  %558 = vst [vmem:[%s2 + $0x38] sm:$0xff] %v423
  %559 = vst [vmem:[%s2 + $0x40] sm:$0xff] %v543
  %560 = vst [vmem:[%s2 + $0x48] sm:$0xff] %v544
  %561 = vst [vmem:[%s2 + $0x50] sm:$0xff] %v545
  %562 = vst [vmem:[%s2 + $0x58] sm:$0xff] %v546
  %563 = vst [vmem:[%s2 + $0x60] sm:$0xff] %v547
  %564 = vst [vmem:[%s2 + $0x68] sm:$0xff] %v548
  %565 = vst [vmem:[%s2 + $0x70] sm:$0xff] %v549
  %566 = vst [vmem:[%s2 + $0x78] sm:$0xff] %v550
  // Predicated region
  $region10: #{generator_forward.8} parent=0 // pred_check
    _
  $region11: #{generator_forward.8} parent=0 // pred_check_branch
    %568 = sbr.rel (0) target = $region13
  $region12: #{generator_forward.8} parent=0 // pred_region
    _
  $region13: #{generator_forward.8} parent=0 // pred_fallthru
    _
  // Predicated region
  $region14: #{generator_forward.8} parent=0 // pred_check
    _
  $region15: #{generator_forward.8} parent=0 // pred_check_branch
    %570 = sbr.rel (0) target = $region17
  $region16: #{generator_forward.8} parent=0 // pred_region
    _
  $region17: #{generator_forward.8} parent=0 // pred_fallthru
    _

// kernel: generator_forward.9
$region0: #{generator_forward.9}
  #allocation0 [shape = 'u32[]', space=smem, size = 0x4, offset = 0x4, fixed_abs, tag = 'smem constant byte address 0x4 - core index']
  #allocation1 [shape = 'u32[144,128]{1,0:T(1,128)}', space=vmem, size = 0x12000, scoped, tag = 'internal scratch']
  %s0 = inlined_call_operand.vmem [shape: bf16[512,72], index: 0, kind: input, shape index: {}]
  %s1 = inlined_call_operand.vmem [shape: bf16[72,128], index: 1, kind: input, shape index: {}]
  %s2 = inlined_call_operand.vmem [shape: f32[512,128], index: 2, kind: output, shape index: {}]
  %s3 = sld [smem:[#allocation0]]
  $region18: #{generator_forward.9} parent=0
    _
  %s5 = ssub.s32 1, %s3
  %s6 = scalar_select 0, %s5, %s3
  // Predicated region
  $region2: #{generator_forward.9} parent=0 // pred_check
    _
  $region3: #{generator_forward.9} parent=0 // pred_check_branch
    %8 = sbr.rel (0) target = $region5
  $region4: #{generator_forward.9} parent=0 // pred_region
    _
  $region5: #{generator_forward.9} parent=0 // pred_fallthru
    _
  // Predicated region
  $region6: #{generator_forward.9} parent=0 // pred_check
    _
  $region7: #{generator_forward.9} parent=0 // pred_check_branch
    %10 = sbr.rel (0) target = $region9
  $region8: #{generator_forward.9} parent=0 // pred_region
    _
  $region9: #{generator_forward.9} parent=0 // pred_fallthru
    _
  %v12 = vld [vmem:[%s0] sm:$0xf]
  %v13 = vld [vmem:[%s0 + $0x4] sm:$0xf]
  %v14 = vld [vmem:[%s0 + $0x8] sm:$0xf]
  %v15 = vld [vmem:[%s0 + $0xc] sm:$0xf]
  %v16 = vld [vmem:[%s0 + $0x10] sm:$0xf]
  %v17 = vld [vmem:[%s0 + $0x14] sm:$0xf]
  %v18 = vld [vmem:[%s0 + $0x18] sm:$0xf]
  %v19 = vld [vmem:[%s0 + $0x1c] sm:$0xf]
  %v20 = vld [vmem:[%s0 + $0x20] sm:$0xf]
  %v21 = vld [vmem:[%s0 + $0x24] sm:$0xf]
  %v22 = vld [vmem:[%s0 + $0x28] sm:$0xf]
  %v23 = vld [vmem:[%s0 + $0x2c] sm:$0xf]
  %v24 = vld [vmem:[%s0 + $0x30] sm:$0xf]
  %v25 = vld [vmem:[%s0 + $0x34] sm:$0xf]
  %v26 = vld [vmem:[%s0 + $0x38] sm:$0xf]
  %v27 = vld [vmem:[%s0 + $0x3c] sm:$0xf]
  %v28 = vld [vmem:[%s0 + $0x40] sm:$0xf]
  %v29 = vld [vmem:[%s0 + $0x44] sm:$0xf]
  %v30 = vld [vmem:[%s0 + $0x48] sm:$0xf]
  %v31 = vld [vmem:[%s0 + $0x4c] sm:$0xf]
  %v32 = vld [vmem:[%s0 + $0x50] sm:$0xf]
  %v33 = vld [vmem:[%s0 + $0x54] sm:$0xf]
  %v34 = vld [vmem:[%s0 + $0x58] sm:$0xf]
  %v35 = vld [vmem:[%s0 + $0x5c] sm:$0xf]
  %v36 = vld [vmem:[%s0 + $0x60] sm:$0xf]
  %v37 = vld [vmem:[%s0 + $0x64] sm:$0xf]
  %v38 = vld [vmem:[%s0 + $0x68] sm:$0xf]
  %v39 = vld [vmem:[%s0 + $0x6c] sm:$0xf]
  %v40 = vld [vmem:[%s0 + $0x70] sm:$0xf]
  %v41 = vld [vmem:[%s0 + $0x74] sm:$0xf]
  %v42 = vld [vmem:[%s0 + $0x78] sm:$0xf]
  %v43 = vld [vmem:[%s0 + $0x7c] sm:$0xf]
  %v44 = vld [vmem:[%s0 + $0x80] sm:$0xf]
  %v45 = vld [vmem:[%s0 + $0x84] sm:$0xf]
  %v46 = vld [vmem:[%s0 + $0x88] sm:$0xf]
  %v47 = vld [vmem:[%s0 + $0x8c] sm:$0xf]
  %v48 = vld [vmem:[%s0 + $0x90] sm:$0xf]
  %v49 = vld [vmem:[%s0 + $0x94] sm:$0xf]
  %v50 = vld [vmem:[%s0 + $0x98] sm:$0xf]
  %v51 = vld [vmem:[%s0 + $0x9c] sm:$0xf]
  %v52 = vld [vmem:[%s0 + $0xa0] sm:$0xf]
  %v53 = vld [vmem:[%s0 + $0xa4] sm:$0xf]
  %v54 = vld [vmem:[%s0 + $0xa8] sm:$0xf]
  %v55 = vld [vmem:[%s0 + $0xac] sm:$0xf]
  %v56 = vld [vmem:[%s0 + $0xb0] sm:$0xf]
  %v57 = vld [vmem:[%s0 + $0xb4] sm:$0xf]
  %v58 = vld [vmem:[%s0 + $0xb8] sm:$0xf]
  %v59 = vld [vmem:[%s0 + $0xbc] sm:$0xf]
  %v60 = vld [vmem:[%s0 + $0xc0] sm:$0xf]
  %v61 = vld [vmem:[%s0 + $0xc4] sm:$0xf]
  %v62 = vld [vmem:[%s0 + $0xc8] sm:$0xf]
  %v63 = vld [vmem:[%s0 + $0xcc] sm:$0xf]
  %v64 = vld [vmem:[%s0 + $0xd0] sm:$0xf]
  %v65 = vld [vmem:[%s0 + $0xd4] sm:$0xf]
  %v66 = vld [vmem:[%s0 + $0xd8] sm:$0xf]
  %v67 = vld [vmem:[%s0 + $0xdc] sm:$0xf]
  %v68 = vld [vmem:[%s0 + $0xe0] sm:$0xf]
  %v69 = vld [vmem:[%s0 + $0xe4] sm:$0xf]
  %v70 = vld [vmem:[%s0 + $0xe8] sm:$0xf]
  %v71 = vld [vmem:[%s0 + $0xec] sm:$0xf]
  %v72 = vld [vmem:[%s0 + $0xf0] sm:$0xf]
  %v73 = vld [vmem:[%s0 + $0xf4] sm:$0xf]
  %v74 = vld [vmem:[%s0 + $0xf8] sm:$0xf]
  %v75 = vld [vmem:[%s0 + $0xfc] sm:$0xf]
  %v76 = vld [vmem:[%s1] sm:$0xf]
  %v77 = vld [vmem:[%s1 + $0x4] sm:$0xf]
  %v78 = vld [vmem:[%s1 + $0x8] sm:$0xf]
  %v79 = vld [vmem:[%s1 + $0xc] sm:$0xf]
  %v80 = vld [vmem:[%s1 + $0x10] sm:$0xf]
  %v81 = vld [vmem:[%s1 + $0x14] sm:$0xf]
  %v82 = vld [vmem:[%s1 + $0x18] sm:$0xf]
  %v83 = vld [vmem:[%s1 + $0x1c] sm:$0xf]
  %v84 = vld [vmem:[%s1 + $0x20] sm:$0xf]
  %v149 = vunpack.c.l.b16 %v12
  %v150 = vunpack.c.l.b16 %v13
  %v151 = vunpack.c.l.b16 %v14
  %v152 = vunpack.c.l.b16 %v15
  %v153 = vunpack.c.l.b16 %v16
  %v154 = vunpack.c.l.b16 %v17
  %v155 = vunpack.c.l.b16 %v18
  %v156 = vunpack.c.l.b16 %v19
  %v157 = vunpack.c.l.b16 %v20
  %v158 = vunpack.c.l.b16 %v21
  %v159 = vunpack.c.l.b16 %v22
  %v160 = vunpack.c.l.b16 %v23
  %v161 = vunpack.c.l.b16 %v24
  %v162 = vunpack.c.l.b16 %v25
  %v163 = vunpack.c.l.b16 %v26
  %v164 = vunpack.c.l.b16 %v27
  %v165 = vunpack.c.l.b16 %v28
  %v166 = vunpack.c.l.b16 %v29
  %v167 = vunpack.c.l.b16 %v30
  %v168 = vunpack.c.l.b16 %v31
  %v169 = vunpack.c.l.b16 %v32
  %v170 = vunpack.c.l.b16 %v33
  %v171 = vunpack.c.l.b16 %v34
  %v172 = vunpack.c.l.b16 %v35
  %v173 = vunpack.c.l.b16 %v36
  %v174 = vunpack.c.l.b16 %v37
  %v175 = vunpack.c.l.b16 %v38
  %v176 = vunpack.c.l.b16 %v39
  %v177 = vunpack.c.l.b16 %v40
  %v178 = vunpack.c.l.b16 %v41
  %v179 = vunpack.c.l.b16 %v42
  %v180 = vunpack.c.l.b16 %v43
  %v181 = vunpack.c.l.b16 %v44
  %v182 = vunpack.c.l.b16 %v45
  %v183 = vunpack.c.l.b16 %v46
  %v184 = vunpack.c.l.b16 %v47
  %v185 = vunpack.c.l.b16 %v48
  %v186 = vunpack.c.l.b16 %v49
  %v187 = vunpack.c.l.b16 %v50
  %v188 = vunpack.c.l.b16 %v51
  %v189 = vunpack.c.l.b16 %v52
  %v190 = vunpack.c.l.b16 %v53
  %v191 = vunpack.c.l.b16 %v54
  %v192 = vunpack.c.l.b16 %v55
  %v193 = vunpack.c.l.b16 %v56
  %v194 = vunpack.c.l.b16 %v57
  %v195 = vunpack.c.l.b16 %v58
  %v196 = vunpack.c.l.b16 %v59
  %v197 = vunpack.c.l.b16 %v60
  %v198 = vunpack.c.l.b16 %v61
  %v199 = vunpack.c.l.b16 %v62
  %v200 = vunpack.c.l.b16 %v63
  %v201 = vunpack.c.l.b16 %v64
  %v202 = vunpack.c.l.b16 %v65
  %v203 = vunpack.c.l.b16 %v66
  %v204 = vunpack.c.l.b16 %v67
  %v205 = vunpack.c.l.b16 %v68
  %v206 = vunpack.c.l.b16 %v69
  %v207 = vunpack.c.l.b16 %v70
  %v208 = vunpack.c.l.b16 %v71
  %v209 = vunpack.c.l.b16 %v72
  %v210 = vunpack.c.l.b16 %v73
  %v211 = vunpack.c.l.b16 %v74
  %v212 = vunpack.c.l.b16 %v75
  %v213 = vpack.c.b16 %v150, %v149
  %v214 = vpack.c.b16 %v152, %v151
  %v215 = vpack.c.b16 %v154, %v153
  %v216 = vpack.c.b16 %v156, %v155
  %v217 = vpack.c.b16 %v158, %v157
  %v218 = vpack.c.b16 %v160, %v159
  %v219 = vpack.c.b16 %v162, %v161
  %v220 = vpack.c.b16 %v164, %v163
  %v221 = vpack.c.b16 %v166, %v165
  %v222 = vpack.c.b16 %v168, %v167
  %v223 = vpack.c.b16 %v170, %v169
  %v224 = vpack.c.b16 %v172, %v171
  %v225 = vpack.c.b16 %v174, %v173
  %v226 = vpack.c.b16 %v176, %v175
  %v227 = vpack.c.b16 %v178, %v177
  %v228 = vpack.c.b16 %v180, %v179
  %v229 = vpack.c.b16 %v182, %v181
  %v230 = vpack.c.b16 %v184, %v183
  %v231 = vpack.c.b16 %v186, %v185
  %v232 = vpack.c.b16 %v188, %v187
  %v233 = vpack.c.b16 %v190, %v189
  %v234 = vpack.c.b16 %v192, %v191
  %v235 = vpack.c.b16 %v194, %v193
  %v236 = vpack.c.b16 %v196, %v195
  %v237 = vpack.c.b16 %v198, %v197
  %v238 = vpack.c.b16 %v200, %v199
  %v239 = vpack.c.b16 %v202, %v201
  %v240 = vpack.c.b16 %v204, %v203
  %v241 = vpack.c.b16 %v206, %v205
  %v242 = vpack.c.b16 %v208, %v207
  %v243 = vpack.c.b16 %v210, %v209
  %v244 = vpack.c.b16 %v212, %v211
  %v254 = vunpack.c.l.b16 %v76
  %v255 = vunpack.c.l.b16 %v77
  %v256 = vunpack.c.l.b16 %v78
  %v257 = vunpack.c.l.b16 %v79
  %v258 = vunpack.c.l.b16 %v80
  %v259 = vunpack.c.l.b16 %v81
  %v260 = vunpack.c.l.b16 %v82
  %v261 = vunpack.c.l.b16 %v83
  %v262 = vunpack.c.l.b16 %v84
  %v263 = vpack.c.b16 %v255, %v254
  %v264 = vpack.c.b16 %v257, %v256
  %v265 = vpack.c.b16 %v259, %v258
  %v266 = vpack.c.b16 %v261, %v260
  %v267 = vpack.c.b16 %v262, %v262
  %vm272 = vcmask 588800
  %v274 = vsel %vm272, %v213, 0
  %v277 = vsel %vm272, %v214, 0
  %v280 = vsel %vm272, %v215, 0
  %v283 = vsel %vm272, %v216, 0
  %v286 = vsel %vm272, %v217, 0
  %v289 = vsel %vm272, %v218, 0
  %v292 = vsel %vm272, %v219, 0
  %v295 = vsel %vm272, %v220, 0
  %v298 = vsel %vm272, %v221, 0
  %v301 = vsel %vm272, %v222, 0
  %v304 = vsel %vm272, %v223, 0
  %v307 = vsel %vm272, %v224, 0
  %v310 = vsel %vm272, %v225, 0
  %v313 = vsel %vm272, %v226, 0
  %v316 = vsel %vm272, %v227, 0
  %v319 = vsel %vm272, %v228, 0
  %v322 = vsel %vm272, %v229, 0
  %v325 = vsel %vm272, %v230, 0
  %v328 = vsel %vm272, %v231, 0
  %v331 = vsel %vm272, %v232, 0
  %v334 = vsel %vm272, %v233, 0
  %v337 = vsel %vm272, %v234, 0
  %v340 = vsel %vm272, %v235, 0
  %v343 = vsel %vm272, %v236, 0
  %v346 = vsel %vm272, %v237, 0
  %v349 = vsel %vm272, %v238, 0
  %v352 = vsel %vm272, %v239, 0
  %v355 = vsel %vm272, %v240, 0
  %v358 = vsel %vm272, %v241, 0
  %v361 = vsel %vm272, %v242, 0
  %v364 = vsel %vm272, %v243, 0
  %v367 = vsel %vm272, %v244, 0
  %vm369 = vcmask 1043456
  %v371 = vsel %vm369, %v267, 0
  %373 = vmatprep.subr.bf16.mxu0 0
  %374 = vmatpush1.bf16.msra.mxu0 %v263
  %375 = vmatprep.subr.bf16.mxu0 0
  %376 = vmatpush1.bf16.msra.mxu0 %v264
  %377 = vmatprep.subr.bf16.mxu0 0
  %378 = vmatpush1.bf16.msra.mxu0 %v265
  %379 = vmatprep.subr.bf16.mxu0 0
  %380 = vmatpush1.bf16.msra.mxu0 %v266
  %381 = vmatprep.subr.bf16.mxu0 0
  %382 = vmatpush1.bf16.msra.mxu0 %v371
  %383 = vmatprep.subr.bf16.mxu0 0
  %384 = vmatpush1.bf16.msra.mxu0 0
  %385 = vmatprep.subr.bf16.mxu0 0
  %386 = vmatpush1.bf16.msra.mxu0 0
  %387 = vmatprep.subr.bf16.mxu0 0
  %388 = vmatpush1.bf16.msra.mxu0 0
  %389 = vmatprep.subr.bf16.mxu0 0
  %390 = vmatpush1.bf16.msra.mxu0 0
  %391 = vmatprep.subr.bf16.mxu0 0
  %392 = vmatpush1.bf16.msra.mxu0 0
  %393 = vmatprep.subr.bf16.mxu0 0
  %394 = vmatpush1.bf16.msra.mxu0 0
  %395 = vmatprep.subr.bf16.mxu0 0
  %396 = vmatpush1.bf16.msra.mxu0 0
  %397 = vmatprep.subr.bf16.mxu0 0
  %398 = vmatpush1.bf16.msra.mxu0 0
  %399 = vmatprep.subr.bf16.mxu0 0
  %400 = vmatpush1.bf16.msra.mxu0 0
  %401 = vmatprep.subr.bf16.mxu0 0
  %402 = vmatpush1.bf16.msra.mxu0 0
  %403 = vmatprep.subr.bf16.mxu0 0
  %404 = vmatpush1.bf16.msra.mxu0 0
  %405 = vmatprep.mubr.bf16.mxu0 0
  %406 = vmatmul.mubr.bf16.gmra.mrb[0].mxu0 %v274
  %v407 = vpop.f32.mrb[0].mxu0
  %v408 = vadd.f32 0.0, %v407
  %v409 = vpop.f32.mrb[0].mxu0
  %v410 = vpop.f32.mrb[0].mxu0
  %v411 = vadd.f32 0.0, %v410
  %v412 = vpop.f32.mrb[0].mxu0
  %413 = vmatprep.mubr.bf16.mxu0 0
  %414 = vmatmul.mubr.bf16.gmra.mrb[0].mxu0 %v277
  %v415 = vpop.f32.mrb[0].mxu0
  %v416 = vadd.f32 0.0, %v415
  %v417 = vpop.f32.mrb[0].mxu0
  %v418 = vpop.f32.mrb[0].mxu0
  %v419 = vadd.f32 0.0, %v418
  %v420 = vpop.f32.mrb[0].mxu0
  %421 = vmatprep.mubr.bf16.mxu0 0
  %422 = vmatmul.mubr.bf16.gmra.mrb[0].mxu0 %v280
  %v423 = vpop.f32.mrb[0].mxu0
  %v424 = vadd.f32 0.0, %v423
  %v425 = vpop.f32.mrb[0].mxu0
  %v426 = vpop.f32.mrb[0].mxu0
  %v427 = vadd.f32 0.0, %v426
  %v428 = vpop.f32.mrb[0].mxu0
  %429 = vmatprep.mubr.bf16.mxu0 0
  %430 = vmatmul.mubr.bf16.gmra.mrb[0].mxu0 %v283
  %v431 = vpop.f32.mrb[0].mxu0
  %v432 = vadd.f32 0.0, %v431
  %v433 = vpop.f32.mrb[0].mxu0
  %v434 = vpop.f32.mrb[0].mxu0
  %v435 = vadd.f32 0.0, %v434
  %v436 = vpop.f32.mrb[0].mxu0
  %437 = vmatprep.mubr.bf16.mxu0 0
  %438 = vmatmul.mubr.bf16.gmra.mrb[0].mxu0 %v286
  %v439 = vpop.f32.mrb[0].mxu0
  %v440 = vadd.f32 0.0, %v439
  %v441 = vpop.f32.mrb[0].mxu0
  %v442 = vpop.f32.mrb[0].mxu0
  %v443 = vadd.f32 0.0, %v442
  %v444 = vpop.f32.mrb[0].mxu0
  %445 = vmatprep.mubr.bf16.mxu0 0
  %446 = vmatmul.mubr.bf16.gmra.mrb[0].mxu0 %v289
  %v447 = vpop.f32.mrb[0].mxu0
  %v448 = vadd.f32 0.0, %v447
  %v449 = vpop.f32.mrb[0].mxu0
  %v450 = vpop.f32.mrb[0].mxu0
  %v451 = vadd.f32 0.0, %v450
  %v452 = vpop.f32.mrb[0].mxu0
  %453 = vmatprep.mubr.bf16.mxu0 0
  %454 = vmatmul.mubr.bf16.gmra.mrb[0].mxu0 %v292
  %v455 = vpop.f32.mrb[0].mxu0
  %v456 = vadd.f32 0.0, %v455
  %v457 = vpop.f32.mrb[0].mxu0
  %v458 = vpop.f32.mrb[0].mxu0
  %v459 = vadd.f32 0.0, %v458
  %v460 = vpop.f32.mrb[0].mxu0
  %461 = vmatprep.mubr.bf16.mxu0 0
  %462 = vmatmul.mubr.bf16.gmra.mrb[0].mxu0 %v295
  %v463 = vpop.f32.mrb[0].mxu0
  %v464 = vadd.f32 0.0, %v463
  %v465 = vpop.f32.mrb[0].mxu0
  %v466 = vpop.f32.mrb[0].mxu0
  %v467 = vadd.f32 0.0, %v466
  %v468 = vpop.f32.mrb[0].mxu0
  %469 = vmatprep.mubr.bf16.mxu0 0
  %470 = vmatmul.mubr.bf16.gmra.mrb[0].mxu0 %v298
  %v471 = vpop.f32.mrb[0].mxu0
  %v472 = vadd.f32 0.0, %v471
  %v473 = vpop.f32.mrb[0].mxu0
  %v474 = vpop.f32.mrb[0].mxu0
  %v475 = vadd.f32 0.0, %v474
  %v476 = vpop.f32.mrb[0].mxu0
  %477 = vmatprep.mubr.bf16.mxu0 0
  %478 = vmatmul.mubr.bf16.gmra.mrb[0].mxu0 %v301
  %v479 = vpop.f32.mrb[0].mxu0
  %v480 = vadd.f32 0.0, %v479
  %v481 = vpop.f32.mrb[0].mxu0
  %v482 = vpop.f32.mrb[0].mxu0
  %v483 = vadd.f32 0.0, %v482
  %v484 = vpop.f32.mrb[0].mxu0
  %485 = vmatprep.mubr.bf16.mxu0 0
  %486 = vmatmul.mubr.bf16.gmra.mrb[0].mxu0 %v304
  %v487 = vpop.f32.mrb[0].mxu0
  %v488 = vadd.f32 0.0, %v487
  %v489 = vpop.f32.mrb[0].mxu0
  %v490 = vpop.f32.mrb[0].mxu0
  %v491 = vadd.f32 0.0, %v490
  %v492 = vpop.f32.mrb[0].mxu0
  %493 = vmatprep.mubr.bf16.mxu0 0
  %494 = vmatmul.mubr.bf16.gmra.mrb[0].mxu0 %v307
  %v495 = vpop.f32.mrb[0].mxu0
  %v496 = vadd.f32 0.0, %v495
  %v497 = vpop.f32.mrb[0].mxu0
  %v498 = vpop.f32.mrb[0].mxu0
  %v499 = vadd.f32 0.0, %v498
  %v500 = vpop.f32.mrb[0].mxu0
  %501 = vmatprep.mubr.bf16.mxu0 0
  %502 = vmatmul.mubr.bf16.gmra.mrb[0].mxu0 %v310
  %v503 = vpop.f32.mrb[0].mxu0
  %v504 = vadd.f32 0.0, %v503
  %v505 = vpop.f32.mrb[0].mxu0
  %v506 = vpop.f32.mrb[0].mxu0
  %v507 = vadd.f32 0.0, %v506
  %v508 = vpop.f32.mrb[0].mxu0
  %509 = vmatprep.mubr.bf16.mxu0 0
  %510 = vmatmul.mubr.bf16.gmra.mrb[0].mxu0 %v313
  %v511 = vpop.f32.mrb[0].mxu0
  %v512 = vadd.f32 0.0, %v511
  %v513 = vpop.f32.mrb[0].mxu0
  %v514 = vpop.f32.mrb[0].mxu0
  %v515 = vadd.f32 0.0, %v514
  %v516 = vpop.f32.mrb[0].mxu0
  %517 = vmatprep.mubr.bf16.mxu0 0
  %518 = vmatmul.mubr.bf16.gmra.mrb[0].mxu0 %v316
  %v519 = vpop.f32.mrb[0].mxu0
  %v520 = vadd.f32 0.0, %v519
  %v521 = vpop.f32.mrb[0].mxu0
  %v522 = vpop.f32.mrb[0].mxu0
  %v523 = vadd.f32 0.0, %v522
  %v524 = vpop.f32.mrb[0].mxu0
  %525 = vmatprep.mubr.bf16.mxu0 0
  %526 = vmatmul.mubr.bf16.gmra.mrb[0].mxu0 %v319
  %v527 = vpop.f32.mrb[0].mxu0
  %v528 = vadd.f32 0.0, %v527
  %v529 = vpop.f32.mrb[0].mxu0
  %v530 = vpop.f32.mrb[0].mxu0
  %v531 = vadd.f32 0.0, %v530
  %v532 = vpop.f32.mrb[0].mxu0
  %533 = vmatprep.mubr.bf16.mxu0 0
  %534 = vmatmul.mubr.bf16.gmra.mrb[0].mxu0 %v322
  %v535 = vpop.f32.mrb[0].mxu0
  %v536 = vadd.f32 0.0, %v535
  %v537 = vpop.f32.mrb[0].mxu0
  %v538 = vpop.f32.mrb[0].mxu0
  %v539 = vadd.f32 0.0, %v538
  %v540 = vpop.f32.mrb[0].mxu0
  %541 = vmatprep.mubr.bf16.mxu0 0
  %542 = vmatmul.mubr.bf16.gmra.mrb[0].mxu0 %v325
  %v543 = vpop.f32.mrb[0].mxu0
  %v544 = vadd.f32 0.0, %v543
  %v545 = vpop.f32.mrb[0].mxu0
  %v546 = vpop.f32.mrb[0].mxu0
  %v547 = vadd.f32 0.0, %v546
  %v548 = vpop.f32.mrb[0].mxu0
  %549 = vmatprep.mubr.bf16.mxu0 0
  %550 = vmatmul.mubr.bf16.gmra.mrb[0].mxu0 %v328
  %v551 = vpop.f32.mrb[0].mxu0
  %v552 = vadd.f32 0.0, %v551
  %v553 = vpop.f32.mrb[0].mxu0
  %v554 = vpop.f32.mrb[0].mxu0
  %v555 = vadd.f32 0.0, %v554
  %v556 = vpop.f32.mrb[0].mxu0
  %557 = vmatprep.mubr.bf16.mxu0 0
  %558 = vmatmul.mubr.bf16.gmra.mrb[0].mxu0 %v331
  %v559 = vpop.f32.mrb[0].mxu0
  %v560 = vadd.f32 0.0, %v559
  %v561 = vpop.f32.mrb[0].mxu0
  %v562 = vpop.f32.mrb[0].mxu0
  %v563 = vadd.f32 0.0, %v562
  %v564 = vpop.f32.mrb[0].mxu0
  %565 = vmatprep.mubr.bf16.mxu0 0
  %566 = vmatmul.mubr.bf16.gmra.mrb[0].mxu0 %v334
  %v567 = vpop.f32.mrb[0].mxu0
  %v568 = vadd.f32 0.0, %v567
  %v569 = vpop.f32.mrb[0].mxu0
  %v570 = vpop.f32.mrb[0].mxu0
  %v571 = vadd.f32 0.0, %v570
  %v572 = vpop.f32.mrb[0].mxu0
  %573 = vmatprep.mubr.bf16.mxu0 0
  %574 = vmatmul.mubr.bf16.gmra.mrb[0].mxu0 %v337
  %v575 = vpop.f32.mrb[0].mxu0
  %v576 = vadd.f32 0.0, %v575
  %v577 = vpop.f32.mrb[0].mxu0
  %v578 = vpop.f32.mrb[0].mxu0
  %v579 = vadd.f32 0.0, %v578
  %v580 = vpop.f32.mrb[0].mxu0
  %581 = vmatprep.mubr.bf16.mxu0 0
  %582 = vmatmul.mubr.bf16.gmra.mrb[0].mxu0 %v340
  %v583 = vpop.f32.mrb[0].mxu0
  %v584 = vadd.f32 0.0, %v583
  %v585 = vpop.f32.mrb[0].mxu0
  %v586 = vpop.f32.mrb[0].mxu0
  %v587 = vadd.f32 0.0, %v586
  %v588 = vpop.f32.mrb[0].mxu0
  %589 = vmatprep.mubr.bf16.mxu0 0
  %590 = vmatmul.mubr.bf16.gmra.mrb[0].mxu0 %v343
  %v591 = vpop.f32.mrb[0].mxu0
  %v592 = vadd.f32 0.0, %v591
  %v593 = vpop.f32.mrb[0].mxu0
  %v594 = vpop.f32.mrb[0].mxu0
  %v595 = vadd.f32 0.0, %v594
  %v596 = vpop.f32.mrb[0].mxu0
  %597 = vmatprep.mubr.bf16.mxu0 0
  %598 = vmatmul.mubr.bf16.gmra.mrb[0].mxu0 %v346
  %v599 = vpop.f32.mrb[0].mxu0
  %v600 = vadd.f32 0.0, %v599
  %v601 = vpop.f32.mrb[0].mxu0
  %v602 = vpop.f32.mrb[0].mxu0
  %v603 = vadd.f32 0.0, %v602
  %v604 = vpop.f32.mrb[0].mxu0
  %605 = vmatprep.mubr.bf16.mxu0 0
  %606 = vmatmul.mubr.bf16.gmra.mrb[0].mxu0 %v349
  %v607 = vpop.f32.mrb[0].mxu0
  %v608 = vadd.f32 0.0, %v607
  %v609 = vpop.f32.mrb[0].mxu0
  %v610 = vpop.f32.mrb[0].mxu0
  %v611 = vadd.f32 0.0, %v610
  %v612 = vpop.f32.mrb[0].mxu0
  %613 = vmatprep.mubr.bf16.mxu0 0
  %614 = vmatmul.mubr.bf16.gmra.mrb[0].mxu0 %v352
  %v615 = vpop.f32.mrb[0].mxu0
  %v616 = vadd.f32 0.0, %v615
  %v617 = vpop.f32.mrb[0].mxu0
  %v618 = vpop.f32.mrb[0].mxu0
  %v619 = vadd.f32 0.0, %v618
  %v620 = vpop.f32.mrb[0].mxu0
  %621 = vmatprep.mubr.bf16.mxu0 0
  %622 = vmatmul.mubr.bf16.gmra.mrb[0].mxu0 %v355
  %v623 = vpop.f32.mrb[0].mxu0
  %v624 = vadd.f32 0.0, %v623
  %v625 = vpop.f32.mrb[0].mxu0
  %v626 = vpop.f32.mrb[0].mxu0
  %v627 = vadd.f32 0.0, %v626
  %v628 = vpop.f32.mrb[0].mxu0
  %629 = vmatprep.mubr.bf16.mxu0 0
  %630 = vmatmul.mubr.bf16.gmra.mrb[0].mxu0 %v358
  %v631 = vpop.f32.mrb[0].mxu0
  %v632 = vadd.f32 0.0, %v631
  %v633 = vpop.f32.mrb[0].mxu0
  %v634 = vpop.f32.mrb[0].mxu0
  %v635 = vadd.f32 0.0, %v634
  %v636 = vpop.f32.mrb[0].mxu0
  %637 = vmatprep.mubr.bf16.mxu0 0
  %638 = vmatmul.mubr.bf16.gmra.mrb[0].mxu0 %v361
  %v639 = vpop.f32.mrb[0].mxu0
  %v640 = vadd.f32 0.0, %v639
  %v641 = vpop.f32.mrb[0].mxu0
  %v642 = vpop.f32.mrb[0].mxu0
  %v643 = vadd.f32 0.0, %v642
  %v644 = vpop.f32.mrb[0].mxu0
  %645 = vmatprep.mubr.bf16.mxu0 0
  %646 = vmatmul.mubr.bf16.gmra.mrb[0].mxu0 %v364
  %v647 = vpop.f32.mrb[0].mxu0
  %v648 = vadd.f32 0.0, %v647
  %v649 = vpop.f32.mrb[0].mxu0
  %v650 = vpop.f32.mrb[0].mxu0
  %v651 = vadd.f32 0.0, %v650
  %v652 = vpop.f32.mrb[0].mxu0
  %653 = vmatprep.mubr.bf16.mxu0 0
  %654 = vmatmul.mubr.bf16.gmra.mrb[0].mxu0 %v367
  %v655 = vpop.f32.mrb[0].mxu0
  %v656 = vadd.f32 0.0, %v655
  %v657 = vpop.f32.mrb[0].mxu0
  %v658 = vpop.f32.mrb[0].mxu0
  %v659 = vadd.f32 0.0, %v658
  %v660 = vpop.f32.mrb[0].mxu0
  %661 = vdwg.mxu0
  %v662 = vtanh.pop %v408
  %v663 = vtanh.pop %v411
  %v664 = vtanh.pop %v416
  %v665 = vtanh.pop %v419
  %v666 = vtanh.pop %v424
  %v667 = vtanh.pop %v427
  %v668 = vtanh.pop %v432
  %v669 = vtanh.pop %v435
  %v670 = vtanh.pop %v440
  %v671 = vtanh.pop %v443
  %v672 = vtanh.pop %v448
  %v673 = vtanh.pop %v451
  %v674 = vtanh.pop %v456
  %v675 = vtanh.pop %v459
  %v676 = vtanh.pop %v464
  %v677 = vtanh.pop %v467
  %v678 = vtanh.pop %v472
  %v679 = vtanh.pop %v475
  %v680 = vtanh.pop %v480
  %v681 = vtanh.pop %v483
  %v682 = vtanh.pop %v488
  %v683 = vtanh.pop %v491
  %v684 = vtanh.pop %v496
  %v685 = vtanh.pop %v499
  %v686 = vtanh.pop %v504
  %v687 = vtanh.pop %v507
  %v688 = vtanh.pop %v512
  %v689 = vtanh.pop %v515
  %v690 = vtanh.pop %v520
  %v691 = vtanh.pop %v523
  %v692 = vtanh.pop %v528
  %v693 = vtanh.pop %v531
  %v694 = vtanh.pop %v536
  %v695 = vtanh.pop %v539
  %v696 = vtanh.pop %v544
  %v697 = vtanh.pop %v547
  %v698 = vtanh.pop %v552
  %v699 = vtanh.pop %v555
  %v700 = vtanh.pop %v560
  %v701 = vtanh.pop %v563
  %v702 = vtanh.pop %v568
  %v703 = vtanh.pop %v571
  %v704 = vtanh.pop %v576
  %v705 = vtanh.pop %v579
  %v706 = vtanh.pop %v584
  %v707 = vtanh.pop %v587
  %v708 = vtanh.pop %v592
  %v709 = vtanh.pop %v595
  %v710 = vtanh.pop %v600
  %v711 = vtanh.pop %v603
  %v712 = vtanh.pop %v608
  %v713 = vtanh.pop %v611
  %v714 = vtanh.pop %v616
  %v715 = vtanh.pop %v619
  %v716 = vtanh.pop %v624
  %v717 = vtanh.pop %v627
  %v718 = vtanh.pop %v632
  %v719 = vtanh.pop %v635
  %v720 = vtanh.pop %v640
  %v721 = vtanh.pop %v643
  %v722 = vtanh.pop %v648
  %v723 = vtanh.pop %v651
  %v724 = vtanh.pop %v656
  %v725 = vtanh.pop %v659
  %726 = vst [vmem:[%s2] sm:$0xff] %v662
  %727 = vst [vmem:[%s2 + $0x8] sm:$0xff] %v663
  %728 = vst [vmem:[%s2 + $0x10] sm:$0xff] %v664
  %729 = vst [vmem:[%s2 + $0x18] sm:$0xff] %v665
  %730 = vst [vmem:[%s2 + $0x20] sm:$0xff] %v666
  %731 = vst [vmem:[%s2 + $0x28] sm:$0xff] %v667
  %732 = vst [vmem:[%s2 + $0x30] sm:$0xff] %v668
  %733 = vst [vmem:[%s2 + $0x38] sm:$0xff] %v669
  %734 = vst [vmem:[%s2 + $0x40] sm:$0xff] %v670
  %735 = vst [vmem:[%s2 + $0x48] sm:$0xff] %v671
  %736 = vst [vmem:[%s2 + $0x50] sm:$0xff] %v672
  %737 = vst [vmem:[%s2 + $0x58] sm:$0xff] %v673
  %738 = vst [vmem:[%s2 + $0x60] sm:$0xff] %v674
  %739 = vst [vmem:[%s2 + $0x68] sm:$0xff] %v675
  %740 = vst [vmem:[%s2 + $0x70] sm:$0xff] %v676
  %741 = vst [vmem:[%s2 + $0x78] sm:$0xff] %v677
  %742 = vst [vmem:[%s2 + $0x80] sm:$0xff] %v678
  %743 = vst [vmem:[%s2 + $0x88] sm:$0xff] %v679
  %744 = vst [vmem:[%s2 + $0x90] sm:$0xff] %v680
  %745 = vst [vmem:[%s2 + $0x98] sm:$0xff] %v681
  %746 = vst [vmem:[%s2 + $0xa0] sm:$0xff] %v682
  %747 = vst [vmem:[%s2 + $0xa8] sm:$0xff] %v683
  %748 = vst [vmem:[%s2 + $0xb0] sm:$0xff] %v684
  %749 = vst [vmem:[%s2 + $0xb8] sm:$0xff] %v685
  %750 = vst [vmem:[%s2 + $0xc0] sm:$0xff] %v686
  %751 = vst [vmem:[%s2 + $0xc8] sm:$0xff] %v687
  %752 = vst [vmem:[%s2 + $0xd0] sm:$0xff] %v688
  %753 = vst [vmem:[%s2 + $0xd8] sm:$0xff] %v689
  %754 = vst [vmem:[%s2 + $0xe0] sm:$0xff] %v690
  %755 = vst [vmem:[%s2 + $0xe8] sm:$0xff] %v691
  %756 = vst [vmem:[%s2 + $0xf0] sm:$0xff] %v692
  %757 = vst [vmem:[%s2 + $0xf8] sm:$0xff] %v693
  %758 = vst [vmem:[%s2 + $0x100] sm:$0xff] %v694
  %759 = vst [vmem:[%s2 + $0x108] sm:$0xff] %v695
  %760 = vst [vmem:[%s2 + $0x110] sm:$0xff] %v696
  %761 = vst [vmem:[%s2 + $0x118] sm:$0xff] %v697
  %762 = vst [vmem:[%s2 + $0x120] sm:$0xff] %v698
  %763 = vst [vmem:[%s2 + $0x128] sm:$0xff] %v699
  %764 = vst [vmem:[%s2 + $0x130] sm:$0xff] %v700
  %765 = vst [vmem:[%s2 + $0x138] sm:$0xff] %v701
  %766 = vst [vmem:[%s2 + $0x140] sm:$0xff] %v702
  %767 = vst [vmem:[%s2 + $0x148] sm:$0xff] %v703
  %768 = vst [vmem:[%s2 + $0x150] sm:$0xff] %v704
  %769 = vst [vmem:[%s2 + $0x158] sm:$0xff] %v705
  %770 = vst [vmem:[%s2 + $0x160] sm:$0xff] %v706
  %771 = vst [vmem:[%s2 + $0x168] sm:$0xff] %v707
  %772 = vst [vmem:[%s2 + $0x170] sm:$0xff] %v708
  %773 = vst [vmem:[%s2 + $0x178] sm:$0xff] %v709
  %774 = vst [vmem:[%s2 + $0x180] sm:$0xff] %v710
  %775 = vst [vmem:[%s2 + $0x188] sm:$0xff] %v711
  %776 = vst [vmem:[%s2 + $0x190] sm:$0xff] %v712
  %777 = vst [vmem:[%s2 + $0x198] sm:$0xff] %v713
  %778 = vst [vmem:[%s2 + $0x1a0] sm:$0xff] %v714
  %779 = vst [vmem:[%s2 + $0x1a8] sm:$0xff] %v715
  %780 = vst [vmem:[%s2 + $0x1b0] sm:$0xff] %v716
  %781 = vst [vmem:[%s2 + $0x1b8] sm:$0xff] %v717
  %782 = vst [vmem:[%s2 + $0x1c0] sm:$0xff] %v718
  %783 = vst [vmem:[%s2 + $0x1c8] sm:$0xff] %v719
  %784 = vst [vmem:[%s2 + $0x1d0] sm:$0xff] %v720
  %785 = vst [vmem:[%s2 + $0x1d8] sm:$0xff] %v721
  %786 = vst [vmem:[%s2 + $0x1e0] sm:$0xff] %v722
  %787 = vst [vmem:[%s2 + $0x1e8] sm:$0xff] %v723
  %788 = vst [vmem:[%s2 + $0x1f0] sm:$0xff] %v724
  %789 = vst [vmem:[%s2 + $0x1f8] sm:$0xff] %v725
  // Predicated region
  $region10: #{generator_forward.9} parent=0 // pred_check
    _
  $region11: #{generator_forward.9} parent=0 // pred_check_branch
    %791 = sbr.rel (0) target = $region13
  $region12: #{generator_forward.9} parent=0 // pred_region
    _
  $region13: #{generator_forward.9} parent=0 // pred_fallthru
    _
  // Predicated region
  $region14: #{generator_forward.9} parent=0 // pred_check
    _
  $region15: #{generator_forward.9} parent=0 // pred_check_branch
    %793 = sbr.rel (0) target = $region17
  $region16: #{generator_forward.9} parent=0 // pred_region
    _
  $region17: #{generator_forward.9} parent=0 // pred_fallthru
    _

</llo_original>
